<compile_context>
chip_gen: v6e
topology: v6e:2x2x1
jax: 0.10.0
libtpu: 0.0.40
codegen_flags: <defaults>
</compile_context>

<pallas_src>
import functools

import numpy as np
import jax
import jax.numpy as jnp
from jax.experimental import pallas as pl
from jax.experimental.pallas import tpu as pltpu


# ----------------------------------------------------------------------------
# VMEM budgeting helper
# ----------------------------------------------------------------------------

def _vmem_limit(streamed_bytes, resident_bytes):
    # 2x for double-buffered streamed blocks, 2x for (default double-buffered)
    # resident blocks, plus headroom.  Clamped to [32 MiB, 48 MiB]: 32 MiB is
    # the v6e/v7x scoped default, 48 MiB still fits v7x's 64 MiB physical VMEM.
    need = 2 * streamed_bytes + 2 * resident_bytes + (4 << 20)
    return int(min(48 << 20, max(32 << 20, need)))


# ----------------------------------------------------------------------------
# Pallas kernels
# ----------------------------------------------------------------------------

def _linear_kernel(x_ref, w_ref, b_ref, o_ref):
    # (TM, K) bf16 @ (K, N) bf16 -> f32 accumulate, + f32 bias, cast to output.
    acc = jnp.dot(x_ref[...], w_ref[...], preferred_element_type=jnp.float32)
    o_ref[...] = (acc + b_ref[...]).astype(o_ref.dtype)


def linear_pallas(x, w, b, *, out_dtype=jnp.float32, tm=512):
    """x: (M, K) bf16, w: (K, N) bf16, b: (N,) f32 -> (M, N) out_dtype."""
    M, K = x.shape
    N = w.shape[1]
    TM = min(tm, M)
    if TM == M and M >= 32:
        TM = M // 2                  # guarantee >=2 grid steps (v7x megacore)
    if TM % 16 != 0:                 # keep row blocks 16-aligned (bf16-safe);
        TM = M                       # else fall back to full-M block
    grid = (pl.cdiv(M, TM),)
    out_itemsize = jnp.dtype(out_dtype).itemsize
    streamed = TM * K * 2 + TM * N * out_itemsize
    resident = K * N * 2 + N * 4
    params = pltpu.CompilerParams(
        dimension_semantics=("parallel",),
        vmem_limit_bytes=_vmem_limit(streamed, resident))
    return pl.pallas_call(
        _linear_kernel,
        out_shape=jax.ShapeDtypeStruct((M, N), out_dtype),
        grid=grid,
        in_specs=[
            pl.BlockSpec((TM, K), lambda i: (i, 0)),
            # TODO(synk): these constant-index blocks could use
            # pipeline_mode=pl.Buffered(1) to halve their VMEM footprint on
            # large C; left at the default to avoid relying on newer
            # pipeline_mode support.
            pl.BlockSpec((K, N), lambda i: (0, 0)),    # resident weights
            pl.BlockSpec((1, N), lambda i: (0, 0)),    # resident bias
        ],
        out_specs=pl.BlockSpec((TM, N), lambda i: (i, 0)),
        compiler_params=params,
    )(x, w, b.reshape(1, N))


def _window_attn_kernel(q_ref, k_ref, v_ref, bias_ref, o_ref, *, num_heads):
    # q_ref: (GB, Wq, D) bf16, k_ref/v_ref: (GB, Nk, D) bf16,
    # bias_ref: (heads, Wq, Nk) f32, o_ref: (GB, Wq, D) bf16.
    # GB = (windows per block) * num_heads; fused batch row b <-> (window, head).
    GB, Wq, D = q_ref.shape
    Nk = k_ref.shape[1]
    WB = GB // num_heads
    q = q_ref[...]
    k = k_ref[...]
    v = v_ref[...]
    bias = bias_ref[...]                              # hoisted, loaded once
    # scores: single batched MXU matmul over the fused (window, head) axis
    s = jnp.einsum("bqd,bkd->bqk", q, k, preferred_element_type=jnp.float32)
    # add per-head relative-position bias (leading-dim reshapes only)
    s = (s.reshape(WB, num_heads, Wq, Nk) + bias[None]).reshape(GB, Wq, Nk)
    # softmax in f32
    s = s - jnp.max(s, axis=-1, keepdims=True)
    p = jnp.exp(s)
    p = p * pl.reciprocal(jnp.sum(p, axis=-1, keepdims=True), approx=True)
    o = jnp.einsum("bqk,bkd->bqd", p.astype(v.dtype), v,
                   preferred_element_type=jnp.float32)
    o_ref[...] = o.astype(o_ref.dtype)


def window_attention_pallas(q, k, v, bias, num_heads, *, wb=64):
    """q: (G, Wq, D) bf16, k/v: (G, Nk, D) bf16 with G = num_windows*num_heads,
    bias: (num_heads, Wq, Nk) f32.  Returns (G, Wq, D) bf16."""
    G, Wq, D = q.shape
    Nk = k.shape[1]
    nWB = G // num_heads
    WB = min(wb, nWB)
    if WB == nWB and nWB >= 2:
        WB = max(1, nWB // 2)        # guarantee >=2 grid steps (v7x megacore)
    GB = WB * num_heads              # fused-axis block, always multiple of heads
    grid = (pl.cdiv(nWB, WB),)
    streamed = GB * (2 * Wq + 2 * Nk) * D * 2         # q, k, v, out (bf16)
    resident = num_heads * Wq * Nk * 4                # bias (f32)
    params = pltpu.CompilerParams(
        dimension_semantics=("parallel",),
        vmem_limit_bytes=_vmem_limit(streamed, resident))
    kernel = functools.partial(_window_attn_kernel, num_heads=num_heads)
    return pl.pallas_call(
        kernel,
        out_shape=jax.ShapeDtypeStruct((G, Wq, D), jnp.bfloat16),
        grid=grid,
        in_specs=[
            pl.BlockSpec((GB, Wq, D), lambda i: (i, 0, 0)),
            pl.BlockSpec((GB, Nk, D), lambda i: (i, 0, 0)),
            pl.BlockSpec((GB, Nk, D), lambda i: (i, 0, 0)),
            pl.BlockSpec((num_heads, Wq, Nk), lambda i: (0, 0, 0)),  # resident
        ],
        out_specs=pl.BlockSpec((GB, Wq, D), lambda i: (i, 0, 0)),
        compiler_params=params,
    )(q, k, v, bias)


# ----------------------------------------------------------------------------
# Plain-JAX reference versions of the two hot-path ops (f32, HIGHEST precision)
# ----------------------------------------------------------------------------

def linear_ref(x, w, b):
    return jnp.dot(x, w, precision=jax.lax.Precision.HIGHEST) + b[None, :]


def window_attention_ref(q, k, v, bias, num_heads):
    G, Wq, D = q.shape
    Nk = k.shape[1]
    s = jnp.einsum("bqd,bkd->bqk", q, k, precision=jax.lax.Precision.HIGHEST)
    s = (s.reshape(-1, num_heads, Wq, Nk) + bias[None]).reshape(G, Wq, Nk)
    s = s - jnp.max(s, axis=-1, keepdims=True)
    p = jnp.exp(s)
    p = p / jnp.sum(p, axis=-1, keepdims=True)
    return jnp.einsum("bqk,bkd->bqd", p, v, precision=jax.lax.Precision.HIGHEST)


# ----------------------------------------------------------------------------
# Host-side glue: window partitioning, relative position indices, rolled keys
# ----------------------------------------------------------------------------

def window_partition_jax(x, ws):
    """x: (B, H, W, C) -> (num_windows*B, ws, ws, C)."""
    B, H, W, C = x.shape
    x = x.reshape(B, H // ws, ws, W // ws, ws, C)
    return x.transpose(0, 1, 3, 2, 4, 5).reshape(-1, ws, ws, C)


def get_relative_position_index_np(ws):
    coords_h = np.arange(ws[0])
    coords_w = np.arange(ws[1])
    coords = np.stack(np.meshgrid(coords_h, coords_w, indexing="ij"))  # (2,h,w)
    coords_flat = coords.reshape(2, -1)
    rel = coords_flat[:, :, None] - coords_flat[:, None, :]
    rel = rel.transpose(1, 2, 0).copy()
    rel[:, :, 0] += ws[0] - 1
    rel[:, :, 1] += ws[1] - 1
    rel[:, :, 0] *= 2 * ws[1] - 1
    return rel.sum(-1)  # (Wa, Wa)


def make_valid_ind_rolled(ws, e):
    m_tl = np.ones((ws, ws)); m_tl[:-e, :-e] = 0
    m_tr = np.ones((ws, ws)); m_tr[:-e, e:] = 0
    m_bl = np.ones((ws, ws)); m_bl[e:, :-e] = 0
    m_br = np.ones((ws, ws)); m_br[e:, e:] = 0
    mask = np.stack([m_tl, m_tr, m_bl, m_br], 0).reshape(-1)
    return np.nonzero(mask)[0]


def window_attention_forward(x, params, cfg, use_pallas=True):
    """Forward pass of WindowAttention (expand_size>0, focal_level=1,
    pool_method='none', mask_all[0] is None).

    x: (B, nH, nW, C) float32.  Returns (num_windows*B, window_area, C) f32.
    """
    ws = cfg["window_size"]
    e = cfg["expand_size"]
    heads = cfg["num_heads"]
    B, nH, nW, C = x.shape
    hd = C // heads
    Wa = ws * ws
    scale = hd ** (-0.5)

    # Fold the attention scale into the q columns of the qkv projection
    # (mathematically identical; removes a per-element multiply in the kernel).
    qcol_scale = jnp.concatenate(
        [jnp.full((C,), scale, jnp.float32), jnp.ones((2 * C,), jnp.float32)])
    w_qkv = params["w_qkv"] * qcol_scale[None, :]
    b_qkv = params["b_qkv"] * qcol_scale

    # --- qkv projection ---
    if use_pallas:
        # bf16 operands in, bf16 activations out (f32 accumulate inside).
        qkv = linear_pallas(x.reshape(-1, C).astype(jnp.bfloat16),
                            w_qkv.astype(jnp.bfloat16), b_qkv,
                            out_dtype=jnp.bfloat16)
    else:
        qkv = linear_ref(x.reshape(-1, C), w_qkv, b_qkv)
    qkv = qkv.reshape(B, nH, nW, 3, C)
    q, k, v = qkv[..., 0, :], qkv[..., 1, :], qkv[..., 2, :]

    def to_windows(t):
        # (B, nH, nW, C) -> (nWB, Wa, C)
        return window_partition_jax(t, ws).reshape(-1, Wa, C)

    q_windows = to_windows(q)
    k_windows = to_windows(k)
    v_windows = to_windows(v)
    nWB = q_windows.shape[0]

    # --- rolled (expanded) keys / values ---
    valid_ind_rolled = cfg["valid_ind_rolled"]
    shifts = [(-e, -e), (-e, e), (e, -e), (e, e)]

    def rolled(t):
        parts = [to_windows(jnp.roll(t, shift=sh, axis=(1, 2))) for sh in shifts]
        cat = jnp.concatenate(parts, axis=1)      # (nWB, 4*Wa, C)
        return cat[:, valid_ind_rolled]           # (nWB, n_key_rolled, C)

    k_all = jnp.concatenate([k_windows, rolled(k)], axis=1)  # (nWB, Nk, C)
    v_all = jnp.concatenate([v_windows, rolled(v)], axis=1)
    Nk = k_all.shape[1]

    # --- split heads host-side and fuse (window, head) into one batch axis ---
    def split_heads(t):
        n, T, _ = t.shape
        return (t.reshape(n, T, heads, hd)
                 .transpose(0, 2, 1, 3)
                 .reshape(n * heads, T, hd))

    q_h = split_heads(q_windows)     # (nWB*heads, Wa, hd)
    k_h = split_heads(k_all)         # (nWB*heads, Nk, hd)
    v_h = split_heads(v_all)

    # --- relative position biases (gathered on host, added inside kernel) ---
    rel_idx = cfg["relative_position_index"]                 # (Wa, Wa) numpy
    rpb = params["rpb_table"][rel_idx.reshape(-1)]           # (Wa*Wa, heads)
    rpb = rpb.reshape(Wa, Wa, heads).transpose(2, 0, 1)      # (heads, Wa, Wa)
    rpb_neighbors = params["rpb_neighbors"][0]               # (heads, Wa, n_rolled)
    bias_full = jnp.concatenate([rpb, rpb_neighbors], axis=-1)  # (heads, Wa, Nk)

    # --- attention (Pallas kernel, batched over fused windows*heads axis) ---
    if use_pallas:
        out = window_attention_pallas(q_h, k_h, v_h, bias_full, heads)  # bf16
    else:
        out = window_attention_ref(q_h, k_h, v_h, bias_full, heads)     # f32

    # (nWB*heads, Wa, hd) -> (nWB*Wa, C)  (fold heads back into channels)
    out = (out.reshape(nWB, heads, Wa, hd)
              .transpose(0, 2, 1, 3)
              .reshape(nWB * Wa, C))

    # --- output projection (bf16 in, f32 out) ---
    if use_pallas:
        out = linear_pallas(out, params["w_proj"].astype(jnp.bfloat16),
                            params["b_proj"], out_dtype=jnp.float32)
    else:
        out = linear_ref(out, params["w_proj"], params["b_proj"])

    # attn_drop / proj_drop have p = 0 -> identity.
    # TODO(synk): pooled focal levels (pool_method != 'none', focal_level > 1)
    # and a non-None mask_all[0] are not exercised by this config.
    return out.reshape(nWB, Wa, C)


# ----------------------------------------------------------------------------
# Main
# ----------------------------------------------------------------------------

if __name__ == "__main__":
    # Small, module-consistent shapes.
    B, nH, nW, C = 2, 8, 8, 32
    num_heads = 4
    window_size = 4
    expand_size = 2
    Wa = window_size * window_size
    # window_size_of_key for expand_size > 0:
    n_key_rolled = 4 * Wa - 4 * (window_size - expand_size) ** 2   # = 48

    cfg = {
        "window_size": window_size,
        "expand_size": expand_size,
        "num_heads": num_heads,
        "relative_position_index": get_relative_position_index_np(
            (window_size, window_size)),
        "valid_ind_rolled": make_valid_ind_rolled(window_size, expand_size),
    }

    key = jax.random.PRNGKey(0)
    ks = jax.random.split(key, 7)
    params = {
        # nn.Linear(dim, 3*dim): stored as (in, out); y = x @ W + b
        "w_qkv": 0.02 * jax.random.normal(ks[0], (C, 3 * C), jnp.float32),
        "b_qkv": 0.02 * jax.random.normal(ks[1], (3 * C,), jnp.float32),
        "rpb_table": 0.02 * jax.random.normal(
            ks[2], ((2 * window_size - 1) ** 2, num_heads), jnp.float32),
        "rpb_neighbors": 0.02 * jax.random.normal(
            ks[3], (1, num_heads, Wa, n_key_rolled), jnp.float32),
        "w_proj": 0.02 * jax.random.normal(ks[4], (C, C), jnp.float32),
        "b_proj": 0.02 * jax.random.normal(ks[5], (C,), jnp.float32),
    }

    x = jax.random.normal(ks[6], (B, nH, nW, C), jnp.float32)

    fwd_pallas = jax.jit(functools.partial(
        window_attention_forward, cfg=cfg, use_pallas=True))
    fwd_ref = jax.jit(functools.partial(
        window_attention_forward, cfg=cfg, use_pallas=False))

    out = jax.block_until_ready(fwd_pallas(x, params))

    # Sanity check against a plain-JAX f32 reference of the same math.
    ref = jax.block_until_ready(fwd_ref(x, params))
    np.testing.assert_allclose(np.asarray(out), np.asarray(ref),
                               rtol=5e-2, atol=5e-2)

    assert out.shape == ((nH // window_size) * (nW // window_size) * B, Wa, C)
    print("KERNEL_OK")
</pallas_src>

<mosaic_0001>
module attributes {stable_mosaic.version = 11 : i64} {
  func.func @_linear_kernel(%arg0: i32, %arg1: memref<64x32xbf16, #tpu.memory_space<vmem>>, %arg2: memref<32x96xbf16, #tpu.memory_space<vmem>>, %arg3: memref<1x96xf32, #tpu.memory_space<vmem>>, %arg4: memref<64x96xbf16, #tpu.memory_space<vmem>>) attributes {dimension_semantics = [#tpu.dimension_semantics<parallel>], iteration_bounds = array<i64: 2>, scalar_prefetch = 0 : i64, scratch_operands = 0 : i64, tpu.core_type = #tpu.core_type<tc>, window_params = [{transform_indices = @transform_0, window_bounds = array<i64: 64, 32>}, {pipeline_mode = #tpu.pipeline_mode<synchronous>, transform_indices = @transform_1, window_bounds = array<i64: 32, 96>}, {pipeline_mode = #tpu.pipeline_mode<synchronous>, transform_indices = @transform_2, window_bounds = array<i64: 1, 96>}, {transform_indices = @transform_3, window_bounds = array<i64: 64, 96>}]} {
    %c0 = arith.constant 0 : index
    %c0_0 = arith.constant 0 : index
    %0 = vector.load %arg1[%c0, %c0_0] : memref<64x32xbf16, #tpu.memory_space<vmem>>, vector<64x32xbf16>
    %c0_1 = arith.constant 0 : index
    %c0_2 = arith.constant 0 : index
    %1 = vector.load %arg2[%c0_1, %c0_2] : memref<32x96xbf16, #tpu.memory_space<vmem>>, vector<32x96xbf16>
    %cst = arith.constant dense<0.000000e+00> : vector<64x96xf32>
    %2 = tpu.matmul %0, %1, %cst {dimension_numbers = #tpu.dot_dimension_numbers<[1], [0], [0], [1], [0, 0, 1, 1], [], []>} : vector<64x32xbf16>, vector<32x96xbf16>, vector<64x96xf32> -> vector<64x96xf32>
    %c0_3 = arith.constant 0 : index
    %c0_4 = arith.constant 0 : index
    %3 = vector.load %arg3[%c0_3, %c0_4] : memref<1x96xf32, #tpu.memory_space<vmem>>, vector<1x96xf32>
    %4 = vector.broadcast %3 : vector<1x96xf32> to vector<64x96xf32>
    %5 = arith.addf %2, %4 : vector<64x96xf32>
    %6 = arith.truncf %5 : vector<64x96xf32> to vector<64x96xbf16>
    %c0_5 = arith.constant 0 : index
    %c0_6 = arith.constant 0 : index
    %7 = vector.load %arg4[%c0_5, %c0_6] : memref<64x96xbf16, #tpu.memory_space<vmem>>, vector<64x96xbf16>
    tpu.vector_store %arg4[%c0_5, %c0_6], %6 {strides = array<i32>} : memref<64x96xbf16, #tpu.memory_space<vmem>>, vector<64x96xbf16>,
    return
  }
  func.func @transform_0(%arg0: i32) -> (i32, i32) {
    %c0_i32 = arith.constant 0 : i32
    %c0_i32_0 = arith.constant 0 : i32
    return %arg0, %c0_i32 : i32, i32
  }
  func.func @transform_1(%arg0: i32) -> (i32, i32) {
    %c0_i32 = arith.constant 0 : i32
    %c0_i32_0 = arith.constant 0 : i32
    %c0_i32_1 = arith.constant 0 : i32
    return %c0_i32, %c0_i32_0 : i32, i32
  }
  func.func @transform_2(%arg0: i32) -> (i32, i32) {
    %c0_i32 = arith.constant 0 : i32
    %c0_i32_0 = arith.constant 0 : i32
    %c0_i32_1 = arith.constant 0 : i32
    return %c0_i32, %c0_i32_0 : i32, i32
  }
  func.func @transform_3(%arg0: i32) -> (i32, i32) {
    %c0_i32 = arith.constant 0 : i32
    %c0_i32_0 = arith.constant 0 : i32
    return %arg0, %c0_i32 : i32, i32
  }
}

module attributes {stable_mosaic.version = 11 : i64} {
  func.func @_window_attn_kernel(%arg0: i32, %arg1: memref<16x16x8xbf16, #tpu.memory_space<vmem>>, %arg2: memref<16x64x8xbf16, #tpu.memory_space<vmem>>, %arg3: memref<16x64x8xbf16, #tpu.memory_space<vmem>>, %arg4: memref<4x16x64xf32, #tpu.memory_space<vmem>>, %arg5: memref<16x16x8xbf16, #tpu.memory_space<vmem>>) attributes {dimension_semantics = [#tpu.dimension_semantics<parallel>], iteration_bounds = array<i64: 2>, scalar_prefetch = 0 : i64, scratch_operands = 0 : i64, tpu.core_type = #tpu.core_type<tc>, window_params = [{transform_indices = @transform_0, window_bounds = array<i64: 16, 16, 8>}, {transform_indices = @transform_1, window_bounds = array<i64: 16, 64, 8>}, {transform_indices = @transform_2, window_bounds = array<i64: 16, 64, 8>}, {pipeline_mode = #tpu.pipeline_mode<synchronous>, transform_indices = @transform_3, window_bounds = array<i64: 4, 16, 64>}, {transform_indices = @transform_4, window_bounds = array<i64: 16, 16, 8>}]} {
    %c0 = arith.constant 0 : index
    %c0_0 = arith.constant 0 : index
    %c0_1 = arith.constant 0 : index
    %0 = vector.load %arg1[%c0, %c0_0, %c0_1] : memref<16x16x8xbf16, #tpu.memory_space<vmem>>, vector<16x16x8xbf16>
    %c0_2 = arith.constant 0 : index
    %c0_3 = arith.constant 0 : index
    %c0_4 = arith.constant 0 : index
    %1 = vector.load %arg2[%c0_2, %c0_3, %c0_4] : memref<16x64x8xbf16, #tpu.memory_space<vmem>>, vector<16x64x8xbf16>
    %c0_5 = arith.constant 0 : index
    %c0_6 = arith.constant 0 : index
    %c0_7 = arith.constant 0 : index
    %2 = vector.load %arg3[%c0_5, %c0_6, %c0_7] : memref<16x64x8xbf16, #tpu.memory_space<vmem>>, vector<16x64x8xbf16>
    %c0_8 = arith.constant 0 : index
    %c0_9 = arith.constant 0 : index
    %c0_10 = arith.constant 0 : index
    %3 = vector.load %arg4[%c0_8, %c0_9, %c0_10] : memref<4x16x64xf32, #tpu.memory_space<vmem>>, vector<4x16x64xf32>
    "tpu.trace_start"() <{level = 10 : i32, message = "bqd,bkd->bqk"}> : () -> ()
    %cst = arith.constant dense<0.000000e+00> : vector<16x16x64xf32>
    %4 = tpu.matmul %0, %1, %cst {dimension_numbers = #tpu.dot_dimension_numbers<[2], [2], [1], [1], [0, 0, 0, 1, 1, 1], [0], [0]>} : vector<16x16x8xbf16>, vector<16x64x8xbf16>, vector<16x16x64xf32> -> vector<16x16x64xf32>
    "tpu.trace_stop"() : () -> ()
    %5 = vector.shape_cast %4 : vector<16x16x64xf32> to vector<4x4x16x64xf32>
    %6 = vector.shape_cast %3 : vector<4x16x64xf32> to vector<1x4x16x64xf32>
    %7 = vector.broadcast %6 : vector<1x4x16x64xf32> to vector<4x4x16x64xf32>
    %8 = arith.addf %5, %7 : vector<4x4x16x64xf32>
    %9 = vector.shape_cast %8 : vector<4x4x16x64xf32> to vector<16x16x64xf32>
    %cst_11 = arith.constant dense<0xFF800000> : vector<16x16xf32>
    %10 = vector.multi_reduction <maximumf>, %9, %cst_11 [2] : vector<16x16x64xf32> to vector<16x16xf32>
    %11 = vector.shape_cast %10 : vector<16x16xf32> to vector<16x16x1xf32>
    %12 = vector.broadcast %11 : vector<16x16x1xf32> to vector<16x16x64xf32>
    %13 = arith.subf %9, %12 : vector<16x16x64xf32>
    %14 = math.exp %13 : vector<16x16x64xf32>
    %cst_12 = arith.constant dense<0.000000e+00> : vector<16x16xf32>
    %15 = vector.multi_reduction <add>, %14, %cst_12 [2] : vector<16x16x64xf32> to vector<16x16xf32>
    %16 = vector.shape_cast %15 : vector<16x16xf32> to vector<16x16x1xf32>
    %17 = tpu.reciprocal %16 {approx = true} : vector<16x16x1xf32> -> vector<16x16x1xf32>
    %18 = vector.broadcast %17 : vector<16x16x1xf32> to vector<16x16x64xf32>
    %19 = arith.mulf %14, %18 : vector<16x16x64xf32>
    %20 = arith.truncf %19 : vector<16x16x64xf32> to vector<16x16x64xbf16>
    "tpu.trace_start"() <{level = 10 : i32, message = "bqk,bkd->bqd"}> : () -> ()
    %cst_13 = arith.constant dense<0.000000e+00> : vector<16x16x8xf32>
    %21 = tpu.matmul %20, %2, %cst_13 {dimension_numbers = #tpu.dot_dimension_numbers<[2], [1], [1], [2], [0, 0, 0, 1, 1, 2], [0], [0]>} : vector<16x16x64xbf16>, vector<16x64x8xbf16>, vector<16x16x8xf32> -> vector<16x16x8xf32>
    "tpu.trace_stop"() : () -> ()
    %22 = arith.truncf %21 : vector<16x16x8xf32> to vector<16x16x8xbf16>
    %c0_14 = arith.constant 0 : index
    %c0_15 = arith.constant 0 : index
    %c0_16 = arith.constant 0 : index
    %23 = vector.load %arg5[%c0_14, %c0_15, %c0_16] : memref<16x16x8xbf16, #tpu.memory_space<vmem>>, vector<16x16x8xbf16>
    tpu.vector_store %arg5[%c0_14, %c0_15, %c0_16], %22 {strides = array<i32>} : memref<16x16x8xbf16, #tpu.memory_space<vmem>>, vector<16x16x8xbf16>,
    return
  }
  func.func @transform_0(%arg0: i32) -> (i32, i32, i32) {
    %c0_i32 = arith.constant 0 : i32
    %c0_i32_0 = arith.constant 0 : i32
    %c0_i32_1 = arith.constant 0 : i32
    return %arg0, %c0_i32, %c0_i32_0 : i32, i32, i32
  }
  func.func @transform_1(%arg0: i32) -> (i32, i32, i32) {
    %c0_i32 = arith.constant 0 : i32
    %c0_i32_0 = arith.constant 0 : i32
    %c0_i32_1 = arith.constant 0 : i32
    return %arg0, %c0_i32, %c0_i32_0 : i32, i32, i32
  }
  func.func @transform_2(%arg0: i32) -> (i32, i32, i32) {
    %c0_i32 = arith.constant 0 : i32
    %c0_i32_0 = arith.constant 0 : i32
    %c0_i32_1 = arith.constant 0 : i32
    return %arg0, %c0_i32, %c0_i32_0 : i32, i32, i32
  }
  func.func @transform_3(%arg0: i32) -> (i32, i32, i32) {
    %c0_i32 = arith.constant 0 : i32
    %c0_i32_0 = arith.constant 0 : i32
    %c0_i32_1 = arith.constant 0 : i32
    %c0_i32_2 = arith.constant 0 : i32
    return %c0_i32, %c0_i32_0, %c0_i32_1 : i32, i32, i32
  }
  func.func @transform_4(%arg0: i32) -> (i32, i32, i32) {
    %c0_i32 = arith.constant 0 : i32
    %c0_i32_0 = arith.constant 0 : i32
    %c0_i32_1 = arith.constant 0 : i32
    return %arg0, %c0_i32, %c0_i32_0 : i32, i32, i32
  }
}

module attributes {stable_mosaic.version = 11 : i64} {
  func.func @_linear_kernel(%arg0: i32, %arg1: memref<64x32xbf16, #tpu.memory_space<vmem>>, %arg2: memref<32x32xbf16, #tpu.memory_space<vmem>>, %arg3: memref<1x32xf32, #tpu.memory_space<vmem>>, %arg4: memref<64x32xf32, #tpu.memory_space<vmem>>) attributes {dimension_semantics = [#tpu.dimension_semantics<parallel>], iteration_bounds = array<i64: 2>, scalar_prefetch = 0 : i64, scratch_operands = 0 : i64, tpu.core_type = #tpu.core_type<tc>, window_params = [{transform_indices = @transform_0, window_bounds = array<i64: 64, 32>}, {pipeline_mode = #tpu.pipeline_mode<synchronous>, transform_indices = @transform_1, window_bounds = array<i64: 32, 32>}, {pipeline_mode = #tpu.pipeline_mode<synchronous>, transform_indices = @transform_2, window_bounds = array<i64: 1, 32>}, {transform_indices = @transform_3, window_bounds = array<i64: 64, 32>}]} {
    %c0 = arith.constant 0 : index
    %c0_0 = arith.constant 0 : index
    %0 = vector.load %arg1[%c0, %c0_0] : memref<64x32xbf16, #tpu.memory_space<vmem>>, vector<64x32xbf16>
    %c0_1 = arith.constant 0 : index
    %c0_2 = arith.constant 0 : index
    %1 = vector.load %arg2[%c0_1, %c0_2] : memref<32x32xbf16, #tpu.memory_space<vmem>>, vector<32x32xbf16>
    %cst = arith.constant dense<0.000000e+00> : vector<64x32xf32>
    %2 = tpu.matmul %0, %1, %cst {dimension_numbers = #tpu.dot_dimension_numbers<[1], [0], [0], [1], [0, 0, 1, 1], [], []>} : vector<64x32xbf16>, vector<32x32xbf16>, vector<64x32xf32> -> vector<64x32xf32>
    %c0_3 = arith.constant 0 : index
    %c0_4 = arith.constant 0 : index
    %3 = vector.load %arg3[%c0_3, %c0_4] : memref<1x32xf32, #tpu.memory_space<vmem>>, vector<1x32xf32>
    %4 = vector.broadcast %3 : vector<1x32xf32> to vector<64x32xf32>
    %5 = arith.addf %2, %4 : vector<64x32xf32>
    %c0_5 = arith.constant 0 : index
    %c0_6 = arith.constant 0 : index
    %6 = vector.load %arg4[%c0_5, %c0_6] : memref<64x32xf32, #tpu.memory_space<vmem>>, vector<64x32xf32>
    tpu.vector_store %arg4[%c0_5, %c0_6], %5 {strides = array<i32>} : memref<64x32xf32, #tpu.memory_space<vmem>>, vector<64x32xf32>,
    return
  }
  func.func @transform_0(%arg0: i32) -> (i32, i32) {
    %c0_i32 = arith.constant 0 : i32
    %c0_i32_0 = arith.constant 0 : i32
    return %arg0, %c0_i32 : i32, i32
  }
  func.func @transform_1(%arg0: i32) -> (i32, i32) {
    %c0_i32 = arith.constant 0 : i32
    %c0_i32_0 = arith.constant 0 : i32
    %c0_i32_1 = arith.constant 0 : i32
    return %c0_i32, %c0_i32_0 : i32, i32
  }
  func.func @transform_2(%arg0: i32) -> (i32, i32) {
    %c0_i32 = arith.constant 0 : i32
    %c0_i32_0 = arith.constant 0 : i32
    %c0_i32_1 = arith.constant 0 : i32
    return %c0_i32, %c0_i32_0 : i32, i32
  }
  func.func @transform_3(%arg0: i32) -> (i32, i32) {
    %c0_i32 = arith.constant 0 : i32
    %c0_i32_0 = arith.constant 0 : i32
    return %arg0, %c0_i32 : i32, i32
  }
}

</mosaic_0001>

<llo_original>
// kernel: window_attention_forward.3
$region0: #{window_attention_forward.3}
  #allocation0 [shape = 'u32[]', space=smem, size = 0x4, offset = 0x4, fixed_abs, tag = 'smem constant byte address 0x4 - core index']
  #allocation1 [shape = 'u32[144,128]{1,0:T(1,128)}', space=vmem, size = 0x12000, scoped, tag = 'internal scratch']
  %s0 = inlined_call_operand.vmem [shape: bf16[128,32], index: 0, kind: input, shape index: {}]
  %s1 = inlined_call_operand.vmem [shape: bf16[32,96], index: 1, kind: input, shape index: {}]
  %s2 = inlined_call_operand.vmem [shape: f32[1,96], index: 2, kind: input, shape index: {}]
  %s3 = inlined_call_operand.vmem [shape: bf16[128,96], index: 3, kind: output, shape index: {}]
  %s4 = sld [smem:[#allocation0]]
  $region45: #{window_attention_forward.3} parent=0
    _
  %s6 = ssub.s32 1, %s4
  %s7 = scalar_select 0, %s6, %s4
  loop: start=0, step=1, limit=4
  $region2: #{window_attention_forward.3} parent=0 // loop_pre_header
    _
  $region3: #{window_attention_forward.3} parent=0 // loop_header
    %s9 = sphi 0, %s13
    %p10 = scmp.ge.s32.totalorder %s9, 4
    %s19 = sphi 0, %s21
    %s22 = sphi 0, %s19
    %s23 = sphi 0, %s22
    %s39 = sphi 0, %s23
    %s43 = sphi 0, %s43
    %s45 = sphi 0, %s43
    %s46 = sphi 0, %s45
    %s60 = sphi 0, %s46
    %s64 = sphi 0, %s64
    %s66 = sphi 0, %s64
    %s67 = sphi 0, %s66
    %s81 = sphi 0, %s67
    %s87 = sphi 0, %s89
    %s90 = sphi 0, %s87
    %s91 = sphi 0, %s90
    %s107 = sphi 0, %s91
  $region4: #{window_attention_forward.3} parent=0 // loop_header_branch
    %12 = sbr.rel (%p10) target = $region8
  $region5: #{window_attention_forward.3} parent=0 // loop_body
    %s14 = ssub.s32 %s9, 1
    %s15 = ssub.s32 %s9, 2
    %s16 = sadd.s32 %s9, 1
    %s17 = ssub.s32 %s9, %s16
    %p18 = scmp.eq.s32.totalorder %s17, 0
    %s20 = sadd.s32 %s19, 1
    %s21 = scalar_select %p18, %s19, %s20
    %p24 = pneg %p18
    %p25 = scmp.eq.s32.totalorder %s9, 1
    %p26 = por %p24, %p25
    %p27 = scmp.ne.s32.totalorder %s19, %s22
    %p28 = scmp.eq.s32.totalorder %s9, 0
    %p29 = por %p27, %p28
    %p30 = scmp.ne.s32.totalorder %s19, %s22
    %p31 = scmp.eq.s32.totalorder %s14, 1
    %p32 = por %p30, %p31
    %p33 = scmp.ne.s32.totalorder %s22, %s23
    %p34 = scmp.eq.s32.totalorder %s14, 0
    %p35 = por %p33, %p34
    %p36 = scmp.ne.s32.totalorder %s22, %s23
    %p37 = scmp.eq.s32.totalorder %s15, 1
    %p38 = por %p36, %p37
    %p40 = scmp.ne.s32.totalorder %s23, %s39
    %p41 = scmp.eq.s32.totalorder %s15, 0
    %p42 = por %p40, %p41
    %s44 = sadd.s32 %s43, 1
    %p47 = scmp.eq.s32.totalorder %s9, 1
    %p48 = scmp.ne.s32.totalorder %s43, %s45
    %p49 = scmp.eq.s32.totalorder %s9, 0
    %p50 = por %p48, %p49
    %p51 = scmp.ne.s32.totalorder %s43, %s45
    %p52 = scmp.eq.s32.totalorder %s14, 1
    %p53 = por %p51, %p52
    %p54 = scmp.ne.s32.totalorder %s45, %s46
    %p55 = scmp.eq.s32.totalorder %s14, 0
    %p56 = por %p54, %p55
    %p57 = scmp.ne.s32.totalorder %s45, %s46
    %p58 = scmp.eq.s32.totalorder %s15, 1
    %p59 = por %p57, %p58
    %p61 = scmp.ne.s32.totalorder %s46, %s60
    %p62 = scmp.eq.s32.totalorder %s15, 0
    %p63 = por %p61, %p62
    %s65 = sadd.s32 %s64, 1
    %p68 = scmp.eq.s32.totalorder %s9, 1
    %p69 = scmp.ne.s32.totalorder %s64, %s66
    %p70 = scmp.eq.s32.totalorder %s9, 0
    %p71 = por %p69, %p70
    %p72 = scmp.ne.s32.totalorder %s64, %s66
    %p73 = scmp.eq.s32.totalorder %s14, 1
    %p74 = por %p72, %p73
    %p75 = scmp.ne.s32.totalorder %s66, %s67
    %p76 = scmp.eq.s32.totalorder %s14, 0
    %p77 = por %p75, %p76
    %p78 = scmp.ne.s32.totalorder %s66, %s67
    %p79 = scmp.eq.s32.totalorder %s15, 1
    %p80 = por %p78, %p79
    %p82 = scmp.ne.s32.totalorder %s67, %s81
    %p83 = scmp.eq.s32.totalorder %s15, 0
    %p84 = por %p82, %p83
    %s85 = ssub.s32 %s9, %s16
    %p86 = scmp.eq.s32.totalorder %s85, 0
    %s88 = sadd.s32 %s87, 1
    %s89 = scalar_select %p86, %s87, %s88
    %p92 = pneg %p86
    %p93 = scmp.eq.s32.totalorder %s9, 1
    %p94 = por %p92, %p93
    %p95 = scmp.ne.s32.totalorder %s87, %s90
    %p96 = scmp.eq.s32.totalorder %s9, 0
    %p97 = por %p95, %p96
    %p98 = scmp.ne.s32.totalorder %s87, %s90
    %p99 = scmp.eq.s32.totalorder %s14, 1
    %p100 = por %p98, %p99
    %p101 = scmp.ne.s32.totalorder %s90, %s91
    %p102 = scmp.eq.s32.totalorder %s14, 0
    %p103 = por %p101, %p102
    %p104 = scmp.ne.s32.totalorder %s90, %s91
    %p105 = scmp.eq.s32.totalorder %s15, 1
    %p106 = por %p104, %p105
    %p108 = scmp.ne.s32.totalorder %s91, %s107
    %p109 = scmp.eq.s32.totalorder %s15, 0
    %p110 = por %p108, %p109
    %p111 = scmp.le.s32.totalorder 1, %s9
    %p112 = scmp.lt.s32.totalorder %s9, 3
    %p113 = pnand %p111, %p112
    %p114 = pneg %p113
    // Predicated region
    $region9: #{window_attention_forward.3} parent=5 // pred_check
      _
    $region10: #{window_attention_forward.3} parent=5 // pred_check_branch
      %116 = sbr.rel (%p113) target = $region12
    $region11: #{window_attention_forward.3} parent=5 // pred_region
      %s117 = ssub.s32 %s9, 1
      // Predicated region
      $region13: #{window_attention_forward.3} parent=11 // pred_check
        %p118 = pneg %p56
      $region14: #{window_attention_forward.3} parent=11 // pred_check_branch
        %120 = sbr.rel (%p118) target = $region16
      $region15: #{window_attention_forward.3} parent=11 // pred_region
        _
      $region16: #{window_attention_forward.3} parent=11 // pred_fallthru
        _
      // Predicated region
      $region17: #{window_attention_forward.3} parent=11 // pred_check
        %p121 = pneg %p77
      $region18: #{window_attention_forward.3} parent=11 // pred_check_branch
        %123 = sbr.rel (%p121) target = $region20
      $region19: #{window_attention_forward.3} parent=11 // pred_region
        _
      $region20: #{window_attention_forward.3} parent=11 // pred_fallthru
        _
    $region12: #{window_attention_forward.3} parent=5 // pred_fallthru
      _
    %p124 = scmp.lt.s32.totalorder %s9, 2
    // Predicated region
    $region21: #{window_attention_forward.3} parent=5 // pred_check
      %p125 = pneg %p124
    $region22: #{window_attention_forward.3} parent=5 // pred_check_branch
      %127 = sbr.rel (%p125) target = $region24
    $region23: #{window_attention_forward.3} parent=5 // pred_region
      // Predicated region
      $region25: #{window_attention_forward.3} parent=23 // pred_check
        %p128 = pneg %p29
      $region26: #{window_attention_forward.3} parent=23 // pred_check_branch
        %130 = sbr.rel (%p128) target = $region28
      $region27: #{window_attention_forward.3} parent=23 // pred_region
        %s131 = smul.u32 8, %s9
        %p132 = scmp.lt.s32.totalorder %s131, 15
        %s133 = scalar_select %p132, %s131, 15
        %s134 = smul.addr %s133, 4
        %s135 = scalar_lea.vmem %s0, %s134
        %s136 = smul.u32 8, %s9
      $region28: #{window_attention_forward.3} parent=23 // pred_fallthru
        _
    $region24: #{window_attention_forward.3} parent=5 // pred_fallthru
      _
    %p137 = scmp.le.s32.totalorder 1, %s9
    %p138 = scmp.lt.s32.totalorder %s9, 3
    %p139 = pnand %p137, %p138
    %p140 = pneg %p139
    // Predicated region
    $region29: #{window_attention_forward.3} parent=5 // pred_check
      _
    $region30: #{window_attention_forward.3} parent=5 // pred_check_branch
      %142 = sbr.rel (%p139) target = $region32
    $region31: #{window_attention_forward.3} parent=5 // pred_region
      %s143 = ssub.s32 %s9, 1
      %s144 = smul.u32 8, %s14
      %p145 = scmp.lt.s32.totalorder %s144, 15
      %s146 = scalar_select %p145, %s144, 15
      %s147 = smul.addr %s146, 4
      %s148 = scalar_lea.vmem %s0, %s147
      %p149 = pneg %p35
      %p150 = pneg %p32
      %p151 = pneg %p56
      %p152 = pneg %p53
      %p153 = pneg %p77
      %p154 = pneg %p74
      %p155 = pneg %p103
      %p156 = pneg %p100
      %s157 = smul.u32 8, %s14
      %p158 = scmp.lt.s32.totalorder %s157, 15
      %s159 = scalar_select %p158, %s157, 15
      %s160 = smul.addr %s159, 4
      %s161 = scalar_lea.vmem %s3, %s160
      %s162 = smul.u32 8, %s14
      %p163 = scmp.lt.s32.totalorder %s162, 15
      %s164 = scalar_select %p163, %s162, 15
      %s165 = smul.addr %s164, 4
      %s166 = scalar_lea.vmem %s0, %s165
      %s167 = smul.u32 8, %s14
      %s168 = smul.u32 8, %s14
      %p169 = scmp.lt.s32.totalorder %s168, 15
      %s170 = scalar_select %p169, %s168, 15
      %s171 = smul.addr %s170, 4
      %s172 = scalar_lea.vmem %s3, %s171
      %s173 = smul.u32 8, %s14
      %v175 = vld [vmem:[%s166] sm:$0xf]
      %v176 = vld [vmem:[%s166 + $0x4] sm:$0xf]
      %v177 = vld [vmem:[%s166 + $0x8] sm:$0xf]
      %v178 = vld [vmem:[%s166 + $0xc] sm:$0xf]
      %v179 = vld [vmem:[%s166 + $0x10] sm:$0xf]
      %v180 = vld [vmem:[%s166 + $0x14] sm:$0xf]
      %v181 = vld [vmem:[%s166 + $0x18] sm:$0xf]
      %v182 = vld [vmem:[%s166 + $0x1c] sm:$0xf]
      %v183 = vld [vmem:[%s1] sm:$0xf]
      %v184 = vld [vmem:[%s1 + $0x4] sm:$0xf]
      %v185 = vld [vmem:[%s1 + $0x8] sm:$0xf]
      %v186 = vld [vmem:[%s1 + $0xc] sm:$0xf]
      %v187 = vld [vmem:[%s2] sm:$0x1]
      %v189 = vlaneseq
      %v190 = vshrl.u32 %v189, 7
      %v191 = vsub.s32 0, %v190
      %v192 = vrot.slane %v187, %v191
      %v202 = vunpack.c.l.b16 %v175
      %v203 = vunpack.c.l.b16 %v176
      %v204 = vunpack.c.l.b16 %v177
      %v205 = vunpack.c.l.b16 %v178
      %v206 = vunpack.c.l.b16 %v179
      %v207 = vunpack.c.l.b16 %v180
      %v208 = vunpack.c.l.b16 %v181
      %v209 = vunpack.c.l.b16 %v182
      %v210 = vpack.c.b16 %v203, %v202
      %v211 = vpack.c.b16 %v205, %v204
      %v212 = vpack.c.b16 %v207, %v206
      %v213 = vpack.c.b16 %v209, %v208
      %v218 = vunpack.c.l.b16 %v183
      %v219 = vunpack.c.l.b16 %v184
      %v220 = vunpack.c.l.b16 %v185
      %v221 = vunpack.c.l.b16 %v186
      %v222 = vpack.c.b16 %v219, %v218
      %v223 = vpack.c.b16 %v221, %v220
      %vm226 = vcmask 261120
      %v228 = vsel %vm226, %v210, 0
      %v231 = vsel %vm226, %v211, 0
      %v234 = vsel %vm226, %v212, 0
      %v237 = vsel %vm226, %v213, 0
      %239 = vmatprep.subr.bf16.mxu0 0
      %240 = vmatpush1.bf16.msra.mxu0 0
      %241 = vmatprep.subr.bf16.mxu0 0
      %242 = vmatpush1.bf16.msra.mxu0 0
      %243 = vmatprep.subr.bf16.mxu0 0
      %244 = vmatpush1.bf16.msra.mxu0 0
      %245 = vmatprep.subr.bf16.mxu0 0
      %246 = vmatpush1.bf16.msra.mxu0 0
      %247 = vmatprep.subr.bf16.mxu0 0
      %248 = vmatpush1.bf16.msra.mxu0 0
      %249 = vmatprep.subr.bf16.mxu0 0
      %250 = vmatpush1.bf16.msra.mxu0 0
      %251 = vmatprep.subr.bf16.mxu0 0
      %252 = vmatpush1.bf16.msra.mxu0 %v223
      %253 = vmatprep.subr.bf16.mxu0 0
      %254 = vmatpush1.bf16.msra.mxu0 %v222
      %255 = vmatprep.subr.bf16.mxu0 0
      %256 = vmatpush2.bf16.msra.mxu0 0
      %257 = vmatprep.subr.bf16.mxu0 0
      %258 = vmatpush2.bf16.msra.mxu0 0
      %259 = vmatprep.subr.bf16.mxu0 0
      %260 = vmatpush2.bf16.msra.mxu0 0
      %261 = vmatprep.subr.bf16.mxu0 0
      %262 = vmatpush2.bf16.msra.mxu0 0
      %263 = vmatprep.subr.bf16.mxu0 0
      %264 = vmatpush2.bf16.msra.mxu0 0
      %265 = vmatprep.subr.bf16.mxu0 0
      %266 = vmatpush2.bf16.msra.mxu0 0
      %267 = vmatprep.subr.bf16.mxu0 0
      %268 = vmatpush2.bf16.msra.mxu0 0
      %269 = vmatprep.subr.bf16.mxu0 0
      %270 = vmatpush2.bf16.msra.mxu0 0
      %271 = vmatprep.mubr.bf16.mxu0 0
      %272 = vmatmul.mubr.bf16.gmra.mxu0 %v228
      %v273 = vpop.f32.mrf.mxu0
      %v274 = vadd.f32 %v192, %v273
      %v275 = vpop.f32.mrf.mxu0
      %v276 = vpop.f32.mrf.mxu0
      %v277 = vadd.f32 %v192, %v276
      %v278 = vpop.f32.mrf.mxu0
      %279 = vmatprep.mubr.bf16.mxu0 0
      %280 = vmatmul.mubr.bf16.gmra.mxu0 %v231
      %v281 = vpop.f32.mrf.mxu0
      %v282 = vadd.f32 %v192, %v281
      %v283 = vpop.f32.mrf.mxu0
      %v284 = vpop.f32.mrf.mxu0
      %v285 = vadd.f32 %v192, %v284
      %v286 = vpop.f32.mrf.mxu0
      %287 = vmatprep.mubr.bf16.mxu0 0
      %288 = vmatmul.mubr.bf16.gmra.mxu0 %v234
      %v289 = vpop.f32.mrf.mxu0
      %v290 = vadd.f32 %v192, %v289
      %v291 = vpop.f32.mrf.mxu0
      %v292 = vpop.f32.mrf.mxu0
      %v293 = vadd.f32 %v192, %v292
      %v294 = vpop.f32.mrf.mxu0
      %295 = vmatprep.mubr.bf16.mxu0 0
      %296 = vmatmul.mubr.bf16.gmra.mxu0 %v237
      %v297 = vpop.f32.mrf.mxu0
      %v298 = vadd.f32 %v192, %v297
      %v299 = vpop.f32.mrf.mxu0
      %v300 = vpop.f32.mrf.mxu0
      %v301 = vadd.f32 %v192, %v300
      %v302 = vpop.f32.mrf.mxu0
      %303 = vdwg.mxu0
      %v304 = vpack.c.bf16 %v277, %v274
      %v305 = vpack.c.bf16 %v285, %v282
      %v306 = vpack.c.bf16 %v293, %v290
      %v307 = vpack.c.bf16 %v301, %v298
      %v312 = vunpack.c.l.b16 %v304
      %v313 = vunpack.c.h.b16 %v304
      %v314 = vunpack.c.l.b16 %v305
      %v315 = vunpack.c.h.b16 %v305
      %v316 = vunpack.c.l.b16 %v306
      %v317 = vunpack.c.h.b16 %v306
      %v318 = vunpack.c.l.b16 %v307
      %v319 = vunpack.c.h.b16 %v307
      %v320 = vpack.c.b16 %v312, %v312
      %v321 = vpack.c.b16 %v313, %v313
      %v322 = vpack.c.b16 %v314, %v314
      %v323 = vpack.c.b16 %v315, %v315
      %v324 = vpack.c.b16 %v316, %v316
      %v325 = vpack.c.b16 %v317, %v317
      %v326 = vpack.c.b16 %v318, %v318
      %v327 = vpack.c.b16 %v319, %v319
      %vm336 = vcmask 781312
      %337 = vst.msk [vmem:[%s172] sm:$0xf] %vm336, %v320
      %338 = vst.msk [vmem:[%s172 + $0x4] sm:$0xf] %vm336, %v321
      %339 = vst.msk [vmem:[%s172 + $0x8] sm:$0xf] %vm336, %v322
      %340 = vst.msk [vmem:[%s172 + $0xc] sm:$0xf] %vm336, %v323
      %341 = vst.msk [vmem:[%s172 + $0x10] sm:$0xf] %vm336, %v324
      %342 = vst.msk [vmem:[%s172 + $0x14] sm:$0xf] %vm336, %v325
      %343 = vst.msk [vmem:[%s172 + $0x18] sm:$0xf] %vm336, %v326
      %344 = vst.msk [vmem:[%s172 + $0x1c] sm:$0xf] %vm336, %v327
      %s345 = smul.u32 8, %s14
      %p346 = scmp.lt.s32.totalorder %s345, 15
      %s347 = scalar_select %p346, %s345, 15
      %s348 = smul.addr %s347, 4
      %s349 = scalar_lea.vmem %s3, %s348
      // Predicated region
      $region33: #{window_attention_forward.3} parent=31 // pred_check
        %p350 = pneg %p100
      $region34: #{window_attention_forward.3} parent=31 // pred_check_branch
        %352 = sbr.rel (%p350) target = $region36
      $region35: #{window_attention_forward.3} parent=31 // pred_region
        %s353 = smul.u32 8, %s14
      $region36: #{window_attention_forward.3} parent=31 // pred_fallthru
        _
    $region32: #{window_attention_forward.3} parent=5 // pred_fallthru
      _
    %p354 = scmp.le.s32.totalorder 2, %s9
    // Predicated region
    $region37: #{window_attention_forward.3} parent=5 // pred_check
      %p355 = pneg %p354
    $region38: #{window_attention_forward.3} parent=5 // pred_check_branch
      %357 = sbr.rel (%p355) target = $region40
    $region39: #{window_attention_forward.3} parent=5 // pred_region
      %s358 = ssub.s32 %s9, 2
      // Predicated region
      $region41: #{window_attention_forward.3} parent=39 // pred_check
        %p359 = pneg %p106
      $region42: #{window_attention_forward.3} parent=39 // pred_check_branch
        %361 = sbr.rel (%p359) target = $region44
      $region43: #{window_attention_forward.3} parent=39 // pred_region
        %s362 = smul.u32 8, %s15
        %p363 = scmp.lt.s32.totalorder %s362, 15
        %s364 = scalar_select %p363, %s362, 15
        %s365 = smul.addr %s364, 4
        %s366 = scalar_lea.vmem %s3, %s365
      $region44: #{window_attention_forward.3} parent=39 // pred_fallthru
        _
    $region40: #{window_attention_forward.3} parent=5 // pred_fallthru
      _
  $region6: #{window_attention_forward.3} parent=0 // loop_footer
    %s13 = sadd.s32 1, %s9
  $region7: #{window_attention_forward.3} parent=0 // loop_footer_branch
    %8 = sbr.rel target = $region3
  $region8: #{window_attention_forward.3} parent=0 // loop_exit
    _

// kernel: window_attention_forward.5
$region0: #{window_attention_forward.5}
  #allocation0 [shape = 'u32[]', space=smem, size = 0x4, offset = 0x4, fixed_abs, tag = 'smem constant byte address 0x4 - core index']
  #allocation1 [shape = 'u32[144,128]{1,0:T(1,128)}', space=vmem, size = 0x12000, scoped, tag = 'internal scratch']
  %s0 = inlined_call_operand.vmem [shape: bf16[128,32], index: 0, kind: input, shape index: {}]
  %s1 = inlined_call_operand.vmem [shape: bf16[32,32], index: 1, kind: input, shape index: {}]
  %s2 = inlined_call_operand.vmem [shape: f32[1,32], index: 2, kind: input, shape index: {}]
  %s3 = inlined_call_operand.hbm [shape: f32[128,32], index: 3, kind: output, shape index: {}]
  %s4 = sld [smem:[#allocation0]]
  $region45: #{window_attention_forward.5} parent=0
    _
  %s6 = ssub.s32 1, %s4
  %s7 = scalar_select 0, %s6, %s4
  $region1: #{window_attention_forward.5} parent=0
    #allocation2 [shape = 'u8[65536]{0}', space=vmem, size = 0x10000, scoped, tag = 'output window, operand 0']
    #allocation3 [shape = 's32[2]{0}', space=sflag, size = 0x8, scoped, tag = 'scoped memory for window_attention_forward.5']
    %8 = vsyncpa [#allocation3], 0
    %s9 = scalar_lea.sflag [#allocation3], 1
    %10 = vsyncpa %s9, 0
    loop: start=0, step=1, limit=4
    $region2: #{window_attention_forward.5} parent=1 // loop_pre_header
      _
    $region3: #{window_attention_forward.5} parent=1 // loop_header
      %s12 = sphi 0, %s16
      %p13 = scmp.ge.s32.totalorder %s12, 4
      %s22 = sphi 0, %s24
      %s25 = sphi 0, %s22
      %s26 = sphi 0, %s25
      %s42 = sphi 0, %s26
      %s46 = sphi 0, %s46
      %s48 = sphi 0, %s46
      %s49 = sphi 0, %s48
      %s63 = sphi 0, %s49
      %s67 = sphi 0, %s67
      %s69 = sphi 0, %s67
      %s70 = sphi 0, %s69
      %s84 = sphi 0, %s70
      %s90 = sphi 0, %s92
      %s93 = sphi 0, %s90
      %s94 = sphi 0, %s93
      %s110 = sphi 0, %s94
    $region4: #{window_attention_forward.5} parent=1 // loop_header_branch
      %15 = sbr.rel (%p13) target = $region8
    $region5: #{window_attention_forward.5} parent=1 // loop_body
      %s17 = ssub.s32 %s12, 1
      %s18 = ssub.s32 %s12, 2
      %s19 = sadd.s32 %s12, 1
      %s20 = ssub.s32 %s12, %s19
      %p21 = scmp.eq.s32.totalorder %s20, 0
      %s23 = sadd.s32 %s22, 1
      %s24 = scalar_select %p21, %s22, %s23
      %p27 = pneg %p21
      %p28 = scmp.eq.s32.totalorder %s12, 1
      %p29 = por %p27, %p28
      %p30 = scmp.ne.s32.totalorder %s22, %s25
      %p31 = scmp.eq.s32.totalorder %s12, 0
      %p32 = por %p30, %p31
      %p33 = scmp.ne.s32.totalorder %s22, %s25
      %p34 = scmp.eq.s32.totalorder %s17, 1
      %p35 = por %p33, %p34
      %p36 = scmp.ne.s32.totalorder %s25, %s26
      %p37 = scmp.eq.s32.totalorder %s17, 0
      %p38 = por %p36, %p37
      %p39 = scmp.ne.s32.totalorder %s25, %s26
      %p40 = scmp.eq.s32.totalorder %s18, 1
      %p41 = por %p39, %p40
      %p43 = scmp.ne.s32.totalorder %s26, %s42
      %p44 = scmp.eq.s32.totalorder %s18, 0
      %p45 = por %p43, %p44
      %s47 = sadd.s32 %s46, 1
      %p50 = scmp.eq.s32.totalorder %s12, 1
      %p51 = scmp.ne.s32.totalorder %s46, %s48
      %p52 = scmp.eq.s32.totalorder %s12, 0
      %p53 = por %p51, %p52
      %p54 = scmp.ne.s32.totalorder %s46, %s48
      %p55 = scmp.eq.s32.totalorder %s17, 1
      %p56 = por %p54, %p55
      %p57 = scmp.ne.s32.totalorder %s48, %s49
      %p58 = scmp.eq.s32.totalorder %s17, 0
      %p59 = por %p57, %p58
      %p60 = scmp.ne.s32.totalorder %s48, %s49
      %p61 = scmp.eq.s32.totalorder %s18, 1
      %p62 = por %p60, %p61
      %p64 = scmp.ne.s32.totalorder %s49, %s63
      %p65 = scmp.eq.s32.totalorder %s18, 0
      %p66 = por %p64, %p65
      %s68 = sadd.s32 %s67, 1
      %p71 = scmp.eq.s32.totalorder %s12, 1
      %p72 = scmp.ne.s32.totalorder %s67, %s69
      %p73 = scmp.eq.s32.totalorder %s12, 0
      %p74 = por %p72, %p73
      %p75 = scmp.ne.s32.totalorder %s67, %s69
      %p76 = scmp.eq.s32.totalorder %s17, 1
      %p77 = por %p75, %p76
      %p78 = scmp.ne.s32.totalorder %s69, %s70
      %p79 = scmp.eq.s32.totalorder %s17, 0
      %p80 = por %p78, %p79
      %p81 = scmp.ne.s32.totalorder %s69, %s70
      %p82 = scmp.eq.s32.totalorder %s18, 1
      %p83 = por %p81, %p82
      %p85 = scmp.ne.s32.totalorder %s70, %s84
      %p86 = scmp.eq.s32.totalorder %s18, 0
      %p87 = por %p85, %p86
      %s88 = ssub.s32 %s12, %s19
      %p89 = scmp.eq.s32.totalorder %s88, 0
      %s91 = sadd.s32 %s90, 1
      %s92 = scalar_select %p89, %s90, %s91
      %p95 = pneg %p89
      %p96 = scmp.eq.s32.totalorder %s12, 1
      %p97 = por %p95, %p96
      %p98 = scmp.ne.s32.totalorder %s90, %s93
      %p99 = scmp.eq.s32.totalorder %s12, 0
      %p100 = por %p98, %p99
      %p101 = scmp.ne.s32.totalorder %s90, %s93
      %p102 = scmp.eq.s32.totalorder %s17, 1
      %p103 = por %p101, %p102
      %p104 = scmp.ne.s32.totalorder %s93, %s94
      %p105 = scmp.eq.s32.totalorder %s17, 0
      %p106 = por %p104, %p105
      %p107 = scmp.ne.s32.totalorder %s93, %s94
      %p108 = scmp.eq.s32.totalorder %s18, 1
      %p109 = por %p107, %p108
      %p111 = scmp.ne.s32.totalorder %s94, %s110
      %p112 = scmp.eq.s32.totalorder %s18, 0
      %p113 = por %p111, %p112
      %p114 = scmp.le.s32.totalorder 1, %s12
      %p115 = scmp.lt.s32.totalorder %s12, 3
      %p116 = pnand %p114, %p115
      %p117 = pneg %p116
      // Predicated region
      $region9: #{window_attention_forward.5} parent=5 // pred_check
        _
      $region10: #{window_attention_forward.5} parent=5 // pred_check_branch
        %119 = sbr.rel (%p116) target = $region12
      $region11: #{window_attention_forward.5} parent=5 // pred_region
        %s120 = ssub.s32 %s12, 1
        // Predicated region
        $region13: #{window_attention_forward.5} parent=11 // pred_check
          %p121 = pneg %p59
        $region14: #{window_attention_forward.5} parent=11 // pred_check_branch
          %123 = sbr.rel (%p121) target = $region16
        $region15: #{window_attention_forward.5} parent=11 // pred_region
          _
        $region16: #{window_attention_forward.5} parent=11 // pred_fallthru
          _
        // Predicated region
        $region17: #{window_attention_forward.5} parent=11 // pred_check
          %p124 = pneg %p80
        $region18: #{window_attention_forward.5} parent=11 // pred_check_branch
          %126 = sbr.rel (%p124) target = $region20
        $region19: #{window_attention_forward.5} parent=11 // pred_region
          _
        $region20: #{window_attention_forward.5} parent=11 // pred_fallthru
          _
      $region12: #{window_attention_forward.5} parent=5 // pred_fallthru
        _
      %p127 = scmp.lt.s32.totalorder %s12, 2
      // Predicated region
      $region21: #{window_attention_forward.5} parent=5 // pred_check
        %p128 = pneg %p127
      $region22: #{window_attention_forward.5} parent=5 // pred_check_branch
        %130 = sbr.rel (%p128) target = $region24
      $region23: #{window_attention_forward.5} parent=5 // pred_region
        // Predicated region
        $region25: #{window_attention_forward.5} parent=23 // pred_check
          %p131 = pneg %p32
        $region26: #{window_attention_forward.5} parent=23 // pred_check_branch
          %133 = sbr.rel (%p131) target = $region28
        $region27: #{window_attention_forward.5} parent=23 // pred_region
          %s134 = smul.u32 8, %s12
          %p135 = scmp.lt.s32.totalorder %s134, 15
          %s136 = scalar_select %p135, %s134, 15
          %s137 = smul.addr %s136, 4
          %s138 = scalar_lea.vmem %s0, %s137
          %s139 = smul.u32 8, %s12
        $region28: #{window_attention_forward.5} parent=23 // pred_fallthru
          _
      $region24: #{window_attention_forward.5} parent=5 // pred_fallthru
        _
      %p140 = scmp.le.s32.totalorder 1, %s12
      %p141 = scmp.lt.s32.totalorder %s12, 3
      %p142 = pnand %p140, %p141
      %p143 = pneg %p142
      // Predicated region
      $region29: #{window_attention_forward.5} parent=5 // pred_check
        _
      $region30: #{window_attention_forward.5} parent=5 // pred_check_branch
        %145 = sbr.rel (%p142) target = $region32
      $region31: #{window_attention_forward.5} parent=5 // pred_region
        %s146 = ssub.s32 %s12, 1
        %s147 = smul.u32 8, %s17
        %p148 = scmp.lt.s32.totalorder %s147, 15
        %s149 = scalar_select %p148, %s147, 15
        %s150 = smul.addr %s149, 4
        %s151 = scalar_lea.vmem %s0, %s150
        %p152 = pneg %p38
        %p153 = pneg %p35
        %p154 = pneg %p59
        %p155 = pneg %p56
        %p156 = pneg %p80
        %p157 = pneg %p77
        %p158 = pneg %p106
        %p159 = pneg %p103
        %s160 = sand.u32 %s93, 1
        %s161 = scalar_lea.sflag [#allocation3], %s160
        %s162 = sand.u32 %s93, 1
        %s163 = smul.addr %s162, 64
        %s164 = scalar_lea.vmem [#allocation2], %s163
        %s165 = smul.u32 8, %s17
        %p166 = scmp.lt.s32.totalorder %s165, 15
        %s167 = scalar_select %p166, %s165, 15
        %s168 = smul.addr %s167, 4
        %s169 = scalar_lea.vmem %s0, %s168
        %s170 = smul.u32 8, %s17
        %s171 = smul.u32 8, %s17
        %v173 = vld [vmem:[%s169] sm:$0xf]
        %v174 = vld [vmem:[%s169 + $0x4] sm:$0xf]
        %v175 = vld [vmem:[%s169 + $0x8] sm:$0xf]
        %v176 = vld [vmem:[%s169 + $0xc] sm:$0xf]
        %v177 = vld [vmem:[%s169 + $0x10] sm:$0xf]
        %v178 = vld [vmem:[%s169 + $0x14] sm:$0xf]
        %v179 = vld [vmem:[%s169 + $0x18] sm:$0xf]
        %v180 = vld [vmem:[%s169 + $0x1c] sm:$0xf]
        %v181 = vld [vmem:[%s1] sm:$0xf]
        %v182 = vld [vmem:[%s1 + $0x4] sm:$0xf]
        %v183 = vld [vmem:[%s1 + $0x8] sm:$0xf]
        %v184 = vld [vmem:[%s1 + $0xc] sm:$0xf]
        %v185 = vld [vmem:[%s2] sm:$0x1]
        %v187 = vlaneseq
        %v188 = vshrl.u32 %v187, 7
        %v189 = vsub.s32 0, %v188
        %v190 = vrot.slane %v185, %v189
        %v200 = vunpack.c.l.b16 %v173
        %v201 = vunpack.c.l.b16 %v174
        %v202 = vunpack.c.l.b16 %v175
        %v203 = vunpack.c.l.b16 %v176
        %v204 = vunpack.c.l.b16 %v177
        %v205 = vunpack.c.l.b16 %v178
        %v206 = vunpack.c.l.b16 %v179
        %v207 = vunpack.c.l.b16 %v180
        %v208 = vpack.c.b16 %v201, %v200
        %v209 = vpack.c.b16 %v203, %v202
        %v210 = vpack.c.b16 %v205, %v204
        %v211 = vpack.c.b16 %v207, %v206
        %v216 = vunpack.c.l.b16 %v181
        %v217 = vunpack.c.l.b16 %v182
        %v218 = vunpack.c.l.b16 %v183
        %v219 = vunpack.c.l.b16 %v184
        %v220 = vpack.c.b16 %v217, %v216
        %v221 = vpack.c.b16 %v219, %v218
        %vm224 = vcmask 261120
        %v226 = vsel %vm224, %v208, 0
        %v229 = vsel %vm224, %v209, 0
        %v232 = vsel %vm224, %v210, 0
        %v235 = vsel %vm224, %v211, 0
        %237 = vmatprep.subr.bf16.mxu0 0
        %238 = vmatpush1.bf16.msra.mxu0 0
        %239 = vmatprep.subr.bf16.mxu0 0
        %240 = vmatpush1.bf16.msra.mxu0 0
        %241 = vmatprep.subr.bf16.mxu0 0
        %242 = vmatpush1.bf16.msra.mxu0 0
        %243 = vmatprep.subr.bf16.mxu0 0
        %244 = vmatpush1.bf16.msra.mxu0 0
        %245 = vmatprep.subr.bf16.mxu0 0
        %246 = vmatpush1.bf16.msra.mxu0 0
        %247 = vmatprep.subr.bf16.mxu0 0
        %248 = vmatpush1.bf16.msra.mxu0 0
        %249 = vmatprep.subr.bf16.mxu0 0
        %250 = vmatpush1.bf16.msra.mxu0 %v221
        %251 = vmatprep.subr.bf16.mxu0 0
        %252 = vmatpush1.bf16.msra.mxu0 %v220
        %253 = vmatprep.subr.bf16.mxu0 0
        %254 = vmatpush2.bf16.msra.mxu0 0
        %255 = vmatprep.subr.bf16.mxu0 0
        %256 = vmatpush2.bf16.msra.mxu0 0
        %257 = vmatprep.subr.bf16.mxu0 0
        %258 = vmatpush2.bf16.msra.mxu0 0
        %259 = vmatprep.subr.bf16.mxu0 0
        %260 = vmatpush2.bf16.msra.mxu0 0
        %261 = vmatprep.subr.bf16.mxu0 0
        %262 = vmatpush2.bf16.msra.mxu0 0
        %263 = vmatprep.subr.bf16.mxu0 0
        %264 = vmatpush2.bf16.msra.mxu0 0
        %265 = vmatprep.subr.bf16.mxu0 0
        %266 = vmatpush2.bf16.msra.mxu0 0
        %267 = vmatprep.subr.bf16.mxu0 0
        %268 = vmatpush2.bf16.msra.mxu0 0
        %269 = vmatprep.mubr.bf16.mxu0 0
        %270 = vmatmul.mubr.bf16.gmra.mxu0 %v226
        %v271 = vpop.f32.mrf.mxu0
        %v272 = vadd.f32 %v190, %v271
        %v273 = vpop.f32.mrf.mxu0
        %v274 = vpop.f32.mrf.mxu0
        %v275 = vadd.f32 %v190, %v274
        %v276 = vpop.f32.mrf.mxu0
        %277 = vmatprep.mubr.bf16.mxu0 0
        %278 = vmatmul.mubr.bf16.gmra.mxu0 %v229
        %v279 = vpop.f32.mrf.mxu0
        %v280 = vadd.f32 %v190, %v279
        %v281 = vpop.f32.mrf.mxu0
        %v282 = vpop.f32.mrf.mxu0
        %v283 = vadd.f32 %v190, %v282
        %v284 = vpop.f32.mrf.mxu0
        %285 = vmatprep.mubr.bf16.mxu0 0
        %286 = vmatmul.mubr.bf16.gmra.mxu0 %v232
        %v287 = vpop.f32.mrf.mxu0
        %v288 = vadd.f32 %v190, %v287
        %v289 = vpop.f32.mrf.mxu0
        %v290 = vpop.f32.mrf.mxu0
        %v291 = vadd.f32 %v190, %v290
        %v292 = vpop.f32.mrf.mxu0
        %293 = vmatprep.mubr.bf16.mxu0 0
        %294 = vmatmul.mubr.bf16.gmra.mxu0 %v235
        %v295 = vpop.f32.mrf.mxu0
        %v296 = vadd.f32 %v190, %v295
        %v297 = vpop.f32.mrf.mxu0
        %v298 = vpop.f32.mrf.mxu0
        %v299 = vadd.f32 %v190, %v298
        %v300 = vpop.f32.mrf.mxu0
        %301 = vdwg.mxu0
        %302 = vst.msk [vmem:[%s164] sm:$0xff] %vm224, %v272
        %303 = vst.msk [vmem:[%s164 + $0x8] sm:$0xff] %vm224, %v275
        %304 = vst.msk [vmem:[%s164 + $0x10] sm:$0xff] %vm224, %v280
        %305 = vst.msk [vmem:[%s164 + $0x18] sm:$0xff] %vm224, %v283
        %306 = vst.msk [vmem:[%s164 + $0x20] sm:$0xff] %vm224, %v288
        %307 = vst.msk [vmem:[%s164 + $0x28] sm:$0xff] %vm224, %v291
        %308 = vst.msk [vmem:[%s164 + $0x30] sm:$0xff] %vm224, %v296
        %309 = vst.msk [vmem:[%s164 + $0x38] sm:$0xff] %vm224, %v299
        %s310 = sand.u32 %s93, 1
        %s311 = scalar_lea.sflag [#allocation3], %s310
        %s312 = sand.u32 %s93, 1
        %s313 = smul.addr %s312, 64
        %s314 = scalar_lea.vmem [#allocation2], %s313
        // Predicated region
        $region33: #{window_attention_forward.5} parent=31 // pred_check
          %p315 = pneg %p103
        $region34: #{window_attention_forward.5} parent=31 // pred_check_branch
          %317 = sbr.rel (%p315) target = $region36
        $region35: #{window_attention_forward.5} parent=31 // pred_region
          %s318 = smul.u32 8, %s17
          %s320 = ssub.s32 1024, 1024
          %321 = vsyncadd %s311, %s320
          %s322 = smul.addr %s318, 128
          %s323 = scalar_lea.hbm %s3, %s322
          %s324 = sshll.u32 %s314, 4
          %s325 = int_to_ptr.vmem [resolvable:$true] %s324
          %330 = dma.vmem_to_hbm [thread:$0]  %s325, 1024, %s323, %s311, 128, 128, 8
        $region36: #{window_attention_forward.5} parent=31 // pred_fallthru
          _
      $region32: #{window_attention_forward.5} parent=5 // pred_fallthru
        _
      %p331 = scmp.le.s32.totalorder 2, %s12
      // Predicated region
      $region37: #{window_attention_forward.5} parent=5 // pred_check
        %p332 = pneg %p331
      $region38: #{window_attention_forward.5} parent=5 // pred_check_branch
        %334 = sbr.rel (%p332) target = $region40
      $region39: #{window_attention_forward.5} parent=5 // pred_region
        %s335 = ssub.s32 %s12, 2
        // Predicated region
        $region41: #{window_attention_forward.5} parent=39 // pred_check
          %p336 = pneg %p109
        $region42: #{window_attention_forward.5} parent=39 // pred_check_branch
          %338 = sbr.rel (%p336) target = $region44
        $region43: #{window_attention_forward.5} parent=39 // pred_region
          %s339 = sand.u32 %s94, 1
          %s340 = scalar_lea.sflag [#allocation3], %s339
          %s341 = sand.u32 %s94, 1
          %s342 = smul.addr %s341, 64
          %s343 = scalar_lea.vmem [#allocation2], %s342
          %344 = dma.done %s340, 1024
        $region44: #{window_attention_forward.5} parent=39 // pred_fallthru
          _
      $region40: #{window_attention_forward.5} parent=5 // pred_fallthru
        _
    $region6: #{window_attention_forward.5} parent=1 // loop_footer
      %s16 = sadd.s32 1, %s12
    $region7: #{window_attention_forward.5} parent=1 // loop_footer_branch
      %11 = sbr.rel target = $region3
    $region8: #{window_attention_forward.5} parent=1 // loop_exit
      _
    %345 = vsyncpa [#allocation3], 1
    %s346 = scalar_lea.sflag [#allocation3], 1
    %347 = vsyncpa %s346, 1

// kernel: window_attention_forward.4
$region0: #{window_attention_forward.4}
  #allocation0 [shape = 'u32[]', space=smem, size = 0x4, offset = 0x4, fixed_abs, tag = 'smem constant byte address 0x4 - core index']
  #allocation1 [shape = 'u32[144,128]{1,0:T(1,128)}', space=vmem, size = 0x12000, scoped, tag = 'internal scratch']
  %s0 = inlined_call_operand.vmem [shape: bf16[32,16,8], index: 0, kind: input, shape index: {}]
  %s1 = inlined_call_operand.vmem [shape: bf16[32,64,8], index: 1, kind: input, shape index: {}]
  %s2 = inlined_call_operand.vmem [shape: bf16[32,64,8], index: 2, kind: input, shape index: {}]
  %s3 = inlined_call_operand.vmem [shape: f32[4,16,64], index: 3, kind: input, shape index: {}]
  %s4 = inlined_call_operand.vmem [shape: bf16[32,16,8], index: 4, kind: output, shape index: {}]
  %s5 = sld [smem:[#allocation0]]
  $region49: #{window_attention_forward.4} parent=0
    _
  %s7 = ssub.s32 1, %s5
  %s8 = scalar_select 0, %s7, %s5
  loop: start=0, step=1, limit=4
  $region2: #{window_attention_forward.4} parent=0 // loop_pre_header
    _
  $region3: #{window_attention_forward.4} parent=0 // loop_header
    %s10 = sphi 0, %s14
    %p11 = scmp.ge.s32.totalorder %s10, 4
    %s20 = sphi 0, %s22
    %s23 = sphi 0, %s20
    %s24 = sphi 0, %s23
    %s40 = sphi 0, %s24
    %s46 = sphi 0, %s48
    %s49 = sphi 0, %s46
    %s50 = sphi 0, %s49
    %s66 = sphi 0, %s50
    %s72 = sphi 0, %s74
    %s75 = sphi 0, %s72
    %s76 = sphi 0, %s75
    %s92 = sphi 0, %s76
    %s96 = sphi 0, %s96
    %s98 = sphi 0, %s96
    %s99 = sphi 0, %s98
    %s113 = sphi 0, %s99
    %s119 = sphi 0, %s121
    %s122 = sphi 0, %s119
    %s123 = sphi 0, %s122
    %s139 = sphi 0, %s123
  $region4: #{window_attention_forward.4} parent=0 // loop_header_branch
    %13 = sbr.rel (%p11) target = $region8
  $region5: #{window_attention_forward.4} parent=0 // loop_body
    %s15 = ssub.s32 %s10, 1
    %s16 = ssub.s32 %s10, 2
    %s17 = sadd.s32 %s10, 1
    %s18 = ssub.s32 %s10, %s17
    %p19 = scmp.eq.s32.totalorder %s18, 0
    %s21 = sadd.s32 %s20, 1
    %s22 = scalar_select %p19, %s20, %s21
    %p25 = pneg %p19
    %p26 = scmp.eq.s32.totalorder %s10, 1
    %p27 = por %p25, %p26
    %p28 = scmp.ne.s32.totalorder %s20, %s23
    %p29 = scmp.eq.s32.totalorder %s10, 0
    %p30 = por %p28, %p29
    %p31 = scmp.ne.s32.totalorder %s20, %s23
    %p32 = scmp.eq.s32.totalorder %s15, 1
    %p33 = por %p31, %p32
    %p34 = scmp.ne.s32.totalorder %s23, %s24
    %p35 = scmp.eq.s32.totalorder %s15, 0
    %p36 = por %p34, %p35
    %p37 = scmp.ne.s32.totalorder %s23, %s24
    %p38 = scmp.eq.s32.totalorder %s16, 1
    %p39 = por %p37, %p38
    %p41 = scmp.ne.s32.totalorder %s24, %s40
    %p42 = scmp.eq.s32.totalorder %s16, 0
    %p43 = por %p41, %p42
    %s44 = ssub.s32 %s10, %s17
    %p45 = scmp.eq.s32.totalorder %s44, 0
    %s47 = sadd.s32 %s46, 1
    %s48 = scalar_select %p45, %s46, %s47
    %p51 = pneg %p45
    %p52 = scmp.eq.s32.totalorder %s10, 1
    %p53 = por %p51, %p52
    %p54 = scmp.ne.s32.totalorder %s46, %s49
    %p55 = scmp.eq.s32.totalorder %s10, 0
    %p56 = por %p54, %p55
    %p57 = scmp.ne.s32.totalorder %s46, %s49
    %p58 = scmp.eq.s32.totalorder %s15, 1
    %p59 = por %p57, %p58
    %p60 = scmp.ne.s32.totalorder %s49, %s50
    %p61 = scmp.eq.s32.totalorder %s15, 0
    %p62 = por %p60, %p61
    %p63 = scmp.ne.s32.totalorder %s49, %s50
    %p64 = scmp.eq.s32.totalorder %s16, 1
    %p65 = por %p63, %p64
    %p67 = scmp.ne.s32.totalorder %s50, %s66
    %p68 = scmp.eq.s32.totalorder %s16, 0
    %p69 = por %p67, %p68
    %s70 = ssub.s32 %s10, %s17
    %p71 = scmp.eq.s32.totalorder %s70, 0
    %s73 = sadd.s32 %s72, 1
    %s74 = scalar_select %p71, %s72, %s73
    %p77 = pneg %p71
    %p78 = scmp.eq.s32.totalorder %s10, 1
    %p79 = por %p77, %p78
    %p80 = scmp.ne.s32.totalorder %s72, %s75
    %p81 = scmp.eq.s32.totalorder %s10, 0
    %p82 = por %p80, %p81
    %p83 = scmp.ne.s32.totalorder %s72, %s75
    %p84 = scmp.eq.s32.totalorder %s15, 1
    %p85 = por %p83, %p84
    %p86 = scmp.ne.s32.totalorder %s75, %s76
    %p87 = scmp.eq.s32.totalorder %s15, 0
    %p88 = por %p86, %p87
    %p89 = scmp.ne.s32.totalorder %s75, %s76
    %p90 = scmp.eq.s32.totalorder %s16, 1
    %p91 = por %p89, %p90
    %p93 = scmp.ne.s32.totalorder %s76, %s92
    %p94 = scmp.eq.s32.totalorder %s16, 0
    %p95 = por %p93, %p94
    %s97 = sadd.s32 %s96, 1
    %p100 = scmp.eq.s32.totalorder %s10, 1
    %p101 = scmp.ne.s32.totalorder %s96, %s98
    %p102 = scmp.eq.s32.totalorder %s10, 0
    %p103 = por %p101, %p102
    %p104 = scmp.ne.s32.totalorder %s96, %s98
    %p105 = scmp.eq.s32.totalorder %s15, 1
    %p106 = por %p104, %p105
    %p107 = scmp.ne.s32.totalorder %s98, %s99
    %p108 = scmp.eq.s32.totalorder %s15, 0
    %p109 = por %p107, %p108
    %p110 = scmp.ne.s32.totalorder %s98, %s99
    %p111 = scmp.eq.s32.totalorder %s16, 1
    %p112 = por %p110, %p111
    %p114 = scmp.ne.s32.totalorder %s99, %s113
    %p115 = scmp.eq.s32.totalorder %s16, 0
    %p116 = por %p114, %p115
    %s117 = ssub.s32 %s10, %s17
    %p118 = scmp.eq.s32.totalorder %s117, 0
    %s120 = sadd.s32 %s119, 1
    %s121 = scalar_select %p118, %s119, %s120
    %p124 = pneg %p118
    %p125 = scmp.eq.s32.totalorder %s10, 1
    %p126 = por %p124, %p125
    %p127 = scmp.ne.s32.totalorder %s119, %s122
    %p128 = scmp.eq.s32.totalorder %s10, 0
    %p129 = por %p127, %p128
    %p130 = scmp.ne.s32.totalorder %s119, %s122
    %p131 = scmp.eq.s32.totalorder %s15, 1
    %p132 = por %p130, %p131
    %p133 = scmp.ne.s32.totalorder %s122, %s123
    %p134 = scmp.eq.s32.totalorder %s15, 0
    %p135 = por %p133, %p134
    %p136 = scmp.ne.s32.totalorder %s122, %s123
    %p137 = scmp.eq.s32.totalorder %s16, 1
    %p138 = por %p136, %p137
    %p140 = scmp.ne.s32.totalorder %s123, %s139
    %p141 = scmp.eq.s32.totalorder %s16, 0
    %p142 = por %p140, %p141
    %p143 = scmp.le.s32.totalorder 1, %s10
    %p144 = scmp.lt.s32.totalorder %s10, 3
    %p145 = pnand %p143, %p144
    %p146 = pneg %p145
    // Predicated region
    $region9: #{window_attention_forward.4} parent=5 // pred_check
      _
    $region10: #{window_attention_forward.4} parent=5 // pred_check_branch
      %148 = sbr.rel (%p145) target = $region12
    $region11: #{window_attention_forward.4} parent=5 // pred_region
      %s149 = ssub.s32 %s10, 1
      // Predicated region
      $region13: #{window_attention_forward.4} parent=11 // pred_check
        %p150 = pneg %p109
      $region14: #{window_attention_forward.4} parent=11 // pred_check_branch
        %152 = sbr.rel (%p150) target = $region16
      $region15: #{window_attention_forward.4} parent=11 // pred_region
        _
      $region16: #{window_attention_forward.4} parent=11 // pred_fallthru
        _
    $region12: #{window_attention_forward.4} parent=5 // pred_fallthru
      _
    %p153 = scmp.lt.s32.totalorder %s10, 2
    // Predicated region
    $region17: #{window_attention_forward.4} parent=5 // pred_check
      %p154 = pneg %p153
    $region18: #{window_attention_forward.4} parent=5 // pred_check_branch
      %156 = sbr.rel (%p154) target = $region20
    $region19: #{window_attention_forward.4} parent=5 // pred_region
      // Predicated region
      $region21: #{window_attention_forward.4} parent=19 // pred_check
        %p157 = pneg %p30
      $region22: #{window_attention_forward.4} parent=19 // pred_check_branch
        %159 = sbr.rel (%p157) target = $region24
      $region23: #{window_attention_forward.4} parent=19 // pred_region
        %s160 = smul.u32 16, %s10
        %p161 = scmp.lt.s32.totalorder %s160, 31
        %s162 = scalar_select %p161, %s160, 31
        %s163 = smul.addr %s162, 2
        %s164 = smul.addr %s163, 4
        %s165 = scalar_lea.vmem %s0, %s164
        %s166 = smul.u32 16, %s10
      $region24: #{window_attention_forward.4} parent=19 // pred_fallthru
        _
      // Predicated region
      $region25: #{window_attention_forward.4} parent=19 // pred_check
        %p167 = pneg %p56
      $region26: #{window_attention_forward.4} parent=19 // pred_check_branch
        %169 = sbr.rel (%p167) target = $region28
      $region27: #{window_attention_forward.4} parent=19 // pred_region
        %s170 = smul.u32 16, %s10
        %p171 = scmp.lt.s32.totalorder %s170, 31
        %s172 = scalar_select %p171, %s170, 31
        %s173 = smul.addr %s172, 8
        %s174 = smul.addr %s173, 4
        %s175 = scalar_lea.vmem %s1, %s174
        %s176 = smul.u32 16, %s10
      $region28: #{window_attention_forward.4} parent=19 // pred_fallthru
        _
      // Predicated region
      $region29: #{window_attention_forward.4} parent=19 // pred_check
        %p177 = pneg %p82
      $region30: #{window_attention_forward.4} parent=19 // pred_check_branch
        %179 = sbr.rel (%p177) target = $region32
      $region31: #{window_attention_forward.4} parent=19 // pred_region
        %s180 = smul.u32 16, %s10
        %p181 = scmp.lt.s32.totalorder %s180, 31
        %s182 = scalar_select %p181, %s180, 31
        %s183 = smul.addr %s182, 8
        %s184 = smul.addr %s183, 4
        %s185 = scalar_lea.vmem %s2, %s184
        %s186 = smul.u32 16, %s10
      $region32: #{window_attention_forward.4} parent=19 // pred_fallthru
        _
    $region20: #{window_attention_forward.4} parent=5 // pred_fallthru
      _
    %p187 = scmp.le.s32.totalorder 1, %s10
    %p188 = scmp.lt.s32.totalorder %s10, 3
    %p189 = pnand %p187, %p188
    %p190 = pneg %p189
    // Predicated region
    $region33: #{window_attention_forward.4} parent=5 // pred_check
      _
    $region34: #{window_attention_forward.4} parent=5 // pred_check_branch
      %192 = sbr.rel (%p189) target = $region36
    $region35: #{window_attention_forward.4} parent=5 // pred_region
      %s193 = ssub.s32 %s10, 1
      %s194 = smul.u32 16, %s15
      %p195 = scmp.lt.s32.totalorder %s194, 31
      %s196 = scalar_select %p195, %s194, 31
      %s197 = smul.addr %s196, 2
      %s198 = smul.addr %s197, 4
      %s199 = scalar_lea.vmem %s0, %s198
      %p200 = pneg %p36
      %p201 = pneg %p33
      %s202 = smul.u32 16, %s15
      %p203 = scmp.lt.s32.totalorder %s202, 31
      %s204 = scalar_select %p203, %s202, 31
      %s205 = smul.addr %s204, 8
      %s206 = smul.addr %s205, 4
      %s207 = scalar_lea.vmem %s1, %s206
      %p208 = pneg %p62
      %p209 = pneg %p59
      %s210 = smul.u32 16, %s15
      %p211 = scmp.lt.s32.totalorder %s210, 31
      %s212 = scalar_select %p211, %s210, 31
      %s213 = smul.addr %s212, 8
      %s214 = smul.addr %s213, 4
      %s215 = scalar_lea.vmem %s2, %s214
      %p216 = pneg %p88
      %p217 = pneg %p85
      %p218 = pneg %p109
      %p219 = pneg %p106
      %p220 = pneg %p135
      %p221 = pneg %p132
      %s222 = smul.u32 16, %s15
      %p223 = scmp.lt.s32.totalorder %s222, 31
      %s224 = scalar_select %p223, %s222, 31
      %s225 = smul.addr %s224, 2
      %s226 = smul.addr %s225, 4
      %s227 = scalar_lea.vmem %s4, %s226
      %s228 = smul.u32 16, %s15
      %p229 = scmp.lt.s32.totalorder %s228, 31
      %s230 = scalar_select %p229, %s228, 31
      %s231 = smul.addr %s230, 2
      %s232 = smul.addr %s231, 4
      %s233 = scalar_lea.vmem %s0, %s232
      %s234 = smul.u32 16, %s15
      %s235 = smul.u32 16, %s15
      %p236 = scmp.lt.s32.totalorder %s235, 31
      %s237 = scalar_select %p236, %s235, 31
      %s238 = smul.addr %s237, 8
      %s239 = smul.addr %s238, 4
      %s240 = scalar_lea.vmem %s1, %s239
      %s241 = smul.u32 16, %s15
      %s242 = smul.u32 16, %s15
      %p243 = scmp.lt.s32.totalorder %s242, 31
      %s244 = scalar_select %p243, %s242, 31
      %s245 = smul.addr %s244, 8
      %s246 = smul.addr %s245, 4
      %s247 = scalar_lea.vmem %s2, %s246
      %s248 = smul.u32 16, %s15
      %s249 = smul.u32 16, %s15
      %p250 = scmp.lt.s32.totalorder %s249, 31
      %s251 = scalar_select %p250, %s249, 31
      %s252 = smul.addr %s251, 2
      %s253 = smul.addr %s252, 4
      %s254 = scalar_lea.vmem %s4, %s253
      %s255 = smul.u32 16, %s15
      %v257 = vld [vmem:[%s233] sm:$0xf]
      %v258 = vld [vmem:[%s233 + $0x4] sm:$0xf]
      %v259 = vld [vmem:[%s233 + $0x8] sm:$0xf]
      %v260 = vld [vmem:[%s233 + $0xc] sm:$0xf]
      %v261 = vld [vmem:[%s233 + $0x10] sm:$0xf]
      %v262 = vld [vmem:[%s233 + $0x14] sm:$0xf]
      %v263 = vld [vmem:[%s233 + $0x18] sm:$0xf]
      %v264 = vld [vmem:[%s233 + $0x1c] sm:$0xf]
      %v265 = vld [vmem:[%s233 + $0x20] sm:$0xf]
      %v266 = vld [vmem:[%s233 + $0x24] sm:$0xf]
      %v267 = vld [vmem:[%s233 + $0x28] sm:$0xf]
      %v268 = vld [vmem:[%s233 + $0x2c] sm:$0xf]
      %v269 = vld [vmem:[%s233 + $0x30] sm:$0xf]
      %v270 = vld [vmem:[%s233 + $0x34] sm:$0xf]
      %v271 = vld [vmem:[%s233 + $0x38] sm:$0xf]
      %v272 = vld [vmem:[%s233 + $0x3c] sm:$0xf]
      %v273 = vld [vmem:[%s233 + $0x40] sm:$0xf]
      %v274 = vld [vmem:[%s233 + $0x44] sm:$0xf]
      %v275 = vld [vmem:[%s233 + $0x48] sm:$0xf]
      %v276 = vld [vmem:[%s233 + $0x4c] sm:$0xf]
      %v277 = vld [vmem:[%s233 + $0x50] sm:$0xf]
      %v278 = vld [vmem:[%s233 + $0x54] sm:$0xf]
      %v279 = vld [vmem:[%s233 + $0x58] sm:$0xf]
      %v280 = vld [vmem:[%s233 + $0x5c] sm:$0xf]
      %v281 = vld [vmem:[%s233 + $0x60] sm:$0xf]
      %v282 = vld [vmem:[%s233 + $0x64] sm:$0xf]
      %v283 = vld [vmem:[%s233 + $0x68] sm:$0xf]
      %v284 = vld [vmem:[%s233 + $0x6c] sm:$0xf]
      %v285 = vld [vmem:[%s233 + $0x70] sm:$0xf]
      %v286 = vld [vmem:[%s233 + $0x74] sm:$0xf]
      %v287 = vld [vmem:[%s233 + $0x78] sm:$0xf]
      %v288 = vld [vmem:[%s233 + $0x7c] sm:$0xf]
      %v289 = vld [vmem:[%s240] sm:$0xf]
      %v290 = vld [vmem:[%s240 + $0x4] sm:$0xf]
      %v291 = vld [vmem:[%s240 + $0x8] sm:$0xf]
      %v292 = vld [vmem:[%s240 + $0xc] sm:$0xf]
      %v293 = vld [vmem:[%s240 + $0x10] sm:$0xf]
      %v294 = vld [vmem:[%s240 + $0x14] sm:$0xf]
      %v295 = vld [vmem:[%s240 + $0x18] sm:$0xf]
      %v296 = vld [vmem:[%s240 + $0x1c] sm:$0xf]
      %v297 = vld [vmem:[%s240 + $0x20] sm:$0xf]
      %v298 = vld [vmem:[%s240 + $0x24] sm:$0xf]
      %v299 = vld [vmem:[%s240 + $0x28] sm:$0xf]
      %v300 = vld [vmem:[%s240 + $0x2c] sm:$0xf]
      %v301 = vld [vmem:[%s240 + $0x30] sm:$0xf]
      %v302 = vld [vmem:[%s240 + $0x34] sm:$0xf]
      %v303 = vld [vmem:[%s240 + $0x38] sm:$0xf]
      %v304 = vld [vmem:[%s240 + $0x3c] sm:$0xf]
      %v305 = vld [vmem:[%s240 + $0x40] sm:$0xf]
      %v306 = vld [vmem:[%s240 + $0x44] sm:$0xf]
      %v307 = vld [vmem:[%s240 + $0x48] sm:$0xf]
      %v308 = vld [vmem:[%s240 + $0x4c] sm:$0xf]
      %v309 = vld [vmem:[%s240 + $0x50] sm:$0xf]
      %v310 = vld [vmem:[%s240 + $0x54] sm:$0xf]
      %v311 = vld [vmem:[%s240 + $0x58] sm:$0xf]
      %v312 = vld [vmem:[%s240 + $0x5c] sm:$0xf]
      %v313 = vld [vmem:[%s240 + $0x60] sm:$0xf]
      %v314 = vld [vmem:[%s240 + $0x64] sm:$0xf]
      %v315 = vld [vmem:[%s240 + $0x68] sm:$0xf]
      %v316 = vld [vmem:[%s240 + $0x6c] sm:$0xf]
      %v317 = vld [vmem:[%s240 + $0x70] sm:$0xf]
      %v318 = vld [vmem:[%s240 + $0x74] sm:$0xf]
      %v319 = vld [vmem:[%s240 + $0x78] sm:$0xf]
      %v320 = vld [vmem:[%s240 + $0x7c] sm:$0xf]
      %v321 = vld [vmem:[%s240 + $0x80] sm:$0xf]
      %v322 = vld [vmem:[%s240 + $0x84] sm:$0xf]
      %v323 = vld [vmem:[%s240 + $0x88] sm:$0xf]
      %v324 = vld [vmem:[%s240 + $0x8c] sm:$0xf]
      %v325 = vld [vmem:[%s240 + $0x90] sm:$0xf]
      %v326 = vld [vmem:[%s240 + $0x94] sm:$0xf]
      %v327 = vld [vmem:[%s240 + $0x98] sm:$0xf]
      %v328 = vld [vmem:[%s240 + $0x9c] sm:$0xf]
      %v329 = vld [vmem:[%s240 + $0xa0] sm:$0xf]
      %v330 = vld [vmem:[%s240 + $0xa4] sm:$0xf]
      %v331 = vld [vmem:[%s240 + $0xa8] sm:$0xf]
      %v332 = vld [vmem:[%s240 + $0xac] sm:$0xf]
      %v333 = vld [vmem:[%s240 + $0xb0] sm:$0xf]
      %v334 = vld [vmem:[%s240 + $0xb4] sm:$0xf]
      %v335 = vld [vmem:[%s240 + $0xb8] sm:$0xf]
      %v336 = vld [vmem:[%s240 + $0xbc] sm:$0xf]
      %v337 = vld [vmem:[%s240 + $0xc0] sm:$0xf]
      %v338 = vld [vmem:[%s240 + $0xc4] sm:$0xf]
      %v339 = vld [vmem:[%s240 + $0xc8] sm:$0xf]
      %v340 = vld [vmem:[%s240 + $0xcc] sm:$0xf]
      %v341 = vld [vmem:[%s240 + $0xd0] sm:$0xf]
      %v342 = vld [vmem:[%s240 + $0xd4] sm:$0xf]
      %v343 = vld [vmem:[%s240 + $0xd8] sm:$0xf]
      %v344 = vld [vmem:[%s240 + $0xdc] sm:$0xf]
      %v345 = vld [vmem:[%s240 + $0xe0] sm:$0xf]
      %v346 = vld [vmem:[%s240 + $0xe4] sm:$0xf]
      %v347 = vld [vmem:[%s240 + $0xe8] sm:$0xf]
      %v348 = vld [vmem:[%s240 + $0xec] sm:$0xf]
      %v349 = vld [vmem:[%s240 + $0xf0] sm:$0xf]
      %v350 = vld [vmem:[%s240 + $0xf4] sm:$0xf]
      %v351 = vld [vmem:[%s240 + $0xf8] sm:$0xf]
      %v352 = vld [vmem:[%s240 + $0xfc] sm:$0xf]
      %v353 = vld [vmem:[%s240 + $0x100] sm:$0xf]
      %v354 = vld [vmem:[%s240 + $0x104] sm:$0xf]
      %v355 = vld [vmem:[%s240 + $0x108] sm:$0xf]
      %v356 = vld [vmem:[%s240 + $0x10c] sm:$0xf]
      %v357 = vld [vmem:[%s240 + $0x110] sm:$0xf]
      %v358 = vld [vmem:[%s240 + $0x114] sm:$0xf]
      %v359 = vld [vmem:[%s240 + $0x118] sm:$0xf]
      %v360 = vld [vmem:[%s240 + $0x11c] sm:$0xf]
      %v361 = vld [vmem:[%s240 + $0x120] sm:$0xf]
      %v362 = vld [vmem:[%s240 + $0x124] sm:$0xf]
      %v363 = vld [vmem:[%s240 + $0x128] sm:$0xf]
      %v364 = vld [vmem:[%s240 + $0x12c] sm:$0xf]
      %v365 = vld [vmem:[%s240 + $0x130] sm:$0xf]
      %v366 = vld [vmem:[%s240 + $0x134] sm:$0xf]
      %v367 = vld [vmem:[%s240 + $0x138] sm:$0xf]
      %v368 = vld [vmem:[%s240 + $0x13c] sm:$0xf]
      %v369 = vld [vmem:[%s240 + $0x140] sm:$0xf]
      %v370 = vld [vmem:[%s240 + $0x144] sm:$0xf]
      %v371 = vld [vmem:[%s240 + $0x148] sm:$0xf]
      %v372 = vld [vmem:[%s240 + $0x14c] sm:$0xf]
      %v373 = vld [vmem:[%s240 + $0x150] sm:$0xf]
      %v374 = vld [vmem:[%s240 + $0x154] sm:$0xf]
      %v375 = vld [vmem:[%s240 + $0x158] sm:$0xf]
      %v376 = vld [vmem:[%s240 + $0x15c] sm:$0xf]
      %v377 = vld [vmem:[%s240 + $0x160] sm:$0xf]
      %v378 = vld [vmem:[%s240 + $0x164] sm:$0xf]
      %v379 = vld [vmem:[%s240 + $0x168] sm:$0xf]
      %v380 = vld [vmem:[%s240 + $0x16c] sm:$0xf]
      %v381 = vld [vmem:[%s240 + $0x170] sm:$0xf]
      %v382 = vld [vmem:[%s240 + $0x174] sm:$0xf]
      %v383 = vld [vmem:[%s240 + $0x178] sm:$0xf]
      %v384 = vld [vmem:[%s240 + $0x17c] sm:$0xf]
      %v385 = vld [vmem:[%s240 + $0x180] sm:$0xf]
      %v386 = vld [vmem:[%s240 + $0x184] sm:$0xf]
      %v387 = vld [vmem:[%s240 + $0x188] sm:$0xf]
      %v388 = vld [vmem:[%s240 + $0x18c] sm:$0xf]
      %v389 = vld [vmem:[%s240 + $0x190] sm:$0xf]
      %v390 = vld [vmem:[%s240 + $0x194] sm:$0xf]
      %v391 = vld [vmem:[%s240 + $0x198] sm:$0xf]
      %v392 = vld [vmem:[%s240 + $0x19c] sm:$0xf]
      %v393 = vld [vmem:[%s240 + $0x1a0] sm:$0xf]
      %v394 = vld [vmem:[%s240 + $0x1a4] sm:$0xf]
      %v395 = vld [vmem:[%s240 + $0x1a8] sm:$0xf]
      %v396 = vld [vmem:[%s240 + $0x1ac] sm:$0xf]
      %v397 = vld [vmem:[%s240 + $0x1b0] sm:$0xf]
      %v398 = vld [vmem:[%s240 + $0x1b4] sm:$0xf]
      %v399 = vld [vmem:[%s240 + $0x1b8] sm:$0xf]
      %v400 = vld [vmem:[%s240 + $0x1bc] sm:$0xf]
      %v401 = vld [vmem:[%s240 + $0x1c0] sm:$0xf]
      %v402 = vld [vmem:[%s240 + $0x1c4] sm:$0xf]
      %v403 = vld [vmem:[%s240 + $0x1c8] sm:$0xf]
      %v404 = vld [vmem:[%s240 + $0x1cc] sm:$0xf]
      %v405 = vld [vmem:[%s240 + $0x1d0] sm:$0xf]
      %v406 = vld [vmem:[%s240 + $0x1d4] sm:$0xf]
      %v407 = vld [vmem:[%s240 + $0x1d8] sm:$0xf]
      %v408 = vld [vmem:[%s240 + $0x1dc] sm:$0xf]
      %v409 = vld [vmem:[%s240 + $0x1e0] sm:$0xf]
      %v410 = vld [vmem:[%s240 + $0x1e4] sm:$0xf]
      %v411 = vld [vmem:[%s240 + $0x1e8] sm:$0xf]
      %v412 = vld [vmem:[%s240 + $0x1ec] sm:$0xf]
      %v413 = vld [vmem:[%s240 + $0x1f0] sm:$0xf]
      %v414 = vld [vmem:[%s240 + $0x1f4] sm:$0xf]
      %v415 = vld [vmem:[%s240 + $0x1f8] sm:$0xf]
      %v416 = vld [vmem:[%s240 + $0x1fc] sm:$0xf]
      %v417 = vld [vmem:[%s247] sm:$0xf]
      %v418 = vld [vmem:[%s247 + $0x4] sm:$0xf]
      %v419 = vld [vmem:[%s247 + $0x8] sm:$0xf]
      %v420 = vld [vmem:[%s247 + $0xc] sm:$0xf]
      %v421 = vld [vmem:[%s247 + $0x10] sm:$0xf]
      %v422 = vld [vmem:[%s247 + $0x14] sm:$0xf]
      %v423 = vld [vmem:[%s247 + $0x18] sm:$0xf]
      %v424 = vld [vmem:[%s247 + $0x1c] sm:$0xf]
      %v425 = vld [vmem:[%s247 + $0x20] sm:$0xf]
      %v426 = vld [vmem:[%s247 + $0x24] sm:$0xf]
      %v427 = vld [vmem:[%s247 + $0x28] sm:$0xf]
      %v428 = vld [vmem:[%s247 + $0x2c] sm:$0xf]
      %v429 = vld [vmem:[%s247 + $0x30] sm:$0xf]
      %v430 = vld [vmem:[%s247 + $0x34] sm:$0xf]
      %v431 = vld [vmem:[%s247 + $0x38] sm:$0xf]
      %v432 = vld [vmem:[%s247 + $0x3c] sm:$0xf]
      %v433 = vld [vmem:[%s247 + $0x40] sm:$0xf]
      %v434 = vld [vmem:[%s247 + $0x44] sm:$0xf]
      %v435 = vld [vmem:[%s247 + $0x48] sm:$0xf]
      %v436 = vld [vmem:[%s247 + $0x4c] sm:$0xf]
      %v437 = vld [vmem:[%s247 + $0x50] sm:$0xf]
      %v438 = vld [vmem:[%s247 + $0x54] sm:$0xf]
      %v439 = vld [vmem:[%s247 + $0x58] sm:$0xf]
      %v440 = vld [vmem:[%s247 + $0x5c] sm:$0xf]
      %v441 = vld [vmem:[%s247 + $0x60] sm:$0xf]
      %v442 = vld [vmem:[%s247 + $0x64] sm:$0xf]
      %v443 = vld [vmem:[%s247 + $0x68] sm:$0xf]
      %v444 = vld [vmem:[%s247 + $0x6c] sm:$0xf]
      %v445 = vld [vmem:[%s247 + $0x70] sm:$0xf]
      %v446 = vld [vmem:[%s247 + $0x74] sm:$0xf]
      %v447 = vld [vmem:[%s247 + $0x78] sm:$0xf]
      %v448 = vld [vmem:[%s247 + $0x7c] sm:$0xf]
      %v449 = vld [vmem:[%s247 + $0x80] sm:$0xf]
      %v450 = vld [vmem:[%s247 + $0x84] sm:$0xf]
      %v451 = vld [vmem:[%s247 + $0x88] sm:$0xf]
      %v452 = vld [vmem:[%s247 + $0x8c] sm:$0xf]
      %v453 = vld [vmem:[%s247 + $0x90] sm:$0xf]
      %v454 = vld [vmem:[%s247 + $0x94] sm:$0xf]
      %v455 = vld [vmem:[%s247 + $0x98] sm:$0xf]
      %v456 = vld [vmem:[%s247 + $0x9c] sm:$0xf]
      %v457 = vld [vmem:[%s247 + $0xa0] sm:$0xf]
      %v458 = vld [vmem:[%s247 + $0xa4] sm:$0xf]
      %v459 = vld [vmem:[%s247 + $0xa8] sm:$0xf]
      %v460 = vld [vmem:[%s247 + $0xac] sm:$0xf]
      %v461 = vld [vmem:[%s247 + $0xb0] sm:$0xf]
      %v462 = vld [vmem:[%s247 + $0xb4] sm:$0xf]
      %v463 = vld [vmem:[%s247 + $0xb8] sm:$0xf]
      %v464 = vld [vmem:[%s247 + $0xbc] sm:$0xf]
      %v465 = vld [vmem:[%s247 + $0xc0] sm:$0xf]
      %v466 = vld [vmem:[%s247 + $0xc4] sm:$0xf]
      %v467 = vld [vmem:[%s247 + $0xc8] sm:$0xf]
      %v468 = vld [vmem:[%s247 + $0xcc] sm:$0xf]
      %v469 = vld [vmem:[%s247 + $0xd0] sm:$0xf]
      %v470 = vld [vmem:[%s247 + $0xd4] sm:$0xf]
      %v471 = vld [vmem:[%s247 + $0xd8] sm:$0xf]
      %v472 = vld [vmem:[%s247 + $0xdc] sm:$0xf]
      %v473 = vld [vmem:[%s247 + $0xe0] sm:$0xf]
      %v474 = vld [vmem:[%s247 + $0xe4] sm:$0xf]
      %v475 = vld [vmem:[%s247 + $0xe8] sm:$0xf]
      %v476 = vld [vmem:[%s247 + $0xec] sm:$0xf]
      %v477 = vld [vmem:[%s247 + $0xf0] sm:$0xf]
      %v478 = vld [vmem:[%s247 + $0xf4] sm:$0xf]
      %v479 = vld [vmem:[%s247 + $0xf8] sm:$0xf]
      %v480 = vld [vmem:[%s247 + $0xfc] sm:$0xf]
      %v481 = vld [vmem:[%s247 + $0x100] sm:$0xf]
      %v482 = vld [vmem:[%s247 + $0x104] sm:$0xf]
      %v483 = vld [vmem:[%s247 + $0x108] sm:$0xf]
      %v484 = vld [vmem:[%s247 + $0x10c] sm:$0xf]
      %v485 = vld [vmem:[%s247 + $0x110] sm:$0xf]
      %v486 = vld [vmem:[%s247 + $0x114] sm:$0xf]
      %v487 = vld [vmem:[%s247 + $0x118] sm:$0xf]
      %v488 = vld [vmem:[%s247 + $0x11c] sm:$0xf]
      %v489 = vld [vmem:[%s247 + $0x120] sm:$0xf]
      %v490 = vld [vmem:[%s247 + $0x124] sm:$0xf]
      %v491 = vld [vmem:[%s247 + $0x128] sm:$0xf]
      %v492 = vld [vmem:[%s247 + $0x12c] sm:$0xf]
      %v493 = vld [vmem:[%s247 + $0x130] sm:$0xf]
      %v494 = vld [vmem:[%s247 + $0x134] sm:$0xf]
      %v495 = vld [vmem:[%s247 + $0x138] sm:$0xf]
      %v496 = vld [vmem:[%s247 + $0x13c] sm:$0xf]
      %v497 = vld [vmem:[%s247 + $0x140] sm:$0xf]
      %v498 = vld [vmem:[%s247 + $0x144] sm:$0xf]
      %v499 = vld [vmem:[%s247 + $0x148] sm:$0xf]
      %v500 = vld [vmem:[%s247 + $0x14c] sm:$0xf]
      %v501 = vld [vmem:[%s247 + $0x150] sm:$0xf]
      %v502 = vld [vmem:[%s247 + $0x154] sm:$0xf]
      %v503 = vld [vmem:[%s247 + $0x158] sm:$0xf]
      %v504 = vld [vmem:[%s247 + $0x15c] sm:$0xf]
      %v505 = vld [vmem:[%s247 + $0x160] sm:$0xf]
      %v506 = vld [vmem:[%s247 + $0x164] sm:$0xf]
      %v507 = vld [vmem:[%s247 + $0x168] sm:$0xf]
      %v508 = vld [vmem:[%s247 + $0x16c] sm:$0xf]
      %v509 = vld [vmem:[%s247 + $0x170] sm:$0xf]
      %v510 = vld [vmem:[%s247 + $0x174] sm:$0xf]
      %v511 = vld [vmem:[%s247 + $0x178] sm:$0xf]
      %v512 = vld [vmem:[%s247 + $0x17c] sm:$0xf]
      %v513 = vld [vmem:[%s247 + $0x180] sm:$0xf]
      %v514 = vld [vmem:[%s247 + $0x184] sm:$0xf]
      %v515 = vld [vmem:[%s247 + $0x188] sm:$0xf]
      %v516 = vld [vmem:[%s247 + $0x18c] sm:$0xf]
      %v517 = vld [vmem:[%s247 + $0x190] sm:$0xf]
      %v518 = vld [vmem:[%s247 + $0x194] sm:$0xf]
      %v519 = vld [vmem:[%s247 + $0x198] sm:$0xf]
      %v520 = vld [vmem:[%s247 + $0x19c] sm:$0xf]
      %v521 = vld [vmem:[%s247 + $0x1a0] sm:$0xf]
      %v522 = vld [vmem:[%s247 + $0x1a4] sm:$0xf]
      %v523 = vld [vmem:[%s247 + $0x1a8] sm:$0xf]
      %v524 = vld [vmem:[%s247 + $0x1ac] sm:$0xf]
      %v525 = vld [vmem:[%s247 + $0x1b0] sm:$0xf]
      %v526 = vld [vmem:[%s247 + $0x1b4] sm:$0xf]
      %v527 = vld [vmem:[%s247 + $0x1b8] sm:$0xf]
      %v528 = vld [vmem:[%s247 + $0x1bc] sm:$0xf]
      %v529 = vld [vmem:[%s247 + $0x1c0] sm:$0xf]
      %v530 = vld [vmem:[%s247 + $0x1c4] sm:$0xf]
      %v531 = vld [vmem:[%s247 + $0x1c8] sm:$0xf]
      %v532 = vld [vmem:[%s247 + $0x1cc] sm:$0xf]
      %v533 = vld [vmem:[%s247 + $0x1d0] sm:$0xf]
      %v534 = vld [vmem:[%s247 + $0x1d4] sm:$0xf]
      %v535 = vld [vmem:[%s247 + $0x1d8] sm:$0xf]
      %v536 = vld [vmem:[%s247 + $0x1dc] sm:$0xf]
      %v537 = vld [vmem:[%s247 + $0x1e0] sm:$0xf]
      %v538 = vld [vmem:[%s247 + $0x1e4] sm:$0xf]
      %v539 = vld [vmem:[%s247 + $0x1e8] sm:$0xf]
      %v540 = vld [vmem:[%s247 + $0x1ec] sm:$0xf]
      %v541 = vld [vmem:[%s247 + $0x1f0] sm:$0xf]
      %v542 = vld [vmem:[%s247 + $0x1f4] sm:$0xf]
      %v543 = vld [vmem:[%s247 + $0x1f8] sm:$0xf]
      %v544 = vld [vmem:[%s247 + $0x1fc] sm:$0xf]
      %v545 = vld [vmem:[%s3] sm:$0xff]
      %v546 = vld [vmem:[%s3 + $0x8] sm:$0xff]
      %v547 = vld [vmem:[%s3 + $0x10] sm:$0xff]
      %v548 = vld [vmem:[%s3 + $0x18] sm:$0xff]
      %v549 = vld [vmem:[%s3 + $0x20] sm:$0xff]
      %v550 = vld [vmem:[%s3 + $0x28] sm:$0xff]
      %v551 = vld [vmem:[%s3 + $0x30] sm:$0xff]
      %v552 = vld [vmem:[%s3 + $0x38] sm:$0xff]
      %v555 = vunpack.c.l.b16 %v257
      %v556 = vunpack.c.l.b16 %v258
      %v557 = vpack.c.b16 %v556, %v555
      %v566 = vunpack.c.l.b16 %v289
      %v567 = vunpack.c.l.b16 %v290
      %v568 = vunpack.c.l.b16 %v291
      %v569 = vunpack.c.l.b16 %v292
      %v570 = vunpack.c.l.b16 %v293
      %v571 = vunpack.c.l.b16 %v294
      %v572 = vunpack.c.l.b16 %v295
      %v573 = vunpack.c.l.b16 %v296
      %v574 = vpack.c.b16 %v567, %v566
      %v575 = vpack.c.b16 %v569, %v568
      %v576 = vpack.c.b16 %v571, %v570
      %v577 = vpack.c.b16 %v573, %v572
      %vm578 = vcmask 64512
      %v580 = vsel %vm578, %v557, 0
      %v583 = vsel %vm578, %v574, 0
      %v586 = vsel %vm578, %v575, 0
      %v589 = vsel %vm578, %v576, 0
      %v592 = vsel %vm578, %v577, 0
      %594 = vmatprep.subr.bf16.mxu0 0
      %595 = vmatpush1.bf16.xpose.msra.mxu0 0
      %596 = vmatprep.subr.bf16.mxu0 0
      %597 = vmatpush1.bf16.xpose.msra.mxu0 0
      %598 = vmatprep.subr.bf16.mxu0 0
      %599 = vmatpush1.bf16.xpose.msra.mxu0 0
      %600 = vmatprep.subr.bf16.mxu0 0
      %601 = vmatpush1.bf16.xpose.msra.mxu0 0
      %602 = vmatprep.subr.bf16.mxu0 0
      %603 = vmatpush1.bf16.xpose.msra.mxu0 %v592
      %604 = vmatprep.subr.bf16.mxu0 0
      %605 = vmatpush1.bf16.xpose.msra.mxu0 %v589
      %606 = vmatprep.subr.bf16.mxu0 0
      %607 = vmatpush1.bf16.xpose.msra.mxu0 %v586
      %608 = vmatprep.subr.bf16.mxu0 0
      %609 = vmatpush1.bf16.xpose.msra.mxu0 %v583
      %610 = vmatprep.subr.bf16.mxu0 0
      %611 = vmatpush2.bf16.xpose.msra.mxu0 0
      %612 = vmatprep.subr.bf16.mxu0 0
      %613 = vmatpush2.bf16.xpose.msra.mxu0 0
      %614 = vmatprep.subr.bf16.mxu0 0
      %615 = vmatpush2.bf16.xpose.msra.mxu0 0
      %616 = vmatprep.subr.bf16.mxu0 0
      %617 = vmatpush2.bf16.xpose.msra.mxu0 0
      %618 = vmatprep.subr.bf16.mxu0 0
      %619 = vmatpush2.bf16.xpose.msra.mxu0 0
      %620 = vmatprep.subr.bf16.mxu0 0
      %621 = vmatpush2.bf16.xpose.msra.mxu0 0
      %622 = vmatprep.subr.bf16.mxu0 0
      %623 = vmatpush2.bf16.xpose.msra.mxu0 0
      %624 = vmatprep.subr.bf16.mxu0 0
      %625 = vmatpush2.bf16.xpose.msra.mxu0 0
      %626 = vmatprep.mubr.bf16.mxu0 0
      %627 = vmatmul.mubr.bf16.gmra.mxu0 %v580
      %v628 = vpop.f32.mrf.mxu0
      %v629 = vadd.f32 0.0, %v628
      %v630 = vpop.f32.mrf.mxu0
      %v631 = vpop.f32.mrf.mxu0
      %v632 = vadd.f32 0.0, %v631
      %v633 = vpop.f32.mrf.mxu0
      %634 = vdwg.mxu0
      %v637 = vunpack.c.l.b16 %v259
      %v638 = vunpack.c.l.b16 %v260
      %v639 = vpack.c.b16 %v638, %v637
      %v648 = vunpack.c.l.b16 %v297
      %v649 = vunpack.c.l.b16 %v298
      %v650 = vunpack.c.l.b16 %v299
      %v651 = vunpack.c.l.b16 %v300
      %v652 = vunpack.c.l.b16 %v301
      %v653 = vunpack.c.l.b16 %v302
      %v654 = vunpack.c.l.b16 %v303
      %v655 = vunpack.c.l.b16 %v304
      %v656 = vpack.c.b16 %v649, %v648
      %v657 = vpack.c.b16 %v651, %v650
      %v658 = vpack.c.b16 %v653, %v652
      %v659 = vpack.c.b16 %v655, %v654
      %v661 = vsel %vm578, %v639, 0
      %v664 = vsel %vm578, %v656, 0
      %v667 = vsel %vm578, %v657, 0
      %v670 = vsel %vm578, %v658, 0
      %v673 = vsel %vm578, %v659, 0
      %675 = vmatprep.subr.bf16.mxu0 0
      %676 = vmatpush1.bf16.xpose.msra.mxu0 0
      %677 = vmatprep.subr.bf16.mxu0 0
      %678 = vmatpush1.bf16.xpose.msra.mxu0 0
      %679 = vmatprep.subr.bf16.mxu0 0
      %680 = vmatpush1.bf16.xpose.msra.mxu0 0
      %681 = vmatprep.subr.bf16.mxu0 0
      %682 = vmatpush1.bf16.xpose.msra.mxu0 0
      %683 = vmatprep.subr.bf16.mxu0 0
      %684 = vmatpush1.bf16.xpose.msra.mxu0 %v673
      %685 = vmatprep.subr.bf16.mxu0 0
      %686 = vmatpush1.bf16.xpose.msra.mxu0 %v670
      %687 = vmatprep.subr.bf16.mxu0 0
      %688 = vmatpush1.bf16.xpose.msra.mxu0 %v667
      %689 = vmatprep.subr.bf16.mxu0 0
      %690 = vmatpush1.bf16.xpose.msra.mxu0 %v664
      %691 = vmatprep.subr.bf16.mxu0 0
      %692 = vmatpush2.bf16.xpose.msra.mxu0 0
      %693 = vmatprep.subr.bf16.mxu0 0
      %694 = vmatpush2.bf16.xpose.msra.mxu0 0
      %695 = vmatprep.subr.bf16.mxu0 0
      %696 = vmatpush2.bf16.xpose.msra.mxu0 0
      %697 = vmatprep.subr.bf16.mxu0 0
      %698 = vmatpush2.bf16.xpose.msra.mxu0 0
      %699 = vmatprep.subr.bf16.mxu0 0
      %700 = vmatpush2.bf16.xpose.msra.mxu0 0
      %701 = vmatprep.subr.bf16.mxu0 0
      %702 = vmatpush2.bf16.xpose.msra.mxu0 0
      %703 = vmatprep.subr.bf16.mxu0 0
      %704 = vmatpush2.bf16.xpose.msra.mxu0 0
      %705 = vmatprep.subr.bf16.mxu0 0
      %706 = vmatpush2.bf16.xpose.msra.mxu0 0
      %707 = vmatprep.mubr.bf16.mxu0 0
      %708 = vmatmul.mubr.bf16.gmra.mxu0 %v661
      %v709 = vpop.f32.mrf.mxu0
      %v710 = vadd.f32 0.0, %v709
      %v711 = vpop.f32.mrf.mxu0
      %v712 = vpop.f32.mrf.mxu0
      %v713 = vadd.f32 0.0, %v712
      %v714 = vpop.f32.mrf.mxu0
      %715 = vdwg.mxu0
      %v718 = vunpack.c.l.b16 %v261
      %v719 = vunpack.c.l.b16 %v262
      %v720 = vpack.c.b16 %v719, %v718
      %v729 = vunpack.c.l.b16 %v305
      %v730 = vunpack.c.l.b16 %v306
      %v731 = vunpack.c.l.b16 %v307
      %v732 = vunpack.c.l.b16 %v308
      %v733 = vunpack.c.l.b16 %v309
      %v734 = vunpack.c.l.b16 %v310
      %v735 = vunpack.c.l.b16 %v311
      %v736 = vunpack.c.l.b16 %v312
      %v737 = vpack.c.b16 %v730, %v729
      %v738 = vpack.c.b16 %v732, %v731
      %v739 = vpack.c.b16 %v734, %v733
      %v740 = vpack.c.b16 %v736, %v735
      %v742 = vsel %vm578, %v720, 0
      %v745 = vsel %vm578, %v737, 0
      %v748 = vsel %vm578, %v738, 0
      %v751 = vsel %vm578, %v739, 0
      %v754 = vsel %vm578, %v740, 0
      %756 = vmatprep.subr.bf16.mxu0 0
      %757 = vmatpush1.bf16.xpose.msra.mxu0 0
      %758 = vmatprep.subr.bf16.mxu0 0
      %759 = vmatpush1.bf16.xpose.msra.mxu0 0
      %760 = vmatprep.subr.bf16.mxu0 0
      %761 = vmatpush1.bf16.xpose.msra.mxu0 0
      %762 = vmatprep.subr.bf16.mxu0 0
      %763 = vmatpush1.bf16.xpose.msra.mxu0 0
      %764 = vmatprep.subr.bf16.mxu0 0
      %765 = vmatpush1.bf16.xpose.msra.mxu0 %v754
      %766 = vmatprep.subr.bf16.mxu0 0
      %767 = vmatpush1.bf16.xpose.msra.mxu0 %v751
      %768 = vmatprep.subr.bf16.mxu0 0
      %769 = vmatpush1.bf16.xpose.msra.mxu0 %v748
      %770 = vmatprep.subr.bf16.mxu0 0
      %771 = vmatpush1.bf16.xpose.msra.mxu0 %v745
      %772 = vmatprep.subr.bf16.mxu0 0
      %773 = vmatpush2.bf16.xpose.msra.mxu0 0
      %774 = vmatprep.subr.bf16.mxu0 0
      %775 = vmatpush2.bf16.xpose.msra.mxu0 0
      %776 = vmatprep.subr.bf16.mxu0 0
      %777 = vmatpush2.bf16.xpose.msra.mxu0 0
      %778 = vmatprep.subr.bf16.mxu0 0
      %779 = vmatpush2.bf16.xpose.msra.mxu0 0
      %780 = vmatprep.subr.bf16.mxu0 0
      %781 = vmatpush2.bf16.xpose.msra.mxu0 0
      %782 = vmatprep.subr.bf16.mxu0 0
      %783 = vmatpush2.bf16.xpose.msra.mxu0 0
      %784 = vmatprep.subr.bf16.mxu0 0
      %785 = vmatpush2.bf16.xpose.msra.mxu0 0
      %786 = vmatprep.subr.bf16.mxu0 0
      %787 = vmatpush2.bf16.xpose.msra.mxu0 0
      %788 = vmatprep.mubr.bf16.mxu0 0
      %789 = vmatmul.mubr.bf16.gmra.mxu0 %v742
      %v790 = vpop.f32.mrf.mxu0
      %v791 = vadd.f32 0.0, %v790
      %v792 = vpop.f32.mrf.mxu0
      %v793 = vpop.f32.mrf.mxu0
      %v794 = vadd.f32 0.0, %v793
      %v795 = vpop.f32.mrf.mxu0
      %796 = vdwg.mxu0
      %v799 = vunpack.c.l.b16 %v263
      %v800 = vunpack.c.l.b16 %v264
      %v801 = vpack.c.b16 %v800, %v799
      %v810 = vunpack.c.l.b16 %v313
      %v811 = vunpack.c.l.b16 %v314
      %v812 = vunpack.c.l.b16 %v315
      %v813 = vunpack.c.l.b16 %v316
      %v814 = vunpack.c.l.b16 %v317
      %v815 = vunpack.c.l.b16 %v318
      %v816 = vunpack.c.l.b16 %v319
      %v817 = vunpack.c.l.b16 %v320
      %v818 = vpack.c.b16 %v811, %v810
      %v819 = vpack.c.b16 %v813, %v812
      %v820 = vpack.c.b16 %v815, %v814
      %v821 = vpack.c.b16 %v817, %v816
      %v823 = vsel %vm578, %v801, 0
      %v826 = vsel %vm578, %v818, 0
      %v829 = vsel %vm578, %v819, 0
      %v832 = vsel %vm578, %v820, 0
      %v835 = vsel %vm578, %v821, 0
      %837 = vmatprep.subr.bf16.mxu0 0
      %838 = vmatpush1.bf16.xpose.msra.mxu0 0
      %839 = vmatprep.subr.bf16.mxu0 0
      %840 = vmatpush1.bf16.xpose.msra.mxu0 0
      %841 = vmatprep.subr.bf16.mxu0 0
      %842 = vmatpush1.bf16.xpose.msra.mxu0 0
      %843 = vmatprep.subr.bf16.mxu0 0
      %844 = vmatpush1.bf16.xpose.msra.mxu0 0
      %845 = vmatprep.subr.bf16.mxu0 0
      %846 = vmatpush1.bf16.xpose.msra.mxu0 %v835
      %847 = vmatprep.subr.bf16.mxu0 0
      %848 = vmatpush1.bf16.xpose.msra.mxu0 %v832
      %849 = vmatprep.subr.bf16.mxu0 0
      %850 = vmatpush1.bf16.xpose.msra.mxu0 %v829
      %851 = vmatprep.subr.bf16.mxu0 0
      %852 = vmatpush1.bf16.xpose.msra.mxu0 %v826
      %853 = vmatprep.subr.bf16.mxu0 0
      %854 = vmatpush2.bf16.xpose.msra.mxu0 0
      %855 = vmatprep.subr.bf16.mxu0 0
      %856 = vmatpush2.bf16.xpose.msra.mxu0 0
      %857 = vmatprep.subr.bf16.mxu0 0
      %858 = vmatpush2.bf16.xpose.msra.mxu0 0
      %859 = vmatprep.subr.bf16.mxu0 0
      %860 = vmatpush2.bf16.xpose.msra.mxu0 0
      %861 = vmatprep.subr.bf16.mxu0 0
      %862 = vmatpush2.bf16.xpose.msra.mxu0 0
      %863 = vmatprep.subr.bf16.mxu0 0
      %864 = vmatpush2.bf16.xpose.msra.mxu0 0
      %865 = vmatprep.subr.bf16.mxu0 0
      %866 = vmatpush2.bf16.xpose.msra.mxu0 0
      %867 = vmatprep.subr.bf16.mxu0 0
      %868 = vmatpush2.bf16.xpose.msra.mxu0 0
      %869 = vmatprep.mubr.bf16.mxu0 0
      %870 = vmatmul.mubr.bf16.gmra.mxu0 %v823
      %v871 = vpop.f32.mrf.mxu0
      %v872 = vadd.f32 0.0, %v871
      %v873 = vpop.f32.mrf.mxu0
      %v874 = vpop.f32.mrf.mxu0
      %v875 = vadd.f32 0.0, %v874
      %v876 = vpop.f32.mrf.mxu0
      %877 = vdwg.mxu0
      %v880 = vunpack.c.l.b16 %v265
      %v881 = vunpack.c.l.b16 %v266
      %v882 = vpack.c.b16 %v881, %v880
      %v891 = vunpack.c.l.b16 %v321
      %v892 = vunpack.c.l.b16 %v322
      %v893 = vunpack.c.l.b16 %v323
      %v894 = vunpack.c.l.b16 %v324
      %v895 = vunpack.c.l.b16 %v325
      %v896 = vunpack.c.l.b16 %v326
      %v897 = vunpack.c.l.b16 %v327
      %v898 = vunpack.c.l.b16 %v328
      %v899 = vpack.c.b16 %v892, %v891
      %v900 = vpack.c.b16 %v894, %v893
      %v901 = vpack.c.b16 %v896, %v895
      %v902 = vpack.c.b16 %v898, %v897
      %v904 = vsel %vm578, %v882, 0
      %v907 = vsel %vm578, %v899, 0
      %v910 = vsel %vm578, %v900, 0
      %v913 = vsel %vm578, %v901, 0
      %v916 = vsel %vm578, %v902, 0
      %918 = vmatprep.subr.bf16.mxu0 0
      %919 = vmatpush1.bf16.xpose.msra.mxu0 0
      %920 = vmatprep.subr.bf16.mxu0 0
      %921 = vmatpush1.bf16.xpose.msra.mxu0 0
      %922 = vmatprep.subr.bf16.mxu0 0
      %923 = vmatpush1.bf16.xpose.msra.mxu0 0
      %924 = vmatprep.subr.bf16.mxu0 0
      %925 = vmatpush1.bf16.xpose.msra.mxu0 0
      %926 = vmatprep.subr.bf16.mxu0 0
      %927 = vmatpush1.bf16.xpose.msra.mxu0 %v916
      %928 = vmatprep.subr.bf16.mxu0 0
      %929 = vmatpush1.bf16.xpose.msra.mxu0 %v913
      %930 = vmatprep.subr.bf16.mxu0 0
      %931 = vmatpush1.bf16.xpose.msra.mxu0 %v910
      %932 = vmatprep.subr.bf16.mxu0 0
      %933 = vmatpush1.bf16.xpose.msra.mxu0 %v907
      %934 = vmatprep.subr.bf16.mxu0 0
      %935 = vmatpush2.bf16.xpose.msra.mxu0 0
      %936 = vmatprep.subr.bf16.mxu0 0
      %937 = vmatpush2.bf16.xpose.msra.mxu0 0
      %938 = vmatprep.subr.bf16.mxu0 0
      %939 = vmatpush2.bf16.xpose.msra.mxu0 0
      %940 = vmatprep.subr.bf16.mxu0 0
      %941 = vmatpush2.bf16.xpose.msra.mxu0 0
      %942 = vmatprep.subr.bf16.mxu0 0
      %943 = vmatpush2.bf16.xpose.msra.mxu0 0
      %944 = vmatprep.subr.bf16.mxu0 0
      %945 = vmatpush2.bf16.xpose.msra.mxu0 0
      %946 = vmatprep.subr.bf16.mxu0 0
      %947 = vmatpush2.bf16.xpose.msra.mxu0 0
      %948 = vmatprep.subr.bf16.mxu0 0
      %949 = vmatpush2.bf16.xpose.msra.mxu0 0
      %950 = vmatprep.mubr.bf16.mxu0 0
      %951 = vmatmul.mubr.bf16.gmra.mxu0 %v904
      %v952 = vpop.f32.mrf.mxu0
      %v953 = vadd.f32 0.0, %v952
      %v954 = vpop.f32.mrf.mxu0
      %v955 = vpop.f32.mrf.mxu0
      %v956 = vadd.f32 0.0, %v955
      %v957 = vpop.f32.mrf.mxu0
      %958 = vdwg.mxu0
      %v961 = vunpack.c.l.b16 %v267
      %v962 = vunpack.c.l.b16 %v268
      %v963 = vpack.c.b16 %v962, %v961
      %v972 = vunpack.c.l.b16 %v329
      %v973 = vunpack.c.l.b16 %v330
      %v974 = vunpack.c.l.b16 %v331
      %v975 = vunpack.c.l.b16 %v332
      %v976 = vunpack.c.l.b16 %v333
      %v977 = vunpack.c.l.b16 %v334
      %v978 = vunpack.c.l.b16 %v335
      %v979 = vunpack.c.l.b16 %v336
      %v980 = vpack.c.b16 %v973, %v972
      %v981 = vpack.c.b16 %v975, %v974
      %v982 = vpack.c.b16 %v977, %v976
      %v983 = vpack.c.b16 %v979, %v978
      %v985 = vsel %vm578, %v963, 0
      %v988 = vsel %vm578, %v980, 0
      %v991 = vsel %vm578, %v981, 0
      %v994 = vsel %vm578, %v982, 0
      %v997 = vsel %vm578, %v983, 0
      %999 = vmatprep.subr.bf16.mxu0 0
      %1000 = vmatpush1.bf16.xpose.msra.mxu0 0
      %1001 = vmatprep.subr.bf16.mxu0 0
      %1002 = vmatpush1.bf16.xpose.msra.mxu0 0
      %1003 = vmatprep.subr.bf16.mxu0 0
      %1004 = vmatpush1.bf16.xpose.msra.mxu0 0
      %1005 = vmatprep.subr.bf16.mxu0 0
      %1006 = vmatpush1.bf16.xpose.msra.mxu0 0
      %1007 = vmatprep.subr.bf16.mxu0 0
      %1008 = vmatpush1.bf16.xpose.msra.mxu0 %v997
      %1009 = vmatprep.subr.bf16.mxu0 0
      %1010 = vmatpush1.bf16.xpose.msra.mxu0 %v994
      %1011 = vmatprep.subr.bf16.mxu0 0
      %1012 = vmatpush1.bf16.xpose.msra.mxu0 %v991
      %1013 = vmatprep.subr.bf16.mxu0 0
      %1014 = vmatpush1.bf16.xpose.msra.mxu0 %v988
      %1015 = vmatprep.subr.bf16.mxu0 0
      %1016 = vmatpush2.bf16.xpose.msra.mxu0 0
      %1017 = vmatprep.subr.bf16.mxu0 0
      %1018 = vmatpush2.bf16.xpose.msra.mxu0 0
      %1019 = vmatprep.subr.bf16.mxu0 0
      %1020 = vmatpush2.bf16.xpose.msra.mxu0 0
      %1021 = vmatprep.subr.bf16.mxu0 0
      %1022 = vmatpush2.bf16.xpose.msra.mxu0 0
      %1023 = vmatprep.subr.bf16.mxu0 0
      %1024 = vmatpush2.bf16.xpose.msra.mxu0 0
      %1025 = vmatprep.subr.bf16.mxu0 0
      %1026 = vmatpush2.bf16.xpose.msra.mxu0 0
      %1027 = vmatprep.subr.bf16.mxu0 0
      %1028 = vmatpush2.bf16.xpose.msra.mxu0 0
      %1029 = vmatprep.subr.bf16.mxu0 0
      %1030 = vmatpush2.bf16.xpose.msra.mxu0 0
      %1031 = vmatprep.mubr.bf16.mxu0 0
      %1032 = vmatmul.mubr.bf16.gmra.mxu0 %v985
      %v1033 = vpop.f32.mrf.mxu0
      %v1034 = vadd.f32 0.0, %v1033
      %v1035 = vpop.f32.mrf.mxu0
      %v1036 = vpop.f32.mrf.mxu0
      %v1037 = vadd.f32 0.0, %v1036
      %v1038 = vpop.f32.mrf.mxu0
      %1039 = vdwg.mxu0
      %v1042 = vunpack.c.l.b16 %v269
      %v1043 = vunpack.c.l.b16 %v270
      %v1044 = vpack.c.b16 %v1043, %v1042
      %v1053 = vunpack.c.l.b16 %v337
      %v1054 = vunpack.c.l.b16 %v338
      %v1055 = vunpack.c.l.b16 %v339
      %v1056 = vunpack.c.l.b16 %v340
      %v1057 = vunpack.c.l.b16 %v341
      %v1058 = vunpack.c.l.b16 %v342
      %v1059 = vunpack.c.l.b16 %v343
      %v1060 = vunpack.c.l.b16 %v344
      %v1061 = vpack.c.b16 %v1054, %v1053
      %v1062 = vpack.c.b16 %v1056, %v1055
      %v1063 = vpack.c.b16 %v1058, %v1057
      %v1064 = vpack.c.b16 %v1060, %v1059
      %v1066 = vsel %vm578, %v1044, 0
      %v1069 = vsel %vm578, %v1061, 0
      %v1072 = vsel %vm578, %v1062, 0
      %v1075 = vsel %vm578, %v1063, 0
      %v1078 = vsel %vm578, %v1064, 0
      %1080 = vmatprep.subr.bf16.mxu0 0
      %1081 = vmatpush1.bf16.xpose.msra.mxu0 0
      %1082 = vmatprep.subr.bf16.mxu0 0
      %1083 = vmatpush1.bf16.xpose.msra.mxu0 0
      %1084 = vmatprep.subr.bf16.mxu0 0
      %1085 = vmatpush1.bf16.xpose.msra.mxu0 0
      %1086 = vmatprep.subr.bf16.mxu0 0
      %1087 = vmatpush1.bf16.xpose.msra.mxu0 0
      %1088 = vmatprep.subr.bf16.mxu0 0
      %1089 = vmatpush1.bf16.xpose.msra.mxu0 %v1078
      %1090 = vmatprep.subr.bf16.mxu0 0
      %1091 = vmatpush1.bf16.xpose.msra.mxu0 %v1075
      %1092 = vmatprep.subr.bf16.mxu0 0
      %1093 = vmatpush1.bf16.xpose.msra.mxu0 %v1072
      %1094 = vmatprep.subr.bf16.mxu0 0
      %1095 = vmatpush1.bf16.xpose.msra.mxu0 %v1069
      %1096 = vmatprep.subr.bf16.mxu0 0
      %1097 = vmatpush2.bf16.xpose.msra.mxu0 0
      %1098 = vmatprep.subr.bf16.mxu0 0
      %1099 = vmatpush2.bf16.xpose.msra.mxu0 0
      %1100 = vmatprep.subr.bf16.mxu0 0
      %1101 = vmatpush2.bf16.xpose.msra.mxu0 0
      %1102 = vmatprep.subr.bf16.mxu0 0
      %1103 = vmatpush2.bf16.xpose.msra.mxu0 0
      %1104 = vmatprep.subr.bf16.mxu0 0
      %1105 = vmatpush2.bf16.xpose.msra.mxu0 0
      %1106 = vmatprep.subr.bf16.mxu0 0
      %1107 = vmatpush2.bf16.xpose.msra.mxu0 0
      %1108 = vmatprep.subr.bf16.mxu0 0
      %1109 = vmatpush2.bf16.xpose.msra.mxu0 0
      %1110 = vmatprep.subr.bf16.mxu0 0
      %1111 = vmatpush2.bf16.xpose.msra.mxu0 0
      %1112 = vmatprep.mubr.bf16.mxu0 0
      %1113 = vmatmul.mubr.bf16.gmra.mxu0 %v1066
      %v1114 = vpop.f32.mrf.mxu0
      %v1115 = vadd.f32 0.0, %v1114
      %v1116 = vpop.f32.mrf.mxu0
      %v1117 = vpop.f32.mrf.mxu0
      %v1118 = vadd.f32 0.0, %v1117
      %v1119 = vpop.f32.mrf.mxu0
      %1120 = vdwg.mxu0
      %v1123 = vunpack.c.l.b16 %v271
      %v1124 = vunpack.c.l.b16 %v272
      %v1125 = vpack.c.b16 %v1124, %v1123
      %v1134 = vunpack.c.l.b16 %v345
      %v1135 = vunpack.c.l.b16 %v346
      %v1136 = vunpack.c.l.b16 %v347
      %v1137 = vunpack.c.l.b16 %v348
      %v1138 = vunpack.c.l.b16 %v349
      %v1139 = vunpack.c.l.b16 %v350
      %v1140 = vunpack.c.l.b16 %v351
      %v1141 = vunpack.c.l.b16 %v352
      %v1142 = vpack.c.b16 %v1135, %v1134
      %v1143 = vpack.c.b16 %v1137, %v1136
      %v1144 = vpack.c.b16 %v1139, %v1138
      %v1145 = vpack.c.b16 %v1141, %v1140
      %v1147 = vsel %vm578, %v1125, 0
      %v1150 = vsel %vm578, %v1142, 0
      %v1153 = vsel %vm578, %v1143, 0
      %v1156 = vsel %vm578, %v1144, 0
      %v1159 = vsel %vm578, %v1145, 0
      %1161 = vmatprep.subr.bf16.mxu0 0
      %1162 = vmatpush1.bf16.xpose.msra.mxu0 0
      %1163 = vmatprep.subr.bf16.mxu0 0
      %1164 = vmatpush1.bf16.xpose.msra.mxu0 0
      %1165 = vmatprep.subr.bf16.mxu0 0
      %1166 = vmatpush1.bf16.xpose.msra.mxu0 0
      %1167 = vmatprep.subr.bf16.mxu0 0
      %1168 = vmatpush1.bf16.xpose.msra.mxu0 0
      %1169 = vmatprep.subr.bf16.mxu0 0
      %1170 = vmatpush1.bf16.xpose.msra.mxu0 %v1159
      %1171 = vmatprep.subr.bf16.mxu0 0
      %1172 = vmatpush1.bf16.xpose.msra.mxu0 %v1156
      %1173 = vmatprep.subr.bf16.mxu0 0
      %1174 = vmatpush1.bf16.xpose.msra.mxu0 %v1153
      %1175 = vmatprep.subr.bf16.mxu0 0
      %1176 = vmatpush1.bf16.xpose.msra.mxu0 %v1150
      %1177 = vmatprep.subr.bf16.mxu0 0
      %1178 = vmatpush2.bf16.xpose.msra.mxu0 0
      %1179 = vmatprep.subr.bf16.mxu0 0
      %1180 = vmatpush2.bf16.xpose.msra.mxu0 0
      %1181 = vmatprep.subr.bf16.mxu0 0
      %1182 = vmatpush2.bf16.xpose.msra.mxu0 0
      %1183 = vmatprep.subr.bf16.mxu0 0
      %1184 = vmatpush2.bf16.xpose.msra.mxu0 0
      %1185 = vmatprep.subr.bf16.mxu0 0
      %1186 = vmatpush2.bf16.xpose.msra.mxu0 0
      %1187 = vmatprep.subr.bf16.mxu0 0
      %1188 = vmatpush2.bf16.xpose.msra.mxu0 0
      %1189 = vmatprep.subr.bf16.mxu0 0
      %1190 = vmatpush2.bf16.xpose.msra.mxu0 0
      %1191 = vmatprep.subr.bf16.mxu0 0
      %1192 = vmatpush2.bf16.xpose.msra.mxu0 0
      %1193 = vmatprep.mubr.bf16.mxu0 0
      %1194 = vmatmul.mubr.bf16.gmra.mxu0 %v1147
      %v1195 = vpop.f32.mrf.mxu0
      %v1196 = vadd.f32 0.0, %v1195
      %v1197 = vpop.f32.mrf.mxu0
      %v1198 = vpop.f32.mrf.mxu0
      %v1199 = vadd.f32 0.0, %v1198
      %v1200 = vpop.f32.mrf.mxu0
      %1201 = vdwg.mxu0
      %v1204 = vunpack.c.l.b16 %v273
      %v1205 = vunpack.c.l.b16 %v274
      %v1206 = vpack.c.b16 %v1205, %v1204
      %v1215 = vunpack.c.l.b16 %v353
      %v1216 = vunpack.c.l.b16 %v354
      %v1217 = vunpack.c.l.b16 %v355
      %v1218 = vunpack.c.l.b16 %v356
      %v1219 = vunpack.c.l.b16 %v357
      %v1220 = vunpack.c.l.b16 %v358
      %v1221 = vunpack.c.l.b16 %v359
      %v1222 = vunpack.c.l.b16 %v360
      %v1223 = vpack.c.b16 %v1216, %v1215
      %v1224 = vpack.c.b16 %v1218, %v1217
      %v1225 = vpack.c.b16 %v1220, %v1219
      %v1226 = vpack.c.b16 %v1222, %v1221
      %v1228 = vsel %vm578, %v1206, 0
      %v1231 = vsel %vm578, %v1223, 0
      %v1234 = vsel %vm578, %v1224, 0
      %v1237 = vsel %vm578, %v1225, 0
      %v1240 = vsel %vm578, %v1226, 0
      %1242 = vmatprep.subr.bf16.mxu0 0
      %1243 = vmatpush1.bf16.xpose.msra.mxu0 0
      %1244 = vmatprep.subr.bf16.mxu0 0
      %1245 = vmatpush1.bf16.xpose.msra.mxu0 0
      %1246 = vmatprep.subr.bf16.mxu0 0
      %1247 = vmatpush1.bf16.xpose.msra.mxu0 0
      %1248 = vmatprep.subr.bf16.mxu0 0
      %1249 = vmatpush1.bf16.xpose.msra.mxu0 0
      %1250 = vmatprep.subr.bf16.mxu0 0
      %1251 = vmatpush1.bf16.xpose.msra.mxu0 %v1240
      %1252 = vmatprep.subr.bf16.mxu0 0
      %1253 = vmatpush1.bf16.xpose.msra.mxu0 %v1237
      %1254 = vmatprep.subr.bf16.mxu0 0
      %1255 = vmatpush1.bf16.xpose.msra.mxu0 %v1234
      %1256 = vmatprep.subr.bf16.mxu0 0
      %1257 = vmatpush1.bf16.xpose.msra.mxu0 %v1231
      %1258 = vmatprep.subr.bf16.mxu0 0
      %1259 = vmatpush2.bf16.xpose.msra.mxu0 0
      %1260 = vmatprep.subr.bf16.mxu0 0
      %1261 = vmatpush2.bf16.xpose.msra.mxu0 0
      %1262 = vmatprep.subr.bf16.mxu0 0
      %1263 = vmatpush2.bf16.xpose.msra.mxu0 0
      %1264 = vmatprep.subr.bf16.mxu0 0
      %1265 = vmatpush2.bf16.xpose.msra.mxu0 0
      %1266 = vmatprep.subr.bf16.mxu0 0
      %1267 = vmatpush2.bf16.xpose.msra.mxu0 0
      %1268 = vmatprep.subr.bf16.mxu0 0
      %1269 = vmatpush2.bf16.xpose.msra.mxu0 0
      %1270 = vmatprep.subr.bf16.mxu0 0
      %1271 = vmatpush2.bf16.xpose.msra.mxu0 0
      %1272 = vmatprep.subr.bf16.mxu0 0
      %1273 = vmatpush2.bf16.xpose.msra.mxu0 0
      %1274 = vmatprep.mubr.bf16.mxu0 0
      %1275 = vmatmul.mubr.bf16.gmra.mxu0 %v1228
      %v1276 = vpop.f32.mrf.mxu0
      %v1277 = vadd.f32 0.0, %v1276
      %v1278 = vpop.f32.mrf.mxu0
      %v1279 = vpop.f32.mrf.mxu0
      %v1280 = vadd.f32 0.0, %v1279
      %v1281 = vpop.f32.mrf.mxu0
      %1282 = vdwg.mxu0
      %v1285 = vunpack.c.l.b16 %v275
      %v1286 = vunpack.c.l.b16 %v276
      %v1287 = vpack.c.b16 %v1286, %v1285
      %v1296 = vunpack.c.l.b16 %v361
      %v1297 = vunpack.c.l.b16 %v362
      %v1298 = vunpack.c.l.b16 %v363
      %v1299 = vunpack.c.l.b16 %v364
      %v1300 = vunpack.c.l.b16 %v365
      %v1301 = vunpack.c.l.b16 %v366
      %v1302 = vunpack.c.l.b16 %v367
      %v1303 = vunpack.c.l.b16 %v368
      %v1304 = vpack.c.b16 %v1297, %v1296
      %v1305 = vpack.c.b16 %v1299, %v1298
      %v1306 = vpack.c.b16 %v1301, %v1300
      %v1307 = vpack.c.b16 %v1303, %v1302
      %v1309 = vsel %vm578, %v1287, 0
      %v1312 = vsel %vm578, %v1304, 0
      %v1315 = vsel %vm578, %v1305, 0
      %v1318 = vsel %vm578, %v1306, 0
      %v1321 = vsel %vm578, %v1307, 0
      %1323 = vmatprep.subr.bf16.mxu0 0
      %1324 = vmatpush1.bf16.xpose.msra.mxu0 0
      %1325 = vmatprep.subr.bf16.mxu0 0
      %1326 = vmatpush1.bf16.xpose.msra.mxu0 0
      %1327 = vmatprep.subr.bf16.mxu0 0
      %1328 = vmatpush1.bf16.xpose.msra.mxu0 0
      %1329 = vmatprep.subr.bf16.mxu0 0
      %1330 = vmatpush1.bf16.xpose.msra.mxu0 0
      %1331 = vmatprep.subr.bf16.mxu0 0
      %1332 = vmatpush1.bf16.xpose.msra.mxu0 %v1321
      %1333 = vmatprep.subr.bf16.mxu0 0
      %1334 = vmatpush1.bf16.xpose.msra.mxu0 %v1318
      %1335 = vmatprep.subr.bf16.mxu0 0
      %1336 = vmatpush1.bf16.xpose.msra.mxu0 %v1315
      %1337 = vmatprep.subr.bf16.mxu0 0
      %1338 = vmatpush1.bf16.xpose.msra.mxu0 %v1312
      %1339 = vmatprep.subr.bf16.mxu0 0
      %1340 = vmatpush2.bf16.xpose.msra.mxu0 0
      %1341 = vmatprep.subr.bf16.mxu0 0
      %1342 = vmatpush2.bf16.xpose.msra.mxu0 0
      %1343 = vmatprep.subr.bf16.mxu0 0
      %1344 = vmatpush2.bf16.xpose.msra.mxu0 0
      %1345 = vmatprep.subr.bf16.mxu0 0
      %1346 = vmatpush2.bf16.xpose.msra.mxu0 0
      %1347 = vmatprep.subr.bf16.mxu0 0
      %1348 = vmatpush2.bf16.xpose.msra.mxu0 0
      %1349 = vmatprep.subr.bf16.mxu0 0
      %1350 = vmatpush2.bf16.xpose.msra.mxu0 0
      %1351 = vmatprep.subr.bf16.mxu0 0
      %1352 = vmatpush2.bf16.xpose.msra.mxu0 0
      %1353 = vmatprep.subr.bf16.mxu0 0
      %1354 = vmatpush2.bf16.xpose.msra.mxu0 0
      %1355 = vmatprep.mubr.bf16.mxu0 0
      %1356 = vmatmul.mubr.bf16.gmra.mxu0 %v1309
      %v1357 = vpop.f32.mrf.mxu0
      %v1358 = vadd.f32 0.0, %v1357
      %v1359 = vpop.f32.mrf.mxu0
      %v1360 = vpop.f32.mrf.mxu0
      %v1361 = vadd.f32 0.0, %v1360
      %v1362 = vpop.f32.mrf.mxu0
      %1363 = vdwg.mxu0
      %v1366 = vunpack.c.l.b16 %v277
      %v1367 = vunpack.c.l.b16 %v278
      %v1368 = vpack.c.b16 %v1367, %v1366
      %v1377 = vunpack.c.l.b16 %v369
      %v1378 = vunpack.c.l.b16 %v370
      %v1379 = vunpack.c.l.b16 %v371
      %v1380 = vunpack.c.l.b16 %v372
      %v1381 = vunpack.c.l.b16 %v373
      %v1382 = vunpack.c.l.b16 %v374
      %v1383 = vunpack.c.l.b16 %v375
      %v1384 = vunpack.c.l.b16 %v376
      %v1385 = vpack.c.b16 %v1378, %v1377
      %v1386 = vpack.c.b16 %v1380, %v1379
      %v1387 = vpack.c.b16 %v1382, %v1381
      %v1388 = vpack.c.b16 %v1384, %v1383
      %v1390 = vsel %vm578, %v1368, 0
      %v1393 = vsel %vm578, %v1385, 0
      %v1396 = vsel %vm578, %v1386, 0
      %v1399 = vsel %vm578, %v1387, 0
      %v1402 = vsel %vm578, %v1388, 0
      %1404 = vmatprep.subr.bf16.mxu0 0
      %1405 = vmatpush1.bf16.xpose.msra.mxu0 0
      %1406 = vmatprep.subr.bf16.mxu0 0
      %1407 = vmatpush1.bf16.xpose.msra.mxu0 0
      %1408 = vmatprep.subr.bf16.mxu0 0
      %1409 = vmatpush1.bf16.xpose.msra.mxu0 0
      %1410 = vmatprep.subr.bf16.mxu0 0
      %1411 = vmatpush1.bf16.xpose.msra.mxu0 0
      %1412 = vmatprep.subr.bf16.mxu0 0
      %1413 = vmatpush1.bf16.xpose.msra.mxu0 %v1402
      %1414 = vmatprep.subr.bf16.mxu0 0
      %1415 = vmatpush1.bf16.xpose.msra.mxu0 %v1399
      %1416 = vmatprep.subr.bf16.mxu0 0
      %1417 = vmatpush1.bf16.xpose.msra.mxu0 %v1396
      %1418 = vmatprep.subr.bf16.mxu0 0
      %1419 = vmatpush1.bf16.xpose.msra.mxu0 %v1393
      %1420 = vmatprep.subr.bf16.mxu0 0
      %1421 = vmatpush2.bf16.xpose.msra.mxu0 0
      %1422 = vmatprep.subr.bf16.mxu0 0
      %1423 = vmatpush2.bf16.xpose.msra.mxu0 0
      %1424 = vmatprep.subr.bf16.mxu0 0
      %1425 = vmatpush2.bf16.xpose.msra.mxu0 0
      %1426 = vmatprep.subr.bf16.mxu0 0
      %1427 = vmatpush2.bf16.xpose.msra.mxu0 0
      %1428 = vmatprep.subr.bf16.mxu0 0
      %1429 = vmatpush2.bf16.xpose.msra.mxu0 0
      %1430 = vmatprep.subr.bf16.mxu0 0
      %1431 = vmatpush2.bf16.xpose.msra.mxu0 0
      %1432 = vmatprep.subr.bf16.mxu0 0
      %1433 = vmatpush2.bf16.xpose.msra.mxu0 0
      %1434 = vmatprep.subr.bf16.mxu0 0
      %1435 = vmatpush2.bf16.xpose.msra.mxu0 0
      %1436 = vmatprep.mubr.bf16.mxu0 0
      %1437 = vmatmul.mubr.bf16.gmra.mxu0 %v1390
      %v1438 = vpop.f32.mrf.mxu0
      %v1439 = vadd.f32 0.0, %v1438
      %v1440 = vpop.f32.mrf.mxu0
      %v1441 = vpop.f32.mrf.mxu0
      %v1442 = vadd.f32 0.0, %v1441
      %v1443 = vpop.f32.mrf.mxu0
      %1444 = vdwg.mxu0
      %v1447 = vunpack.c.l.b16 %v279
      %v1448 = vunpack.c.l.b16 %v280
      %v1449 = vpack.c.b16 %v1448, %v1447
      %v1458 = vunpack.c.l.b16 %v377
      %v1459 = vunpack.c.l.b16 %v378
      %v1460 = vunpack.c.l.b16 %v379
      %v1461 = vunpack.c.l.b16 %v380
      %v1462 = vunpack.c.l.b16 %v381
      %v1463 = vunpack.c.l.b16 %v382
      %v1464 = vunpack.c.l.b16 %v383
      %v1465 = vunpack.c.l.b16 %v384
      %v1466 = vpack.c.b16 %v1459, %v1458
      %v1467 = vpack.c.b16 %v1461, %v1460
      %v1468 = vpack.c.b16 %v1463, %v1462
      %v1469 = vpack.c.b16 %v1465, %v1464
      %v1471 = vsel %vm578, %v1449, 0
      %v1474 = vsel %vm578, %v1466, 0
      %v1477 = vsel %vm578, %v1467, 0
      %v1480 = vsel %vm578, %v1468, 0
      %v1483 = vsel %vm578, %v1469, 0
      %1485 = vmatprep.subr.bf16.mxu0 0
      %1486 = vmatpush1.bf16.xpose.msra.mxu0 0
      %1487 = vmatprep.subr.bf16.mxu0 0
      %1488 = vmatpush1.bf16.xpose.msra.mxu0 0
      %1489 = vmatprep.subr.bf16.mxu0 0
      %1490 = vmatpush1.bf16.xpose.msra.mxu0 0
      %1491 = vmatprep.subr.bf16.mxu0 0
      %1492 = vmatpush1.bf16.xpose.msra.mxu0 0
      %1493 = vmatprep.subr.bf16.mxu0 0
      %1494 = vmatpush1.bf16.xpose.msra.mxu0 %v1483
      %1495 = vmatprep.subr.bf16.mxu0 0
      %1496 = vmatpush1.bf16.xpose.msra.mxu0 %v1480
      %1497 = vmatprep.subr.bf16.mxu0 0
      %1498 = vmatpush1.bf16.xpose.msra.mxu0 %v1477
      %1499 = vmatprep.subr.bf16.mxu0 0
      %1500 = vmatpush1.bf16.xpose.msra.mxu0 %v1474
      %1501 = vmatprep.subr.bf16.mxu0 0
      %1502 = vmatpush2.bf16.xpose.msra.mxu0 0
      %1503 = vmatprep.subr.bf16.mxu0 0
      %1504 = vmatpush2.bf16.xpose.msra.mxu0 0
      %1505 = vmatprep.subr.bf16.mxu0 0
      %1506 = vmatpush2.bf16.xpose.msra.mxu0 0
      %1507 = vmatprep.subr.bf16.mxu0 0
      %1508 = vmatpush2.bf16.xpose.msra.mxu0 0
      %1509 = vmatprep.subr.bf16.mxu0 0
      %1510 = vmatpush2.bf16.xpose.msra.mxu0 0
      %1511 = vmatprep.subr.bf16.mxu0 0
      %1512 = vmatpush2.bf16.xpose.msra.mxu0 0
      %1513 = vmatprep.subr.bf16.mxu0 0
      %1514 = vmatpush2.bf16.xpose.msra.mxu0 0
      %1515 = vmatprep.subr.bf16.mxu0 0
      %1516 = vmatpush2.bf16.xpose.msra.mxu0 0
      %1517 = vmatprep.mubr.bf16.mxu0 0
      %1518 = vmatmul.mubr.bf16.gmra.mxu0 %v1471
      %v1519 = vpop.f32.mrf.mxu0
      %v1520 = vadd.f32 0.0, %v1519
      %v1521 = vpop.f32.mrf.mxu0
      %v1522 = vpop.f32.mrf.mxu0
      %v1523 = vadd.f32 0.0, %v1522
      %v1524 = vpop.f32.mrf.mxu0
      %1525 = vdwg.mxu0
      %v1528 = vunpack.c.l.b16 %v281
      %v1529 = vunpack.c.l.b16 %v282
      %v1530 = vpack.c.b16 %v1529, %v1528
      %v1539 = vunpack.c.l.b16 %v385
      %v1540 = vunpack.c.l.b16 %v386
      %v1541 = vunpack.c.l.b16 %v387
      %v1542 = vunpack.c.l.b16 %v388
      %v1543 = vunpack.c.l.b16 %v389
      %v1544 = vunpack.c.l.b16 %v390
      %v1545 = vunpack.c.l.b16 %v391
      %v1546 = vunpack.c.l.b16 %v392
      %v1547 = vpack.c.b16 %v1540, %v1539
      %v1548 = vpack.c.b16 %v1542, %v1541
      %v1549 = vpack.c.b16 %v1544, %v1543
      %v1550 = vpack.c.b16 %v1546, %v1545
      %v1552 = vsel %vm578, %v1530, 0
      %v1555 = vsel %vm578, %v1547, 0
      %v1558 = vsel %vm578, %v1548, 0
      %v1561 = vsel %vm578, %v1549, 0
      %v1564 = vsel %vm578, %v1550, 0
      %1566 = vmatprep.subr.bf16.mxu0 0
      %1567 = vmatpush1.bf16.xpose.msra.mxu0 0
      %1568 = vmatprep.subr.bf16.mxu0 0
      %1569 = vmatpush1.bf16.xpose.msra.mxu0 0
      %1570 = vmatprep.subr.bf16.mxu0 0
      %1571 = vmatpush1.bf16.xpose.msra.mxu0 0
      %1572 = vmatprep.subr.bf16.mxu0 0
      %1573 = vmatpush1.bf16.xpose.msra.mxu0 0
      %1574 = vmatprep.subr.bf16.mxu0 0
      %1575 = vmatpush1.bf16.xpose.msra.mxu0 %v1564
      %1576 = vmatprep.subr.bf16.mxu0 0
      %1577 = vmatpush1.bf16.xpose.msra.mxu0 %v1561
      %1578 = vmatprep.subr.bf16.mxu0 0
      %1579 = vmatpush1.bf16.xpose.msra.mxu0 %v1558
      %1580 = vmatprep.subr.bf16.mxu0 0
      %1581 = vmatpush1.bf16.xpose.msra.mxu0 %v1555
      %1582 = vmatprep.subr.bf16.mxu0 0
      %1583 = vmatpush2.bf16.xpose.msra.mxu0 0
      %1584 = vmatprep.subr.bf16.mxu0 0
      %1585 = vmatpush2.bf16.xpose.msra.mxu0 0
      %1586 = vmatprep.subr.bf16.mxu0 0
      %1587 = vmatpush2.bf16.xpose.msra.mxu0 0
      %1588 = vmatprep.subr.bf16.mxu0 0
      %1589 = vmatpush2.bf16.xpose.msra.mxu0 0
      %1590 = vmatprep.subr.bf16.mxu0 0
      %1591 = vmatpush2.bf16.xpose.msra.mxu0 0
      %1592 = vmatprep.subr.bf16.mxu0 0
      %1593 = vmatpush2.bf16.xpose.msra.mxu0 0
      %1594 = vmatprep.subr.bf16.mxu0 0
      %1595 = vmatpush2.bf16.xpose.msra.mxu0 0
      %1596 = vmatprep.subr.bf16.mxu0 0
      %1597 = vmatpush2.bf16.xpose.msra.mxu0 0
      %1598 = vmatprep.mubr.bf16.mxu0 0
      %1599 = vmatmul.mubr.bf16.gmra.mxu0 %v1552
      %v1600 = vpop.f32.mrf.mxu0
      %v1601 = vadd.f32 0.0, %v1600
      %v1602 = vpop.f32.mrf.mxu0
      %v1603 = vpop.f32.mrf.mxu0
      %v1604 = vadd.f32 0.0, %v1603
      %v1605 = vpop.f32.mrf.mxu0
      %1606 = vdwg.mxu0
      %v1609 = vunpack.c.l.b16 %v283
      %v1610 = vunpack.c.l.b16 %v284
      %v1611 = vpack.c.b16 %v1610, %v1609
      %v1620 = vunpack.c.l.b16 %v393
      %v1621 = vunpack.c.l.b16 %v394
      %v1622 = vunpack.c.l.b16 %v395
      %v1623 = vunpack.c.l.b16 %v396
      %v1624 = vunpack.c.l.b16 %v397
      %v1625 = vunpack.c.l.b16 %v398
      %v1626 = vunpack.c.l.b16 %v399
      %v1627 = vunpack.c.l.b16 %v400
      %v1628 = vpack.c.b16 %v1621, %v1620
      %v1629 = vpack.c.b16 %v1623, %v1622
      %v1630 = vpack.c.b16 %v1625, %v1624
      %v1631 = vpack.c.b16 %v1627, %v1626
      %v1633 = vsel %vm578, %v1611, 0
      %v1636 = vsel %vm578, %v1628, 0
      %v1639 = vsel %vm578, %v1629, 0
      %v1642 = vsel %vm578, %v1630, 0
      %v1645 = vsel %vm578, %v1631, 0
      %1647 = vmatprep.subr.bf16.mxu0 0
      %1648 = vmatpush1.bf16.xpose.msra.mxu0 0
      %1649 = vmatprep.subr.bf16.mxu0 0
      %1650 = vmatpush1.bf16.xpose.msra.mxu0 0
      %1651 = vmatprep.subr.bf16.mxu0 0
      %1652 = vmatpush1.bf16.xpose.msra.mxu0 0
      %1653 = vmatprep.subr.bf16.mxu0 0
      %1654 = vmatpush1.bf16.xpose.msra.mxu0 0
      %1655 = vmatprep.subr.bf16.mxu0 0
      %1656 = vmatpush1.bf16.xpose.msra.mxu0 %v1645
      %1657 = vmatprep.subr.bf16.mxu0 0
      %1658 = vmatpush1.bf16.xpose.msra.mxu0 %v1642
      %1659 = vmatprep.subr.bf16.mxu0 0
      %1660 = vmatpush1.bf16.xpose.msra.mxu0 %v1639
      %1661 = vmatprep.subr.bf16.mxu0 0
      %1662 = vmatpush1.bf16.xpose.msra.mxu0 %v1636
      %1663 = vmatprep.subr.bf16.mxu0 0
      %1664 = vmatpush2.bf16.xpose.msra.mxu0 0
      %1665 = vmatprep.subr.bf16.mxu0 0
      %1666 = vmatpush2.bf16.xpose.msra.mxu0 0
      %1667 = vmatprep.subr.bf16.mxu0 0
      %1668 = vmatpush2.bf16.xpose.msra.mxu0 0
      %1669 = vmatprep.subr.bf16.mxu0 0
      %1670 = vmatpush2.bf16.xpose.msra.mxu0 0
      %1671 = vmatprep.subr.bf16.mxu0 0
      %1672 = vmatpush2.bf16.xpose.msra.mxu0 0
      %1673 = vmatprep.subr.bf16.mxu0 0
      %1674 = vmatpush2.bf16.xpose.msra.mxu0 0
      %1675 = vmatprep.subr.bf16.mxu0 0
      %1676 = vmatpush2.bf16.xpose.msra.mxu0 0
      %1677 = vmatprep.subr.bf16.mxu0 0
      %1678 = vmatpush2.bf16.xpose.msra.mxu0 0
      %1679 = vmatprep.mubr.bf16.mxu0 0
      %1680 = vmatmul.mubr.bf16.gmra.mxu0 %v1633
      %v1681 = vpop.f32.mrf.mxu0
      %v1682 = vadd.f32 0.0, %v1681
      %v1683 = vpop.f32.mrf.mxu0
      %v1684 = vpop.f32.mrf.mxu0
      %v1685 = vadd.f32 0.0, %v1684
      %v1686 = vpop.f32.mrf.mxu0
      %1687 = vdwg.mxu0
      %v1690 = vunpack.c.l.b16 %v285
      %v1691 = vunpack.c.l.b16 %v286
      %v1692 = vpack.c.b16 %v1691, %v1690
      %v1701 = vunpack.c.l.b16 %v401
      %v1702 = vunpack.c.l.b16 %v402
      %v1703 = vunpack.c.l.b16 %v403
      %v1704 = vunpack.c.l.b16 %v404
      %v1705 = vunpack.c.l.b16 %v405
      %v1706 = vunpack.c.l.b16 %v406
      %v1707 = vunpack.c.l.b16 %v407
      %v1708 = vunpack.c.l.b16 %v408
      %v1709 = vpack.c.b16 %v1702, %v1701
      %v1710 = vpack.c.b16 %v1704, %v1703
      %v1711 = vpack.c.b16 %v1706, %v1705
      %v1712 = vpack.c.b16 %v1708, %v1707
      %v1714 = vsel %vm578, %v1692, 0
      %v1717 = vsel %vm578, %v1709, 0
      %v1720 = vsel %vm578, %v1710, 0
      %v1723 = vsel %vm578, %v1711, 0
      %v1726 = vsel %vm578, %v1712, 0
      %1728 = vmatprep.subr.bf16.mxu0 0
      %1729 = vmatpush1.bf16.xpose.msra.mxu0 0
      %1730 = vmatprep.subr.bf16.mxu0 0
      %1731 = vmatpush1.bf16.xpose.msra.mxu0 0
      %1732 = vmatprep.subr.bf16.mxu0 0
      %1733 = vmatpush1.bf16.xpose.msra.mxu0 0
      %1734 = vmatprep.subr.bf16.mxu0 0
      %1735 = vmatpush1.bf16.xpose.msra.mxu0 0
      %1736 = vmatprep.subr.bf16.mxu0 0
      %1737 = vmatpush1.bf16.xpose.msra.mxu0 %v1726
      %1738 = vmatprep.subr.bf16.mxu0 0
      %1739 = vmatpush1.bf16.xpose.msra.mxu0 %v1723
      %1740 = vmatprep.subr.bf16.mxu0 0
      %1741 = vmatpush1.bf16.xpose.msra.mxu0 %v1720
      %1742 = vmatprep.subr.bf16.mxu0 0
      %1743 = vmatpush1.bf16.xpose.msra.mxu0 %v1717
      %1744 = vmatprep.subr.bf16.mxu0 0
      %1745 = vmatpush2.bf16.xpose.msra.mxu0 0
      %1746 = vmatprep.subr.bf16.mxu0 0
      %1747 = vmatpush2.bf16.xpose.msra.mxu0 0
      %1748 = vmatprep.subr.bf16.mxu0 0
      %1749 = vmatpush2.bf16.xpose.msra.mxu0 0
      %1750 = vmatprep.subr.bf16.mxu0 0
      %1751 = vmatpush2.bf16.xpose.msra.mxu0 0
      %1752 = vmatprep.subr.bf16.mxu0 0
      %1753 = vmatpush2.bf16.xpose.msra.mxu0 0
      %1754 = vmatprep.subr.bf16.mxu0 0
      %1755 = vmatpush2.bf16.xpose.msra.mxu0 0
      %1756 = vmatprep.subr.bf16.mxu0 0
      %1757 = vmatpush2.bf16.xpose.msra.mxu0 0
      %1758 = vmatprep.subr.bf16.mxu0 0
      %1759 = vmatpush2.bf16.xpose.msra.mxu0 0
      %1760 = vmatprep.mubr.bf16.mxu0 0
      %1761 = vmatmul.mubr.bf16.gmra.mxu0 %v1714
      %v1762 = vpop.f32.mrf.mxu0
      %v1763 = vadd.f32 0.0, %v1762
      %v1764 = vpop.f32.mrf.mxu0
      %v1765 = vpop.f32.mrf.mxu0
      %v1766 = vadd.f32 0.0, %v1765
      %v1767 = vpop.f32.mrf.mxu0
      %1768 = vdwg.mxu0
      %v1771 = vunpack.c.l.b16 %v287
      %v1772 = vunpack.c.l.b16 %v288
      %v1773 = vpack.c.b16 %v1772, %v1771
      %v1782 = vunpack.c.l.b16 %v409
      %v1783 = vunpack.c.l.b16 %v410
      %v1784 = vunpack.c.l.b16 %v411
      %v1785 = vunpack.c.l.b16 %v412
      %v1786 = vunpack.c.l.b16 %v413
      %v1787 = vunpack.c.l.b16 %v414
      %v1788 = vunpack.c.l.b16 %v415
      %v1789 = vunpack.c.l.b16 %v416
      %v1790 = vpack.c.b16 %v1783, %v1782
      %v1791 = vpack.c.b16 %v1785, %v1784
      %v1792 = vpack.c.b16 %v1787, %v1786
      %v1793 = vpack.c.b16 %v1789, %v1788
      %v1795 = vsel %vm578, %v1773, 0
      %v1798 = vsel %vm578, %v1790, 0
      %v1801 = vsel %vm578, %v1791, 0
      %v1804 = vsel %vm578, %v1792, 0
      %v1807 = vsel %vm578, %v1793, 0
      %1809 = vmatprep.subr.bf16.mxu0 0
      %1810 = vmatpush1.bf16.xpose.msra.mxu0 0
      %1811 = vmatprep.subr.bf16.mxu0 0
      %1812 = vmatpush1.bf16.xpose.msra.mxu0 0
      %1813 = vmatprep.subr.bf16.mxu0 0
      %1814 = vmatpush1.bf16.xpose.msra.mxu0 0
      %1815 = vmatprep.subr.bf16.mxu0 0
      %1816 = vmatpush1.bf16.xpose.msra.mxu0 0
      %1817 = vmatprep.subr.bf16.mxu0 0
      %1818 = vmatpush1.bf16.xpose.msra.mxu0 %v1807
      %1819 = vmatprep.subr.bf16.mxu0 0
      %1820 = vmatpush1.bf16.xpose.msra.mxu0 %v1804
      %1821 = vmatprep.subr.bf16.mxu0 0
      %1822 = vmatpush1.bf16.xpose.msra.mxu0 %v1801
      %1823 = vmatprep.subr.bf16.mxu0 0
      %1824 = vmatpush1.bf16.xpose.msra.mxu0 %v1798
      %1825 = vmatprep.subr.bf16.mxu0 0
      %1826 = vmatpush2.bf16.xpose.msra.mxu0 0
      %1827 = vmatprep.subr.bf16.mxu0 0
      %1828 = vmatpush2.bf16.xpose.msra.mxu0 0
      %1829 = vmatprep.subr.bf16.mxu0 0
      %1830 = vmatpush2.bf16.xpose.msra.mxu0 0
      %1831 = vmatprep.subr.bf16.mxu0 0
      %1832 = vmatpush2.bf16.xpose.msra.mxu0 0
      %1833 = vmatprep.subr.bf16.mxu0 0
      %1834 = vmatpush2.bf16.xpose.msra.mxu0 0
      %1835 = vmatprep.subr.bf16.mxu0 0
      %1836 = vmatpush2.bf16.xpose.msra.mxu0 0
      %1837 = vmatprep.subr.bf16.mxu0 0
      %1838 = vmatpush2.bf16.xpose.msra.mxu0 0
      %1839 = vmatprep.subr.bf16.mxu0 0
      %1840 = vmatpush2.bf16.xpose.msra.mxu0 0
      %1841 = vmatprep.mubr.bf16.mxu0 0
      %1842 = vmatmul.mubr.bf16.gmra.mxu0 %v1795
      %v1843 = vpop.f32.mrf.mxu0
      %v1844 = vadd.f32 0.0, %v1843
      %v1845 = vpop.f32.mrf.mxu0
      %v1846 = vpop.f32.mrf.mxu0
      %v1847 = vadd.f32 0.0, %v1846
      %v1848 = vpop.f32.mrf.mxu0
      %1849 = vdwg.mxu0
      %v1850 = vadd.f32 %v629, %v545
      %v1851 = vadd.f32 %v632, %v546
      %v1852 = vadd.f32 %v710, %v547
      %v1853 = vadd.f32 %v713, %v548
      %v1854 = vadd.f32 %v791, %v549
      %v1855 = vadd.f32 %v794, %v550
      %v1856 = vadd.f32 %v872, %v551
      %v1857 = vadd.f32 %v875, %v552
      %v1858 = vadd.f32 %v953, %v545
      %v1859 = vadd.f32 %v956, %v546
      %v1860 = vadd.f32 %v1034, %v547
      %v1861 = vadd.f32 %v1037, %v548
      %v1862 = vadd.f32 %v1115, %v549
      %v1863 = vadd.f32 %v1118, %v550
      %v1864 = vadd.f32 %v1196, %v551
      %v1865 = vadd.f32 %v1199, %v552
      %v1866 = vadd.f32 %v1277, %v545
      %v1867 = vadd.f32 %v1280, %v546
      %v1868 = vadd.f32 %v1358, %v547
      %v1869 = vadd.f32 %v1361, %v548
      %v1870 = vadd.f32 %v1439, %v549
      %v1871 = vadd.f32 %v1442, %v550
      %v1872 = vadd.f32 %v1520, %v551
      %v1873 = vadd.f32 %v1523, %v552
      %v1874 = vadd.f32 %v1601, %v545
      %v1875 = vadd.f32 %v1604, %v546
      %v1876 = vadd.f32 %v1682, %v547
      %v1877 = vadd.f32 %v1685, %v548
      %v1878 = vadd.f32 %v1763, %v549
      %v1879 = vadd.f32 %v1766, %v550
      %v1880 = vadd.f32 %v1844, %v551
      %v1881 = vadd.f32 %v1847, %v552
      %vm1882 = vcmask 523264
      %v1883 = vsel %vm1882, %v1850, -inf
      %1884 = vmax.xlane.f32.xlu0 %v1883
      %v1885 = vpop.xlane.xlu0 %1884
      %v1886 = vsel %vm1882, %v1851, -inf
      %1887 = vmax.xlane.f32.xlu0 %v1886
      %v1888 = vpop.xlane.xlu0 %1887
      %v1889 = vsel %vm1882, %v1852, -inf
      %1890 = vmax.xlane.f32.xlu0 %v1889
      %v1891 = vpop.xlane.xlu0 %1890
      %v1892 = vsel %vm1882, %v1853, -inf
      %1893 = vmax.xlane.f32.xlu0 %v1892
      %v1894 = vpop.xlane.xlu0 %1893
      %v1895 = vsel %vm1882, %v1854, -inf
      %1896 = vmax.xlane.f32.xlu0 %v1895
      %v1897 = vpop.xlane.xlu0 %1896
      %v1898 = vsel %vm1882, %v1855, -inf
      %1899 = vmax.xlane.f32.xlu0 %v1898
      %v1900 = vpop.xlane.xlu0 %1899
      %v1901 = vsel %vm1882, %v1856, -inf
      %1902 = vmax.xlane.f32.xlu0 %v1901
      %v1903 = vpop.xlane.xlu0 %1902
      %v1904 = vsel %vm1882, %v1857, -inf
      %1905 = vmax.xlane.f32.xlu0 %v1904
      %v1906 = vpop.xlane.xlu0 %1905
      %v1907 = vsel %vm1882, %v1858, -inf
      %1908 = vmax.xlane.f32.xlu0 %v1907
      %v1909 = vpop.xlane.xlu0 %1908
      %v1910 = vsel %vm1882, %v1859, -inf
      %1911 = vmax.xlane.f32.xlu0 %v1910
      %v1912 = vpop.xlane.xlu0 %1911
      %v1913 = vsel %vm1882, %v1860, -inf
      %1914 = vmax.xlane.f32.xlu0 %v1913
      %v1915 = vpop.xlane.xlu0 %1914
      %v1916 = vsel %vm1882, %v1861, -inf
      %1917 = vmax.xlane.f32.xlu0 %v1916
      %v1918 = vpop.xlane.xlu0 %1917
      %v1919 = vsel %vm1882, %v1862, -inf
      %1920 = vmax.xlane.f32.xlu0 %v1919
      %v1921 = vpop.xlane.xlu0 %1920
      %v1922 = vsel %vm1882, %v1863, -inf
      %1923 = vmax.xlane.f32.xlu0 %v1922
      %v1924 = vpop.xlane.xlu0 %1923
      %v1925 = vsel %vm1882, %v1864, -inf
      %1926 = vmax.xlane.f32.xlu0 %v1925
      %v1927 = vpop.xlane.xlu0 %1926
      %v1928 = vsel %vm1882, %v1865, -inf
      %1929 = vmax.xlane.f32.xlu0 %v1928
      %v1930 = vpop.xlane.xlu0 %1929
      %v1931 = vsel %vm1882, %v1866, -inf
      %1932 = vmax.xlane.f32.xlu0 %v1931
      %v1933 = vpop.xlane.xlu0 %1932
      %v1934 = vsel %vm1882, %v1867, -inf
      %1935 = vmax.xlane.f32.xlu0 %v1934
      %v1936 = vpop.xlane.xlu0 %1935
      %v1937 = vsel %vm1882, %v1868, -inf
      %1938 = vmax.xlane.f32.xlu0 %v1937
      %v1939 = vpop.xlane.xlu0 %1938
      %v1940 = vsel %vm1882, %v1869, -inf
      %1941 = vmax.xlane.f32.xlu0 %v1940
      %v1942 = vpop.xlane.xlu0 %1941
      %v1943 = vsel %vm1882, %v1870, -inf
      %1944 = vmax.xlane.f32.xlu0 %v1943
      %v1945 = vpop.xlane.xlu0 %1944
      %v1946 = vsel %vm1882, %v1871, -inf
      %1947 = vmax.xlane.f32.xlu0 %v1946
      %v1948 = vpop.xlane.xlu0 %1947
      %v1949 = vsel %vm1882, %v1872, -inf
      %1950 = vmax.xlane.f32.xlu0 %v1949
      %v1951 = vpop.xlane.xlu0 %1950
      %v1952 = vsel %vm1882, %v1873, -inf
      %1953 = vmax.xlane.f32.xlu0 %v1952
      %v1954 = vpop.xlane.xlu0 %1953
      %v1955 = vsel %vm1882, %v1874, -inf
      %1956 = vmax.xlane.f32.xlu0 %v1955
      %v1957 = vpop.xlane.xlu0 %1956
      %v1958 = vsel %vm1882, %v1875, -inf
      %1959 = vmax.xlane.f32.xlu0 %v1958
      %v1960 = vpop.xlane.xlu0 %1959
      %v1961 = vsel %vm1882, %v1876, -inf
      %1962 = vmax.xlane.f32.xlu0 %v1961
      %v1963 = vpop.xlane.xlu0 %1962
      %v1964 = vsel %vm1882, %v1877, -inf
      %1965 = vmax.xlane.f32.xlu0 %v1964
      %v1966 = vpop.xlane.xlu0 %1965
      %v1967 = vsel %vm1882, %v1878, -inf
      %1968 = vmax.xlane.f32.xlu0 %v1967
      %v1969 = vpop.xlane.xlu0 %1968
      %v1970 = vsel %vm1882, %v1879, -inf
      %1971 = vmax.xlane.f32.xlu0 %v1970
      %v1972 = vpop.xlane.xlu0 %1971
      %v1973 = vsel %vm1882, %v1880, -inf
      %1974 = vmax.xlane.f32.xlu0 %v1973
      %v1975 = vpop.xlane.xlu0 %1974
      %v1976 = vsel %vm1882, %v1881, -inf
      %1977 = vmax.xlane.f32.xlu0 %v1976
      %v1978 = vpop.xlane.xlu0 %1977
      %v1979 = vsub.f32 %v1850, %v1885
      %v1980 = vsub.f32 %v1851, %v1888
      %v1981 = vsub.f32 %v1852, %v1891
      %v1982 = vsub.f32 %v1853, %v1894
      %v1983 = vsub.f32 %v1854, %v1897
      %v1984 = vsub.f32 %v1855, %v1900
      %v1985 = vsub.f32 %v1856, %v1903
      %v1986 = vsub.f32 %v1857, %v1906
      %v1987 = vsub.f32 %v1858, %v1909
      %v1988 = vsub.f32 %v1859, %v1912
      %v1989 = vsub.f32 %v1860, %v1915
      %v1990 = vsub.f32 %v1861, %v1918
      %v1991 = vsub.f32 %v1862, %v1921
      %v1992 = vsub.f32 %v1863, %v1924
      %v1993 = vsub.f32 %v1864, %v1927
      %v1994 = vsub.f32 %v1865, %v1930
      %v1995 = vsub.f32 %v1866, %v1933
      %v1996 = vsub.f32 %v1867, %v1936
      %v1997 = vsub.f32 %v1868, %v1939
      %v1998 = vsub.f32 %v1869, %v1942
      %v1999 = vsub.f32 %v1870, %v1945
      %v2000 = vsub.f32 %v1871, %v1948
      %v2001 = vsub.f32 %v1872, %v1951
      %v2002 = vsub.f32 %v1873, %v1954
      %v2003 = vsub.f32 %v1874, %v1957
      %v2004 = vsub.f32 %v1875, %v1960
      %v2005 = vsub.f32 %v1876, %v1963
      %v2006 = vsub.f32 %v1877, %v1966
      %v2007 = vsub.f32 %v1878, %v1969
      %v2008 = vsub.f32 %v1879, %v1972
      %v2009 = vsub.f32 %v1880, %v1975
      %v2010 = vsub.f32 %v1881, %v1978
      %v2011 = vmul.f32 %v1979, 1.442695
      %v2012 = vpow.pop %v2011
      %v2013 = vmul.f32 %v1980, 1.442695
      %v2014 = vpow.pop %v2013
      %v2015 = vmul.f32 %v1981, 1.442695
      %v2016 = vpow.pop %v2015
      %v2017 = vmul.f32 %v1982, 1.442695
      %v2018 = vpow.pop %v2017
      %v2019 = vmul.f32 %v1983, 1.442695
      %v2020 = vpow.pop %v2019
      %v2021 = vmul.f32 %v1984, 1.442695
      %v2022 = vpow.pop %v2021
      %v2023 = vmul.f32 %v1985, 1.442695
      %v2024 = vpow.pop %v2023
      %v2025 = vmul.f32 %v1986, 1.442695
      %v2026 = vpow.pop %v2025
      %v2027 = vmul.f32 %v1987, 1.442695
      %v2028 = vpow.pop %v2027
      %v2029 = vmul.f32 %v1988, 1.442695
      %v2030 = vpow.pop %v2029
      %v2031 = vmul.f32 %v1989, 1.442695
      %v2032 = vpow.pop %v2031
      %v2033 = vmul.f32 %v1990, 1.442695
      %v2034 = vpow.pop %v2033
      %v2035 = vmul.f32 %v1991, 1.442695
      %v2036 = vpow.pop %v2035
      %v2037 = vmul.f32 %v1992, 1.442695
      %v2038 = vpow.pop %v2037
      %v2039 = vmul.f32 %v1993, 1.442695
      %v2040 = vpow.pop %v2039
      %v2041 = vmul.f32 %v1994, 1.442695
      %v2042 = vpow.pop %v2041
      %v2043 = vmul.f32 %v1995, 1.442695
      %v2044 = vpow.pop %v2043
      %v2045 = vmul.f32 %v1996, 1.442695
      %v2046 = vpow.pop %v2045
      %v2047 = vmul.f32 %v1997, 1.442695
      %v2048 = vpow.pop %v2047
      %v2049 = vmul.f32 %v1998, 1.442695
      %v2050 = vpow.pop %v2049
      %v2051 = vmul.f32 %v1999, 1.442695
      %v2052 = vpow.pop %v2051
      %v2053 = vmul.f32 %v2000, 1.442695
      %v2054 = vpow.pop %v2053
      %v2055 = vmul.f32 %v2001, 1.442695
      %v2056 = vpow.pop %v2055
      %v2057 = vmul.f32 %v2002, 1.442695
      %v2058 = vpow.pop %v2057
      %v2059 = vmul.f32 %v2003, 1.442695
      %v2060 = vpow.pop %v2059
      %v2061 = vmul.f32 %v2004, 1.442695
      %v2062 = vpow.pop %v2061
      %v2063 = vmul.f32 %v2005, 1.442695
      %v2064 = vpow.pop %v2063
      %v2065 = vmul.f32 %v2006, 1.442695
      %v2066 = vpow.pop %v2065
      %v2067 = vmul.f32 %v2007, 1.442695
      %v2068 = vpow.pop %v2067
      %v2069 = vmul.f32 %v2008, 1.442695
      %v2070 = vpow.pop %v2069
      %v2071 = vmul.f32 %v2009, 1.442695
      %v2072 = vpow.pop %v2071
      %v2073 = vmul.f32 %v2010, 1.442695
      %v2074 = vpow.pop %v2073
      %v2075 = vsel %vm1882, %v2012, 0.0
      %2076 = vadd.xlane.f32.xlu0 %v2075
      %v2077 = vpop.xlane.xlu0 %2076
      %v2078 = vsel %vm1882, %v2014, 0.0
      %2079 = vadd.xlane.f32.xlu0 %v2078
      %v2080 = vpop.xlane.xlu0 %2079
      %v2081 = vsel %vm1882, %v2016, 0.0
      %2082 = vadd.xlane.f32.xlu0 %v2081
      %v2083 = vpop.xlane.xlu0 %2082
      %v2084 = vsel %vm1882, %v2018, 0.0
      %2085 = vadd.xlane.f32.xlu0 %v2084
      %v2086 = vpop.xlane.xlu0 %2085
      %v2087 = vsel %vm1882, %v2020, 0.0
      %2088 = vadd.xlane.f32.xlu0 %v2087
      %v2089 = vpop.xlane.xlu0 %2088
      %v2090 = vsel %vm1882, %v2022, 0.0
      %2091 = vadd.xlane.f32.xlu0 %v2090
      %v2092 = vpop.xlane.xlu0 %2091
      %v2093 = vsel %vm1882, %v2024, 0.0
      %2094 = vadd.xlane.f32.xlu0 %v2093
      %v2095 = vpop.xlane.xlu0 %2094
      %v2096 = vsel %vm1882, %v2026, 0.0
      %2097 = vadd.xlane.f32.xlu0 %v2096
      %v2098 = vpop.xlane.xlu0 %2097
      %v2099 = vsel %vm1882, %v2028, 0.0
      %2100 = vadd.xlane.f32.xlu0 %v2099
      %v2101 = vpop.xlane.xlu0 %2100
      %v2102 = vsel %vm1882, %v2030, 0.0
      %2103 = vadd.xlane.f32.xlu0 %v2102
      %v2104 = vpop.xlane.xlu0 %2103
      %v2105 = vsel %vm1882, %v2032, 0.0
      %2106 = vadd.xlane.f32.xlu0 %v2105
      %v2107 = vpop.xlane.xlu0 %2106
      %v2108 = vsel %vm1882, %v2034, 0.0
      %2109 = vadd.xlane.f32.xlu0 %v2108
      %v2110 = vpop.xlane.xlu0 %2109
      %v2111 = vsel %vm1882, %v2036, 0.0
      %2112 = vadd.xlane.f32.xlu0 %v2111
      %v2113 = vpop.xlane.xlu0 %2112
      %v2114 = vsel %vm1882, %v2038, 0.0
      %2115 = vadd.xlane.f32.xlu0 %v2114
      %v2116 = vpop.xlane.xlu0 %2115
      %v2117 = vsel %vm1882, %v2040, 0.0
      %2118 = vadd.xlane.f32.xlu0 %v2117
      %v2119 = vpop.xlane.xlu0 %2118
      %v2120 = vsel %vm1882, %v2042, 0.0
      %2121 = vadd.xlane.f32.xlu0 %v2120
      %v2122 = vpop.xlane.xlu0 %2121
      %v2123 = vsel %vm1882, %v2044, 0.0
      %2124 = vadd.xlane.f32.xlu0 %v2123
      %v2125 = vpop.xlane.xlu0 %2124
      %v2126 = vsel %vm1882, %v2046, 0.0
      %2127 = vadd.xlane.f32.xlu0 %v2126
      %v2128 = vpop.xlane.xlu0 %2127
      %v2129 = vsel %vm1882, %v2048, 0.0
      %2130 = vadd.xlane.f32.xlu0 %v2129
      %v2131 = vpop.xlane.xlu0 %2130
      %v2132 = vsel %vm1882, %v2050, 0.0
      %2133 = vadd.xlane.f32.xlu0 %v2132
      %v2134 = vpop.xlane.xlu0 %2133
      %v2135 = vsel %vm1882, %v2052, 0.0
      %2136 = vadd.xlane.f32.xlu0 %v2135
      %v2137 = vpop.xlane.xlu0 %2136
      %v2138 = vsel %vm1882, %v2054, 0.0
      %2139 = vadd.xlane.f32.xlu0 %v2138
      %v2140 = vpop.xlane.xlu0 %2139
      %v2141 = vsel %vm1882, %v2056, 0.0
      %2142 = vadd.xlane.f32.xlu0 %v2141
      %v2143 = vpop.xlane.xlu0 %2142
      %v2144 = vsel %vm1882, %v2058, 0.0
      %2145 = vadd.xlane.f32.xlu0 %v2144
      %v2146 = vpop.xlane.xlu0 %2145
      %v2147 = vsel %vm1882, %v2060, 0.0
      %2148 = vadd.xlane.f32.xlu0 %v2147
      %v2149 = vpop.xlane.xlu0 %2148
      %v2150 = vsel %vm1882, %v2062, 0.0
      %2151 = vadd.xlane.f32.xlu0 %v2150
      %v2152 = vpop.xlane.xlu0 %2151
      %v2153 = vsel %vm1882, %v2064, 0.0
      %2154 = vadd.xlane.f32.xlu0 %v2153
      %v2155 = vpop.xlane.xlu0 %2154
      %v2156 = vsel %vm1882, %v2066, 0.0
      %2157 = vadd.xlane.f32.xlu0 %v2156
      %v2158 = vpop.xlane.xlu0 %2157
      %v2159 = vsel %vm1882, %v2068, 0.0
      %2160 = vadd.xlane.f32.xlu0 %v2159
      %v2161 = vpop.xlane.xlu0 %2160
      %v2162 = vsel %vm1882, %v2070, 0.0
      %2163 = vadd.xlane.f32.xlu0 %v2162
      %v2164 = vpop.xlane.xlu0 %2163
      %v2165 = vsel %vm1882, %v2072, 0.0
      %2166 = vadd.xlane.f32.xlu0 %v2165
      %v2167 = vpop.xlane.xlu0 %2166
      %v2168 = vsel %vm1882, %v2074, 0.0
      %2169 = vadd.xlane.f32.xlu0 %v2168
      %v2170 = vpop.xlane.xlu0 %2169
      %v2171 = vrcp.pop %v2077
      %v2172 = vrcp.pop %v2080
      %v2173 = vrcp.pop %v2083
      %v2174 = vrcp.pop %v2086
      %v2175 = vrcp.pop %v2089
      %v2176 = vrcp.pop %v2092
      %v2177 = vrcp.pop %v2095
      %v2178 = vrcp.pop %v2098
      %v2179 = vrcp.pop %v2101
      %v2180 = vrcp.pop %v2104
      %v2181 = vrcp.pop %v2107
      %v2182 = vrcp.pop %v2110
      %v2183 = vrcp.pop %v2113
      %v2184 = vrcp.pop %v2116
      %v2185 = vrcp.pop %v2119
      %v2186 = vrcp.pop %v2122
      %v2187 = vrcp.pop %v2125
      %v2188 = vrcp.pop %v2128
      %v2189 = vrcp.pop %v2131
      %v2190 = vrcp.pop %v2134
      %v2191 = vrcp.pop %v2137
      %v2192 = vrcp.pop %v2140
      %v2193 = vrcp.pop %v2143
      %v2194 = vrcp.pop %v2146
      %v2195 = vrcp.pop %v2149
      %v2196 = vrcp.pop %v2152
      %v2197 = vrcp.pop %v2155
      %v2198 = vrcp.pop %v2158
      %v2199 = vrcp.pop %v2161
      %v2200 = vrcp.pop %v2164
      %v2201 = vrcp.pop %v2167
      %v2202 = vrcp.pop %v2170
      %v2203 = vmul.f32 %v2012, %v2171
      %v2204 = vmul.f32 %v2014, %v2172
      %v2205 = vmul.f32 %v2016, %v2173
      %v2206 = vmul.f32 %v2018, %v2174
      %v2207 = vmul.f32 %v2020, %v2175
      %v2208 = vmul.f32 %v2022, %v2176
      %v2209 = vmul.f32 %v2024, %v2177
      %v2210 = vmul.f32 %v2026, %v2178
      %v2211 = vmul.f32 %v2028, %v2179
      %v2212 = vmul.f32 %v2030, %v2180
      %v2213 = vmul.f32 %v2032, %v2181
      %v2214 = vmul.f32 %v2034, %v2182
      %v2215 = vmul.f32 %v2036, %v2183
      %v2216 = vmul.f32 %v2038, %v2184
      %v2217 = vmul.f32 %v2040, %v2185
      %v2218 = vmul.f32 %v2042, %v2186
      %v2219 = vmul.f32 %v2044, %v2187
      %v2220 = vmul.f32 %v2046, %v2188
      %v2221 = vmul.f32 %v2048, %v2189
      %v2222 = vmul.f32 %v2050, %v2190
      %v2223 = vmul.f32 %v2052, %v2191
      %v2224 = vmul.f32 %v2054, %v2192
      %v2225 = vmul.f32 %v2056, %v2193
      %v2226 = vmul.f32 %v2058, %v2194
      %v2227 = vmul.f32 %v2060, %v2195
      %v2228 = vmul.f32 %v2062, %v2196
      %v2229 = vmul.f32 %v2064, %v2197
      %v2230 = vmul.f32 %v2066, %v2198
      %v2231 = vmul.f32 %v2068, %v2199
      %v2232 = vmul.f32 %v2070, %v2200
      %v2233 = vmul.f32 %v2072, %v2201
      %v2234 = vmul.f32 %v2074, %v2202
      %v2235 = vpack.c.bf16 %v2204, %v2203
      %v2236 = vpack.c.bf16 %v2206, %v2205
      %v2237 = vpack.c.bf16 %v2208, %v2207
      %v2238 = vpack.c.bf16 %v2210, %v2209
      %v2239 = vpack.c.bf16 %v2212, %v2211
      %v2240 = vpack.c.bf16 %v2214, %v2213
      %v2241 = vpack.c.bf16 %v2216, %v2215
      %v2242 = vpack.c.bf16 %v2218, %v2217
      %v2243 = vpack.c.bf16 %v2220, %v2219
      %v2244 = vpack.c.bf16 %v2222, %v2221
      %v2245 = vpack.c.bf16 %v2224, %v2223
      %v2246 = vpack.c.bf16 %v2226, %v2225
      %v2247 = vpack.c.bf16 %v2228, %v2227
      %v2248 = vpack.c.bf16 %v2230, %v2229
      %v2249 = vpack.c.bf16 %v2232, %v2231
      %v2250 = vpack.c.bf16 %v2234, %v2233
      %v2259 = vunpack.c.l.b16 %v417
      %v2260 = vunpack.c.l.b16 %v418
      %v2261 = vunpack.c.l.b16 %v419
      %v2262 = vunpack.c.l.b16 %v420
      %v2263 = vunpack.c.l.b16 %v421
      %v2264 = vunpack.c.l.b16 %v422
      %v2265 = vunpack.c.l.b16 %v423
      %v2266 = vunpack.c.l.b16 %v424
      %v2267 = vpack.c.b16 %v2260, %v2259
      %v2268 = vpack.c.b16 %v2262, %v2261
      %v2269 = vpack.c.b16 %v2264, %v2263
      %v2270 = vpack.c.b16 %v2266, %v2265
      %v2276 = vsel %vm1882, %v2235, 0
      %2278 = vmatprep.subr.bf16.mxu0 0
      %2279 = vmatpush1.bf16.msra.mxu0 0
      %2280 = vmatprep.subr.bf16.mxu0 0
      %2281 = vmatpush1.bf16.msra.mxu0 0
      %2282 = vmatprep.subr.bf16.mxu0 0
      %2283 = vmatpush1.bf16.msra.mxu0 0
      %2284 = vmatprep.subr.bf16.mxu0 0
      %2285 = vmatpush1.bf16.msra.mxu0 0
      %2286 = vmatprep.subr.bf16.mxu0 0
      %2287 = vmatpush1.bf16.msra.mxu0 %v2270
      %2288 = vmatprep.subr.bf16.mxu0 0
      %2289 = vmatpush1.bf16.msra.mxu0 %v2269
      %2290 = vmatprep.subr.bf16.mxu0 0
      %2291 = vmatpush1.bf16.msra.mxu0 %v2268
      %2292 = vmatprep.subr.bf16.mxu0 0
      %2293 = vmatpush1.bf16.msra.mxu0 %v2267
      %2294 = vmatprep.subr.bf16.mxu0 0
      %2295 = vmatpush2.bf16.msra.mxu0 0
      %2296 = vmatprep.subr.bf16.mxu0 0
      %2297 = vmatpush2.bf16.msra.mxu0 0
      %2298 = vmatprep.subr.bf16.mxu0 0
      %2299 = vmatpush2.bf16.msra.mxu0 0
      %2300 = vmatprep.subr.bf16.mxu0 0
      %2301 = vmatpush2.bf16.msra.mxu0 0
      %2302 = vmatprep.subr.bf16.mxu0 0
      %2303 = vmatpush2.bf16.msra.mxu0 0
      %2304 = vmatprep.subr.bf16.mxu0 0
      %2305 = vmatpush2.bf16.msra.mxu0 0
      %2306 = vmatprep.subr.bf16.mxu0 0
      %2307 = vmatpush2.bf16.msra.mxu0 0
      %2308 = vmatprep.subr.bf16.mxu0 0
      %2309 = vmatpush2.bf16.msra.mxu0 0
      %2310 = vmatprep.mubr.bf16.mxu0 0
      %2311 = vmatmul.mubr.bf16.gmra.mxu0 %v2276
      %v2312 = vpop.f32.mrf.mxu0
      %v2313 = vadd.f32 0.0, %v2312
      %v2314 = vpop.f32.mrf.mxu0
      %v2315 = vpop.f32.mrf.mxu0
      %v2316 = vadd.f32 0.0, %v2315
      %v2317 = vpop.f32.mrf.mxu0
      %2318 = vdwg.mxu0
      %v2327 = vunpack.c.l.b16 %v425
      %v2328 = vunpack.c.l.b16 %v426
      %v2329 = vunpack.c.l.b16 %v427
      %v2330 = vunpack.c.l.b16 %v428
      %v2331 = vunpack.c.l.b16 %v429
      %v2332 = vunpack.c.l.b16 %v430
      %v2333 = vunpack.c.l.b16 %v431
      %v2334 = vunpack.c.l.b16 %v432
      %v2335 = vpack.c.b16 %v2328, %v2327
      %v2336 = vpack.c.b16 %v2330, %v2329
      %v2337 = vpack.c.b16 %v2332, %v2331
      %v2338 = vpack.c.b16 %v2334, %v2333
      %v2344 = vsel %vm1882, %v2236, 0
      %2346 = vmatprep.subr.bf16.mxu0 0
      %2347 = vmatpush1.bf16.msra.mxu0 0
      %2348 = vmatprep.subr.bf16.mxu0 0
      %2349 = vmatpush1.bf16.msra.mxu0 0
      %2350 = vmatprep.subr.bf16.mxu0 0
      %2351 = vmatpush1.bf16.msra.mxu0 0
      %2352 = vmatprep.subr.bf16.mxu0 0
      %2353 = vmatpush1.bf16.msra.mxu0 0
      %2354 = vmatprep.subr.bf16.mxu0 0
      %2355 = vmatpush1.bf16.msra.mxu0 %v2338
      %2356 = vmatprep.subr.bf16.mxu0 0
      %2357 = vmatpush1.bf16.msra.mxu0 %v2337
      %2358 = vmatprep.subr.bf16.mxu0 0
      %2359 = vmatpush1.bf16.msra.mxu0 %v2336
      %2360 = vmatprep.subr.bf16.mxu0 0
      %2361 = vmatpush1.bf16.msra.mxu0 %v2335
      %2362 = vmatprep.subr.bf16.mxu0 0
      %2363 = vmatpush2.bf16.msra.mxu0 0
      %2364 = vmatprep.subr.bf16.mxu0 0
      %2365 = vmatpush2.bf16.msra.mxu0 0
      %2366 = vmatprep.subr.bf16.mxu0 0
      %2367 = vmatpush2.bf16.msra.mxu0 0
      %2368 = vmatprep.subr.bf16.mxu0 0
      %2369 = vmatpush2.bf16.msra.mxu0 0
      %2370 = vmatprep.subr.bf16.mxu0 0
      %2371 = vmatpush2.bf16.msra.mxu0 0
      %2372 = vmatprep.subr.bf16.mxu0 0
      %2373 = vmatpush2.bf16.msra.mxu0 0
      %2374 = vmatprep.subr.bf16.mxu0 0
      %2375 = vmatpush2.bf16.msra.mxu0 0
      %2376 = vmatprep.subr.bf16.mxu0 0
      %2377 = vmatpush2.bf16.msra.mxu0 0
      %2378 = vmatprep.mubr.bf16.mxu0 0
      %2379 = vmatmul.mubr.bf16.gmra.mxu0 %v2344
      %v2380 = vpop.f32.mrf.mxu0
      %v2381 = vadd.f32 0.0, %v2380
      %v2382 = vpop.f32.mrf.mxu0
      %v2383 = vpop.f32.mrf.mxu0
      %v2384 = vadd.f32 0.0, %v2383
      %v2385 = vpop.f32.mrf.mxu0
      %2386 = vdwg.mxu0
      %v2395 = vunpack.c.l.b16 %v433
      %v2396 = vunpack.c.l.b16 %v434
      %v2397 = vunpack.c.l.b16 %v435
      %v2398 = vunpack.c.l.b16 %v436
      %v2399 = vunpack.c.l.b16 %v437
      %v2400 = vunpack.c.l.b16 %v438
      %v2401 = vunpack.c.l.b16 %v439
      %v2402 = vunpack.c.l.b16 %v440
      %v2403 = vpack.c.b16 %v2396, %v2395
      %v2404 = vpack.c.b16 %v2398, %v2397
      %v2405 = vpack.c.b16 %v2400, %v2399
      %v2406 = vpack.c.b16 %v2402, %v2401
      %v2412 = vsel %vm1882, %v2237, 0
      %2414 = vmatprep.subr.bf16.mxu0 0
      %2415 = vmatpush1.bf16.msra.mxu0 0
      %2416 = vmatprep.subr.bf16.mxu0 0
      %2417 = vmatpush1.bf16.msra.mxu0 0
      %2418 = vmatprep.subr.bf16.mxu0 0
      %2419 = vmatpush1.bf16.msra.mxu0 0
      %2420 = vmatprep.subr.bf16.mxu0 0
      %2421 = vmatpush1.bf16.msra.mxu0 0
      %2422 = vmatprep.subr.bf16.mxu0 0
      %2423 = vmatpush1.bf16.msra.mxu0 %v2406
      %2424 = vmatprep.subr.bf16.mxu0 0
      %2425 = vmatpush1.bf16.msra.mxu0 %v2405
      %2426 = vmatprep.subr.bf16.mxu0 0
      %2427 = vmatpush1.bf16.msra.mxu0 %v2404
      %2428 = vmatprep.subr.bf16.mxu0 0
      %2429 = vmatpush1.bf16.msra.mxu0 %v2403
      %2430 = vmatprep.subr.bf16.mxu0 0
      %2431 = vmatpush2.bf16.msra.mxu0 0
      %2432 = vmatprep.subr.bf16.mxu0 0
      %2433 = vmatpush2.bf16.msra.mxu0 0
      %2434 = vmatprep.subr.bf16.mxu0 0
      %2435 = vmatpush2.bf16.msra.mxu0 0
      %2436 = vmatprep.subr.bf16.mxu0 0
      %2437 = vmatpush2.bf16.msra.mxu0 0
      %2438 = vmatprep.subr.bf16.mxu0 0
      %2439 = vmatpush2.bf16.msra.mxu0 0
      %2440 = vmatprep.subr.bf16.mxu0 0
      %2441 = vmatpush2.bf16.msra.mxu0 0
      %2442 = vmatprep.subr.bf16.mxu0 0
      %2443 = vmatpush2.bf16.msra.mxu0 0
      %2444 = vmatprep.subr.bf16.mxu0 0
      %2445 = vmatpush2.bf16.msra.mxu0 0
      %2446 = vmatprep.mubr.bf16.mxu0 0
      %2447 = vmatmul.mubr.bf16.gmra.mxu0 %v2412
      %v2448 = vpop.f32.mrf.mxu0
      %v2449 = vadd.f32 0.0, %v2448
      %v2450 = vpop.f32.mrf.mxu0
      %v2451 = vpop.f32.mrf.mxu0
      %v2452 = vadd.f32 0.0, %v2451
      %v2453 = vpop.f32.mrf.mxu0
      %2454 = vdwg.mxu0
      %v2463 = vunpack.c.l.b16 %v441
      %v2464 = vunpack.c.l.b16 %v442
      %v2465 = vunpack.c.l.b16 %v443
      %v2466 = vunpack.c.l.b16 %v444
      %v2467 = vunpack.c.l.b16 %v445
      %v2468 = vunpack.c.l.b16 %v446
      %v2469 = vunpack.c.l.b16 %v447
      %v2470 = vunpack.c.l.b16 %v448
      %v2471 = vpack.c.b16 %v2464, %v2463
      %v2472 = vpack.c.b16 %v2466, %v2465
      %v2473 = vpack.c.b16 %v2468, %v2467
      %v2474 = vpack.c.b16 %v2470, %v2469
      %v2480 = vsel %vm1882, %v2238, 0
      %2482 = vmatprep.subr.bf16.mxu0 0
      %2483 = vmatpush1.bf16.msra.mxu0 0
      %2484 = vmatprep.subr.bf16.mxu0 0
      %2485 = vmatpush1.bf16.msra.mxu0 0
      %2486 = vmatprep.subr.bf16.mxu0 0
      %2487 = vmatpush1.bf16.msra.mxu0 0
      %2488 = vmatprep.subr.bf16.mxu0 0
      %2489 = vmatpush1.bf16.msra.mxu0 0
      %2490 = vmatprep.subr.bf16.mxu0 0
      %2491 = vmatpush1.bf16.msra.mxu0 %v2474
      %2492 = vmatprep.subr.bf16.mxu0 0
      %2493 = vmatpush1.bf16.msra.mxu0 %v2473
      %2494 = vmatprep.subr.bf16.mxu0 0
      %2495 = vmatpush1.bf16.msra.mxu0 %v2472
      %2496 = vmatprep.subr.bf16.mxu0 0
      %2497 = vmatpush1.bf16.msra.mxu0 %v2471
      %2498 = vmatprep.subr.bf16.mxu0 0
      %2499 = vmatpush2.bf16.msra.mxu0 0
      %2500 = vmatprep.subr.bf16.mxu0 0
      %2501 = vmatpush2.bf16.msra.mxu0 0
      %2502 = vmatprep.subr.bf16.mxu0 0
      %2503 = vmatpush2.bf16.msra.mxu0 0
      %2504 = vmatprep.subr.bf16.mxu0 0
      %2505 = vmatpush2.bf16.msra.mxu0 0
      %2506 = vmatprep.subr.bf16.mxu0 0
      %2507 = vmatpush2.bf16.msra.mxu0 0
      %2508 = vmatprep.subr.bf16.mxu0 0
      %2509 = vmatpush2.bf16.msra.mxu0 0
      %2510 = vmatprep.subr.bf16.mxu0 0
      %2511 = vmatpush2.bf16.msra.mxu0 0
      %2512 = vmatprep.subr.bf16.mxu0 0
      %2513 = vmatpush2.bf16.msra.mxu0 0
      %2514 = vmatprep.mubr.bf16.mxu0 0
      %2515 = vmatmul.mubr.bf16.gmra.mxu0 %v2480
      %v2516 = vpop.f32.mrf.mxu0
      %v2517 = vadd.f32 0.0, %v2516
      %v2518 = vpop.f32.mrf.mxu0
      %v2519 = vpop.f32.mrf.mxu0
      %v2520 = vadd.f32 0.0, %v2519
      %v2521 = vpop.f32.mrf.mxu0
      %2522 = vdwg.mxu0
      %v2531 = vunpack.c.l.b16 %v449
      %v2532 = vunpack.c.l.b16 %v450
      %v2533 = vunpack.c.l.b16 %v451
      %v2534 = vunpack.c.l.b16 %v452
      %v2535 = vunpack.c.l.b16 %v453
      %v2536 = vunpack.c.l.b16 %v454
      %v2537 = vunpack.c.l.b16 %v455
      %v2538 = vunpack.c.l.b16 %v456
      %v2539 = vpack.c.b16 %v2532, %v2531
      %v2540 = vpack.c.b16 %v2534, %v2533
      %v2541 = vpack.c.b16 %v2536, %v2535
      %v2542 = vpack.c.b16 %v2538, %v2537
      %v2548 = vsel %vm1882, %v2239, 0
      %2550 = vmatprep.subr.bf16.mxu0 0
      %2551 = vmatpush1.bf16.msra.mxu0 0
      %2552 = vmatprep.subr.bf16.mxu0 0
      %2553 = vmatpush1.bf16.msra.mxu0 0
      %2554 = vmatprep.subr.bf16.mxu0 0
      %2555 = vmatpush1.bf16.msra.mxu0 0
      %2556 = vmatprep.subr.bf16.mxu0 0
      %2557 = vmatpush1.bf16.msra.mxu0 0
      %2558 = vmatprep.subr.bf16.mxu0 0
      %2559 = vmatpush1.bf16.msra.mxu0 %v2542
      %2560 = vmatprep.subr.bf16.mxu0 0
      %2561 = vmatpush1.bf16.msra.mxu0 %v2541
      %2562 = vmatprep.subr.bf16.mxu0 0
      %2563 = vmatpush1.bf16.msra.mxu0 %v2540
      %2564 = vmatprep.subr.bf16.mxu0 0
      %2565 = vmatpush1.bf16.msra.mxu0 %v2539
      %2566 = vmatprep.subr.bf16.mxu0 0
      %2567 = vmatpush2.bf16.msra.mxu0 0
      %2568 = vmatprep.subr.bf16.mxu0 0
      %2569 = vmatpush2.bf16.msra.mxu0 0
      %2570 = vmatprep.subr.bf16.mxu0 0
      %2571 = vmatpush2.bf16.msra.mxu0 0
      %2572 = vmatprep.subr.bf16.mxu0 0
      %2573 = vmatpush2.bf16.msra.mxu0 0
      %2574 = vmatprep.subr.bf16.mxu0 0
      %2575 = vmatpush2.bf16.msra.mxu0 0
      %2576 = vmatprep.subr.bf16.mxu0 0
      %2577 = vmatpush2.bf16.msra.mxu0 0
      %2578 = vmatprep.subr.bf16.mxu0 0
      %2579 = vmatpush2.bf16.msra.mxu0 0
      %2580 = vmatprep.subr.bf16.mxu0 0
      %2581 = vmatpush2.bf16.msra.mxu0 0
      %2582 = vmatprep.mubr.bf16.mxu0 0
      %2583 = vmatmul.mubr.bf16.gmra.mxu0 %v2548
      %v2584 = vpop.f32.mrf.mxu0
      %v2585 = vadd.f32 0.0, %v2584
      %v2586 = vpop.f32.mrf.mxu0
      %v2587 = vpop.f32.mrf.mxu0
      %v2588 = vadd.f32 0.0, %v2587
      %v2589 = vpop.f32.mrf.mxu0
      %2590 = vdwg.mxu0
      %v2599 = vunpack.c.l.b16 %v457
      %v2600 = vunpack.c.l.b16 %v458
      %v2601 = vunpack.c.l.b16 %v459
      %v2602 = vunpack.c.l.b16 %v460
      %v2603 = vunpack.c.l.b16 %v461
      %v2604 = vunpack.c.l.b16 %v462
      %v2605 = vunpack.c.l.b16 %v463
      %v2606 = vunpack.c.l.b16 %v464
      %v2607 = vpack.c.b16 %v2600, %v2599
      %v2608 = vpack.c.b16 %v2602, %v2601
      %v2609 = vpack.c.b16 %v2604, %v2603
      %v2610 = vpack.c.b16 %v2606, %v2605
      %v2616 = vsel %vm1882, %v2240, 0
      %2618 = vmatprep.subr.bf16.mxu0 0
      %2619 = vmatpush1.bf16.msra.mxu0 0
      %2620 = vmatprep.subr.bf16.mxu0 0
      %2621 = vmatpush1.bf16.msra.mxu0 0
      %2622 = vmatprep.subr.bf16.mxu0 0
      %2623 = vmatpush1.bf16.msra.mxu0 0
      %2624 = vmatprep.subr.bf16.mxu0 0
      %2625 = vmatpush1.bf16.msra.mxu0 0
      %2626 = vmatprep.subr.bf16.mxu0 0
      %2627 = vmatpush1.bf16.msra.mxu0 %v2610
      %2628 = vmatprep.subr.bf16.mxu0 0
      %2629 = vmatpush1.bf16.msra.mxu0 %v2609
      %2630 = vmatprep.subr.bf16.mxu0 0
      %2631 = vmatpush1.bf16.msra.mxu0 %v2608
      %2632 = vmatprep.subr.bf16.mxu0 0
      %2633 = vmatpush1.bf16.msra.mxu0 %v2607
      %2634 = vmatprep.subr.bf16.mxu0 0
      %2635 = vmatpush2.bf16.msra.mxu0 0
      %2636 = vmatprep.subr.bf16.mxu0 0
      %2637 = vmatpush2.bf16.msra.mxu0 0
      %2638 = vmatprep.subr.bf16.mxu0 0
      %2639 = vmatpush2.bf16.msra.mxu0 0
      %2640 = vmatprep.subr.bf16.mxu0 0
      %2641 = vmatpush2.bf16.msra.mxu0 0
      %2642 = vmatprep.subr.bf16.mxu0 0
      %2643 = vmatpush2.bf16.msra.mxu0 0
      %2644 = vmatprep.subr.bf16.mxu0 0
      %2645 = vmatpush2.bf16.msra.mxu0 0
      %2646 = vmatprep.subr.bf16.mxu0 0
      %2647 = vmatpush2.bf16.msra.mxu0 0
      %2648 = vmatprep.subr.bf16.mxu0 0
      %2649 = vmatpush2.bf16.msra.mxu0 0
      %2650 = vmatprep.mubr.bf16.mxu0 0
      %2651 = vmatmul.mubr.bf16.gmra.mxu0 %v2616
      %v2652 = vpop.f32.mrf.mxu0
      %v2653 = vadd.f32 0.0, %v2652
      %v2654 = vpop.f32.mrf.mxu0
      %v2655 = vpop.f32.mrf.mxu0
      %v2656 = vadd.f32 0.0, %v2655
      %v2657 = vpop.f32.mrf.mxu0
      %2658 = vdwg.mxu0
      %v2667 = vunpack.c.l.b16 %v465
      %v2668 = vunpack.c.l.b16 %v466
      %v2669 = vunpack.c.l.b16 %v467
      %v2670 = vunpack.c.l.b16 %v468
      %v2671 = vunpack.c.l.b16 %v469
      %v2672 = vunpack.c.l.b16 %v470
      %v2673 = vunpack.c.l.b16 %v471
      %v2674 = vunpack.c.l.b16 %v472
      %v2675 = vpack.c.b16 %v2668, %v2667
      %v2676 = vpack.c.b16 %v2670, %v2669
      %v2677 = vpack.c.b16 %v2672, %v2671
      %v2678 = vpack.c.b16 %v2674, %v2673
      %v2684 = vsel %vm1882, %v2241, 0
      %2686 = vmatprep.subr.bf16.mxu0 0
      %2687 = vmatpush1.bf16.msra.mxu0 0
      %2688 = vmatprep.subr.bf16.mxu0 0
      %2689 = vmatpush1.bf16.msra.mxu0 0
      %2690 = vmatprep.subr.bf16.mxu0 0
      %2691 = vmatpush1.bf16.msra.mxu0 0
      %2692 = vmatprep.subr.bf16.mxu0 0
      %2693 = vmatpush1.bf16.msra.mxu0 0
      %2694 = vmatprep.subr.bf16.mxu0 0
      %2695 = vmatpush1.bf16.msra.mxu0 %v2678
      %2696 = vmatprep.subr.bf16.mxu0 0
      %2697 = vmatpush1.bf16.msra.mxu0 %v2677
      %2698 = vmatprep.subr.bf16.mxu0 0
      %2699 = vmatpush1.bf16.msra.mxu0 %v2676
      %2700 = vmatprep.subr.bf16.mxu0 0
      %2701 = vmatpush1.bf16.msra.mxu0 %v2675
      %2702 = vmatprep.subr.bf16.mxu0 0
      %2703 = vmatpush2.bf16.msra.mxu0 0
      %2704 = vmatprep.subr.bf16.mxu0 0
      %2705 = vmatpush2.bf16.msra.mxu0 0
      %2706 = vmatprep.subr.bf16.mxu0 0
      %2707 = vmatpush2.bf16.msra.mxu0 0
      %2708 = vmatprep.subr.bf16.mxu0 0
      %2709 = vmatpush2.bf16.msra.mxu0 0
      %2710 = vmatprep.subr.bf16.mxu0 0
      %2711 = vmatpush2.bf16.msra.mxu0 0
      %2712 = vmatprep.subr.bf16.mxu0 0
      %2713 = vmatpush2.bf16.msra.mxu0 0
      %2714 = vmatprep.subr.bf16.mxu0 0
      %2715 = vmatpush2.bf16.msra.mxu0 0
      %2716 = vmatprep.subr.bf16.mxu0 0
      %2717 = vmatpush2.bf16.msra.mxu0 0
      %2718 = vmatprep.mubr.bf16.mxu0 0
      %2719 = vmatmul.mubr.bf16.gmra.mxu0 %v2684
      %v2720 = vpop.f32.mrf.mxu0
      %v2721 = vadd.f32 0.0, %v2720
      %v2722 = vpop.f32.mrf.mxu0
      %v2723 = vpop.f32.mrf.mxu0
      %v2724 = vadd.f32 0.0, %v2723
      %v2725 = vpop.f32.mrf.mxu0
      %2726 = vdwg.mxu0
      %v2735 = vunpack.c.l.b16 %v473
      %v2736 = vunpack.c.l.b16 %v474
      %v2737 = vunpack.c.l.b16 %v475
      %v2738 = vunpack.c.l.b16 %v476
      %v2739 = vunpack.c.l.b16 %v477
      %v2740 = vunpack.c.l.b16 %v478
      %v2741 = vunpack.c.l.b16 %v479
      %v2742 = vunpack.c.l.b16 %v480
      %v2743 = vpack.c.b16 %v2736, %v2735
      %v2744 = vpack.c.b16 %v2738, %v2737
      %v2745 = vpack.c.b16 %v2740, %v2739
      %v2746 = vpack.c.b16 %v2742, %v2741
      %v2752 = vsel %vm1882, %v2242, 0
      %2754 = vmatprep.subr.bf16.mxu0 0
      %2755 = vmatpush1.bf16.msra.mxu0 0
      %2756 = vmatprep.subr.bf16.mxu0 0
      %2757 = vmatpush1.bf16.msra.mxu0 0
      %2758 = vmatprep.subr.bf16.mxu0 0
      %2759 = vmatpush1.bf16.msra.mxu0 0
      %2760 = vmatprep.subr.bf16.mxu0 0
      %2761 = vmatpush1.bf16.msra.mxu0 0
      %2762 = vmatprep.subr.bf16.mxu0 0
      %2763 = vmatpush1.bf16.msra.mxu0 %v2746
      %2764 = vmatprep.subr.bf16.mxu0 0
      %2765 = vmatpush1.bf16.msra.mxu0 %v2745
      %2766 = vmatprep.subr.bf16.mxu0 0
      %2767 = vmatpush1.bf16.msra.mxu0 %v2744
      %2768 = vmatprep.subr.bf16.mxu0 0
      %2769 = vmatpush1.bf16.msra.mxu0 %v2743
      %2770 = vmatprep.subr.bf16.mxu0 0
      %2771 = vmatpush2.bf16.msra.mxu0 0
      %2772 = vmatprep.subr.bf16.mxu0 0
      %2773 = vmatpush2.bf16.msra.mxu0 0
      %2774 = vmatprep.subr.bf16.mxu0 0
      %2775 = vmatpush2.bf16.msra.mxu0 0
      %2776 = vmatprep.subr.bf16.mxu0 0
      %2777 = vmatpush2.bf16.msra.mxu0 0
      %2778 = vmatprep.subr.bf16.mxu0 0
      %2779 = vmatpush2.bf16.msra.mxu0 0
      %2780 = vmatprep.subr.bf16.mxu0 0
      %2781 = vmatpush2.bf16.msra.mxu0 0
      %2782 = vmatprep.subr.bf16.mxu0 0
      %2783 = vmatpush2.bf16.msra.mxu0 0
      %2784 = vmatprep.subr.bf16.mxu0 0
      %2785 = vmatpush2.bf16.msra.mxu0 0
      %2786 = vmatprep.mubr.bf16.mxu0 0
      %2787 = vmatmul.mubr.bf16.gmra.mxu0 %v2752
      %v2788 = vpop.f32.mrf.mxu0
      %v2789 = vadd.f32 0.0, %v2788
      %v2790 = vpop.f32.mrf.mxu0
      %v2791 = vpop.f32.mrf.mxu0
      %v2792 = vadd.f32 0.0, %v2791
      %v2793 = vpop.f32.mrf.mxu0
      %2794 = vdwg.mxu0
      %v2803 = vunpack.c.l.b16 %v481
      %v2804 = vunpack.c.l.b16 %v482
      %v2805 = vunpack.c.l.b16 %v483
      %v2806 = vunpack.c.l.b16 %v484
      %v2807 = vunpack.c.l.b16 %v485
      %v2808 = vunpack.c.l.b16 %v486
      %v2809 = vunpack.c.l.b16 %v487
      %v2810 = vunpack.c.l.b16 %v488
      %v2811 = vpack.c.b16 %v2804, %v2803
      %v2812 = vpack.c.b16 %v2806, %v2805
      %v2813 = vpack.c.b16 %v2808, %v2807
      %v2814 = vpack.c.b16 %v2810, %v2809
      %v2820 = vsel %vm1882, %v2243, 0
      %2822 = vmatprep.subr.bf16.mxu0 0
      %2823 = vmatpush1.bf16.msra.mxu0 0
      %2824 = vmatprep.subr.bf16.mxu0 0
      %2825 = vmatpush1.bf16.msra.mxu0 0
      %2826 = vmatprep.subr.bf16.mxu0 0
      %2827 = vmatpush1.bf16.msra.mxu0 0
      %2828 = vmatprep.subr.bf16.mxu0 0
      %2829 = vmatpush1.bf16.msra.mxu0 0
      %2830 = vmatprep.subr.bf16.mxu0 0
      %2831 = vmatpush1.bf16.msra.mxu0 %v2814
      %2832 = vmatprep.subr.bf16.mxu0 0
      %2833 = vmatpush1.bf16.msra.mxu0 %v2813
      %2834 = vmatprep.subr.bf16.mxu0 0
      %2835 = vmatpush1.bf16.msra.mxu0 %v2812
      %2836 = vmatprep.subr.bf16.mxu0 0
      %2837 = vmatpush1.bf16.msra.mxu0 %v2811
      %2838 = vmatprep.subr.bf16.mxu0 0
      %2839 = vmatpush2.bf16.msra.mxu0 0
      %2840 = vmatprep.subr.bf16.mxu0 0
      %2841 = vmatpush2.bf16.msra.mxu0 0
      %2842 = vmatprep.subr.bf16.mxu0 0
      %2843 = vmatpush2.bf16.msra.mxu0 0
      %2844 = vmatprep.subr.bf16.mxu0 0
      %2845 = vmatpush2.bf16.msra.mxu0 0
      %2846 = vmatprep.subr.bf16.mxu0 0
      %2847 = vmatpush2.bf16.msra.mxu0 0
      %2848 = vmatprep.subr.bf16.mxu0 0
      %2849 = vmatpush2.bf16.msra.mxu0 0
      %2850 = vmatprep.subr.bf16.mxu0 0
      %2851 = vmatpush2.bf16.msra.mxu0 0
      %2852 = vmatprep.subr.bf16.mxu0 0
      %2853 = vmatpush2.bf16.msra.mxu0 0
      %2854 = vmatprep.mubr.bf16.mxu0 0
      %2855 = vmatmul.mubr.bf16.gmra.mxu0 %v2820
      %v2856 = vpop.f32.mrf.mxu0
      %v2857 = vadd.f32 0.0, %v2856
      %v2858 = vpop.f32.mrf.mxu0
      %v2859 = vpop.f32.mrf.mxu0
      %v2860 = vadd.f32 0.0, %v2859
      %v2861 = vpop.f32.mrf.mxu0
      %2862 = vdwg.mxu0
      %v2871 = vunpack.c.l.b16 %v489
      %v2872 = vunpack.c.l.b16 %v490
      %v2873 = vunpack.c.l.b16 %v491
      %v2874 = vunpack.c.l.b16 %v492
      %v2875 = vunpack.c.l.b16 %v493
      %v2876 = vunpack.c.l.b16 %v494
      %v2877 = vunpack.c.l.b16 %v495
      %v2878 = vunpack.c.l.b16 %v496
      %v2879 = vpack.c.b16 %v2872, %v2871
      %v2880 = vpack.c.b16 %v2874, %v2873
      %v2881 = vpack.c.b16 %v2876, %v2875
      %v2882 = vpack.c.b16 %v2878, %v2877
      %v2888 = vsel %vm1882, %v2244, 0
      %2890 = vmatprep.subr.bf16.mxu0 0
      %2891 = vmatpush1.bf16.msra.mxu0 0
      %2892 = vmatprep.subr.bf16.mxu0 0
      %2893 = vmatpush1.bf16.msra.mxu0 0
      %2894 = vmatprep.subr.bf16.mxu0 0
      %2895 = vmatpush1.bf16.msra.mxu0 0
      %2896 = vmatprep.subr.bf16.mxu0 0
      %2897 = vmatpush1.bf16.msra.mxu0 0
      %2898 = vmatprep.subr.bf16.mxu0 0
      %2899 = vmatpush1.bf16.msra.mxu0 %v2882
      %2900 = vmatprep.subr.bf16.mxu0 0
      %2901 = vmatpush1.bf16.msra.mxu0 %v2881
      %2902 = vmatprep.subr.bf16.mxu0 0
      %2903 = vmatpush1.bf16.msra.mxu0 %v2880
      %2904 = vmatprep.subr.bf16.mxu0 0
      %2905 = vmatpush1.bf16.msra.mxu0 %v2879
      %2906 = vmatprep.subr.bf16.mxu0 0
      %2907 = vmatpush2.bf16.msra.mxu0 0
      %2908 = vmatprep.subr.bf16.mxu0 0
      %2909 = vmatpush2.bf16.msra.mxu0 0
      %2910 = vmatprep.subr.bf16.mxu0 0
      %2911 = vmatpush2.bf16.msra.mxu0 0
      %2912 = vmatprep.subr.bf16.mxu0 0
      %2913 = vmatpush2.bf16.msra.mxu0 0
      %2914 = vmatprep.subr.bf16.mxu0 0
      %2915 = vmatpush2.bf16.msra.mxu0 0
      %2916 = vmatprep.subr.bf16.mxu0 0
      %2917 = vmatpush2.bf16.msra.mxu0 0
      %2918 = vmatprep.subr.bf16.mxu0 0
      %2919 = vmatpush2.bf16.msra.mxu0 0
      %2920 = vmatprep.subr.bf16.mxu0 0
      %2921 = vmatpush2.bf16.msra.mxu0 0
      %2922 = vmatprep.mubr.bf16.mxu0 0
      %2923 = vmatmul.mubr.bf16.gmra.mxu0 %v2888
      %v2924 = vpop.f32.mrf.mxu0
      %v2925 = vadd.f32 0.0, %v2924
      %v2926 = vpop.f32.mrf.mxu0
      %v2927 = vpop.f32.mrf.mxu0
      %v2928 = vadd.f32 0.0, %v2927
      %v2929 = vpop.f32.mrf.mxu0
      %2930 = vdwg.mxu0
      %v2939 = vunpack.c.l.b16 %v497
      %v2940 = vunpack.c.l.b16 %v498
      %v2941 = vunpack.c.l.b16 %v499
      %v2942 = vunpack.c.l.b16 %v500
      %v2943 = vunpack.c.l.b16 %v501
      %v2944 = vunpack.c.l.b16 %v502
      %v2945 = vunpack.c.l.b16 %v503
      %v2946 = vunpack.c.l.b16 %v504
      %v2947 = vpack.c.b16 %v2940, %v2939
      %v2948 = vpack.c.b16 %v2942, %v2941
      %v2949 = vpack.c.b16 %v2944, %v2943
      %v2950 = vpack.c.b16 %v2946, %v2945
      %v2956 = vsel %vm1882, %v2245, 0
      %2958 = vmatprep.subr.bf16.mxu0 0
      %2959 = vmatpush1.bf16.msra.mxu0 0
      %2960 = vmatprep.subr.bf16.mxu0 0
      %2961 = vmatpush1.bf16.msra.mxu0 0
      %2962 = vmatprep.subr.bf16.mxu0 0
      %2963 = vmatpush1.bf16.msra.mxu0 0
      %2964 = vmatprep.subr.bf16.mxu0 0
      %2965 = vmatpush1.bf16.msra.mxu0 0
      %2966 = vmatprep.subr.bf16.mxu0 0
      %2967 = vmatpush1.bf16.msra.mxu0 %v2950
      %2968 = vmatprep.subr.bf16.mxu0 0
      %2969 = vmatpush1.bf16.msra.mxu0 %v2949
      %2970 = vmatprep.subr.bf16.mxu0 0
      %2971 = vmatpush1.bf16.msra.mxu0 %v2948
      %2972 = vmatprep.subr.bf16.mxu0 0
      %2973 = vmatpush1.bf16.msra.mxu0 %v2947
      %2974 = vmatprep.subr.bf16.mxu0 0
      %2975 = vmatpush2.bf16.msra.mxu0 0
      %2976 = vmatprep.subr.bf16.mxu0 0
      %2977 = vmatpush2.bf16.msra.mxu0 0
      %2978 = vmatprep.subr.bf16.mxu0 0
      %2979 = vmatpush2.bf16.msra.mxu0 0
      %2980 = vmatprep.subr.bf16.mxu0 0
      %2981 = vmatpush2.bf16.msra.mxu0 0
      %2982 = vmatprep.subr.bf16.mxu0 0
      %2983 = vmatpush2.bf16.msra.mxu0 0
      %2984 = vmatprep.subr.bf16.mxu0 0
      %2985 = vmatpush2.bf16.msra.mxu0 0
      %2986 = vmatprep.subr.bf16.mxu0 0
      %2987 = vmatpush2.bf16.msra.mxu0 0
      %2988 = vmatprep.subr.bf16.mxu0 0
      %2989 = vmatpush2.bf16.msra.mxu0 0
      %2990 = vmatprep.mubr.bf16.mxu0 0
      %2991 = vmatmul.mubr.bf16.gmra.mxu0 %v2956
      %v2992 = vpop.f32.mrf.mxu0
      %v2993 = vadd.f32 0.0, %v2992
      %v2994 = vpop.f32.mrf.mxu0
      %v2995 = vpop.f32.mrf.mxu0
      %v2996 = vadd.f32 0.0, %v2995
      %v2997 = vpop.f32.mrf.mxu0
      %2998 = vdwg.mxu0
      %v3007 = vunpack.c.l.b16 %v505
      %v3008 = vunpack.c.l.b16 %v506
      %v3009 = vunpack.c.l.b16 %v507
      %v3010 = vunpack.c.l.b16 %v508
      %v3011 = vunpack.c.l.b16 %v509
      %v3012 = vunpack.c.l.b16 %v510
      %v3013 = vunpack.c.l.b16 %v511
      %v3014 = vunpack.c.l.b16 %v512
      %v3015 = vpack.c.b16 %v3008, %v3007
      %v3016 = vpack.c.b16 %v3010, %v3009
      %v3017 = vpack.c.b16 %v3012, %v3011
      %v3018 = vpack.c.b16 %v3014, %v3013
      %v3024 = vsel %vm1882, %v2246, 0
      %3026 = vmatprep.subr.bf16.mxu0 0
      %3027 = vmatpush1.bf16.msra.mxu0 0
      %3028 = vmatprep.subr.bf16.mxu0 0
      %3029 = vmatpush1.bf16.msra.mxu0 0
      %3030 = vmatprep.subr.bf16.mxu0 0
      %3031 = vmatpush1.bf16.msra.mxu0 0
      %3032 = vmatprep.subr.bf16.mxu0 0
      %3033 = vmatpush1.bf16.msra.mxu0 0
      %3034 = vmatprep.subr.bf16.mxu0 0
      %3035 = vmatpush1.bf16.msra.mxu0 %v3018
      %3036 = vmatprep.subr.bf16.mxu0 0
      %3037 = vmatpush1.bf16.msra.mxu0 %v3017
      %3038 = vmatprep.subr.bf16.mxu0 0
      %3039 = vmatpush1.bf16.msra.mxu0 %v3016
      %3040 = vmatprep.subr.bf16.mxu0 0
      %3041 = vmatpush1.bf16.msra.mxu0 %v3015
      %3042 = vmatprep.subr.bf16.mxu0 0
      %3043 = vmatpush2.bf16.msra.mxu0 0
      %3044 = vmatprep.subr.bf16.mxu0 0
      %3045 = vmatpush2.bf16.msra.mxu0 0
      %3046 = vmatprep.subr.bf16.mxu0 0
      %3047 = vmatpush2.bf16.msra.mxu0 0
      %3048 = vmatprep.subr.bf16.mxu0 0
      %3049 = vmatpush2.bf16.msra.mxu0 0
      %3050 = vmatprep.subr.bf16.mxu0 0
      %3051 = vmatpush2.bf16.msra.mxu0 0
      %3052 = vmatprep.subr.bf16.mxu0 0
      %3053 = vmatpush2.bf16.msra.mxu0 0
      %3054 = vmatprep.subr.bf16.mxu0 0
      %3055 = vmatpush2.bf16.msra.mxu0 0
      %3056 = vmatprep.subr.bf16.mxu0 0
      %3057 = vmatpush2.bf16.msra.mxu0 0
      %3058 = vmatprep.mubr.bf16.mxu0 0
      %3059 = vmatmul.mubr.bf16.gmra.mxu0 %v3024
      %v3060 = vpop.f32.mrf.mxu0
      %v3061 = vadd.f32 0.0, %v3060
      %v3062 = vpop.f32.mrf.mxu0
      %v3063 = vpop.f32.mrf.mxu0
      %v3064 = vadd.f32 0.0, %v3063
      %v3065 = vpop.f32.mrf.mxu0
      %3066 = vdwg.mxu0
      %v3075 = vunpack.c.l.b16 %v513
      %v3076 = vunpack.c.l.b16 %v514
      %v3077 = vunpack.c.l.b16 %v515
      %v3078 = vunpack.c.l.b16 %v516
      %v3079 = vunpack.c.l.b16 %v517
      %v3080 = vunpack.c.l.b16 %v518
      %v3081 = vunpack.c.l.b16 %v519
      %v3082 = vunpack.c.l.b16 %v520
      %v3083 = vpack.c.b16 %v3076, %v3075
      %v3084 = vpack.c.b16 %v3078, %v3077
      %v3085 = vpack.c.b16 %v3080, %v3079
      %v3086 = vpack.c.b16 %v3082, %v3081
      %v3092 = vsel %vm1882, %v2247, 0
      %3094 = vmatprep.subr.bf16.mxu0 0
      %3095 = vmatpush1.bf16.msra.mxu0 0
      %3096 = vmatprep.subr.bf16.mxu0 0
      %3097 = vmatpush1.bf16.msra.mxu0 0
      %3098 = vmatprep.subr.bf16.mxu0 0
      %3099 = vmatpush1.bf16.msra.mxu0 0
      %3100 = vmatprep.subr.bf16.mxu0 0
      %3101 = vmatpush1.bf16.msra.mxu0 0
      %3102 = vmatprep.subr.bf16.mxu0 0
      %3103 = vmatpush1.bf16.msra.mxu0 %v3086
      %3104 = vmatprep.subr.bf16.mxu0 0
      %3105 = vmatpush1.bf16.msra.mxu0 %v3085
      %3106 = vmatprep.subr.bf16.mxu0 0
      %3107 = vmatpush1.bf16.msra.mxu0 %v3084
      %3108 = vmatprep.subr.bf16.mxu0 0
      %3109 = vmatpush1.bf16.msra.mxu0 %v3083
      %3110 = vmatprep.subr.bf16.mxu0 0
      %3111 = vmatpush2.bf16.msra.mxu0 0
      %3112 = vmatprep.subr.bf16.mxu0 0
      %3113 = vmatpush2.bf16.msra.mxu0 0
      %3114 = vmatprep.subr.bf16.mxu0 0
      %3115 = vmatpush2.bf16.msra.mxu0 0
      %3116 = vmatprep.subr.bf16.mxu0 0
      %3117 = vmatpush2.bf16.msra.mxu0 0
      %3118 = vmatprep.subr.bf16.mxu0 0
      %3119 = vmatpush2.bf16.msra.mxu0 0
      %3120 = vmatprep.subr.bf16.mxu0 0
      %3121 = vmatpush2.bf16.msra.mxu0 0
      %3122 = vmatprep.subr.bf16.mxu0 0
      %3123 = vmatpush2.bf16.msra.mxu0 0
      %3124 = vmatprep.subr.bf16.mxu0 0
      %3125 = vmatpush2.bf16.msra.mxu0 0
      %3126 = vmatprep.mubr.bf16.mxu0 0
      %3127 = vmatmul.mubr.bf16.gmra.mxu0 %v3092
      %v3128 = vpop.f32.mrf.mxu0
      %v3129 = vadd.f32 0.0, %v3128
      %v3130 = vpop.f32.mrf.mxu0
      %v3131 = vpop.f32.mrf.mxu0
      %v3132 = vadd.f32 0.0, %v3131
      %v3133 = vpop.f32.mrf.mxu0
      %3134 = vdwg.mxu0
      %v3143 = vunpack.c.l.b16 %v521
      %v3144 = vunpack.c.l.b16 %v522
      %v3145 = vunpack.c.l.b16 %v523
      %v3146 = vunpack.c.l.b16 %v524
      %v3147 = vunpack.c.l.b16 %v525
      %v3148 = vunpack.c.l.b16 %v526
      %v3149 = vunpack.c.l.b16 %v527
      %v3150 = vunpack.c.l.b16 %v528
      %v3151 = vpack.c.b16 %v3144, %v3143
      %v3152 = vpack.c.b16 %v3146, %v3145
      %v3153 = vpack.c.b16 %v3148, %v3147
      %v3154 = vpack.c.b16 %v3150, %v3149
      %v3160 = vsel %vm1882, %v2248, 0
      %3162 = vmatprep.subr.bf16.mxu0 0
      %3163 = vmatpush1.bf16.msra.mxu0 0
      %3164 = vmatprep.subr.bf16.mxu0 0
      %3165 = vmatpush1.bf16.msra.mxu0 0
      %3166 = vmatprep.subr.bf16.mxu0 0
      %3167 = vmatpush1.bf16.msra.mxu0 0
      %3168 = vmatprep.subr.bf16.mxu0 0
      %3169 = vmatpush1.bf16.msra.mxu0 0
      %3170 = vmatprep.subr.bf16.mxu0 0
      %3171 = vmatpush1.bf16.msra.mxu0 %v3154
      %3172 = vmatprep.subr.bf16.mxu0 0
      %3173 = vmatpush1.bf16.msra.mxu0 %v3153
      %3174 = vmatprep.subr.bf16.mxu0 0
      %3175 = vmatpush1.bf16.msra.mxu0 %v3152
      %3176 = vmatprep.subr.bf16.mxu0 0
      %3177 = vmatpush1.bf16.msra.mxu0 %v3151
      %3178 = vmatprep.subr.bf16.mxu0 0
      %3179 = vmatpush2.bf16.msra.mxu0 0
      %3180 = vmatprep.subr.bf16.mxu0 0
      %3181 = vmatpush2.bf16.msra.mxu0 0
      %3182 = vmatprep.subr.bf16.mxu0 0
      %3183 = vmatpush2.bf16.msra.mxu0 0
      %3184 = vmatprep.subr.bf16.mxu0 0
      %3185 = vmatpush2.bf16.msra.mxu0 0
      %3186 = vmatprep.subr.bf16.mxu0 0
      %3187 = vmatpush2.bf16.msra.mxu0 0
      %3188 = vmatprep.subr.bf16.mxu0 0
      %3189 = vmatpush2.bf16.msra.mxu0 0
      %3190 = vmatprep.subr.bf16.mxu0 0
      %3191 = vmatpush2.bf16.msra.mxu0 0
      %3192 = vmatprep.subr.bf16.mxu0 0
      %3193 = vmatpush2.bf16.msra.mxu0 0
      %3194 = vmatprep.mubr.bf16.mxu0 0
      %3195 = vmatmul.mubr.bf16.gmra.mxu0 %v3160
      %v3196 = vpop.f32.mrf.mxu0
      %v3197 = vadd.f32 0.0, %v3196
      %v3198 = vpop.f32.mrf.mxu0
      %v3199 = vpop.f32.mrf.mxu0
      %v3200 = vadd.f32 0.0, %v3199
      %v3201 = vpop.f32.mrf.mxu0
      %3202 = vdwg.mxu0
      %v3211 = vunpack.c.l.b16 %v529
      %v3212 = vunpack.c.l.b16 %v530
      %v3213 = vunpack.c.l.b16 %v531
      %v3214 = vunpack.c.l.b16 %v532
      %v3215 = vunpack.c.l.b16 %v533
      %v3216 = vunpack.c.l.b16 %v534
      %v3217 = vunpack.c.l.b16 %v535
      %v3218 = vunpack.c.l.b16 %v536
      %v3219 = vpack.c.b16 %v3212, %v3211
      %v3220 = vpack.c.b16 %v3214, %v3213
      %v3221 = vpack.c.b16 %v3216, %v3215
      %v3222 = vpack.c.b16 %v3218, %v3217
      %v3228 = vsel %vm1882, %v2249, 0
      %3230 = vmatprep.subr.bf16.mxu0 0
      %3231 = vmatpush1.bf16.msra.mxu0 0
      %3232 = vmatprep.subr.bf16.mxu0 0
      %3233 = vmatpush1.bf16.msra.mxu0 0
      %3234 = vmatprep.subr.bf16.mxu0 0
      %3235 = vmatpush1.bf16.msra.mxu0 0
      %3236 = vmatprep.subr.bf16.mxu0 0
      %3237 = vmatpush1.bf16.msra.mxu0 0
      %3238 = vmatprep.subr.bf16.mxu0 0
      %3239 = vmatpush1.bf16.msra.mxu0 %v3222
      %3240 = vmatprep.subr.bf16.mxu0 0
      %3241 = vmatpush1.bf16.msra.mxu0 %v3221
      %3242 = vmatprep.subr.bf16.mxu0 0
      %3243 = vmatpush1.bf16.msra.mxu0 %v3220
      %3244 = vmatprep.subr.bf16.mxu0 0
      %3245 = vmatpush1.bf16.msra.mxu0 %v3219
      %3246 = vmatprep.subr.bf16.mxu0 0
      %3247 = vmatpush2.bf16.msra.mxu0 0
      %3248 = vmatprep.subr.bf16.mxu0 0
      %3249 = vmatpush2.bf16.msra.mxu0 0
      %3250 = vmatprep.subr.bf16.mxu0 0
      %3251 = vmatpush2.bf16.msra.mxu0 0
      %3252 = vmatprep.subr.bf16.mxu0 0
      %3253 = vmatpush2.bf16.msra.mxu0 0
      %3254 = vmatprep.subr.bf16.mxu0 0
      %3255 = vmatpush2.bf16.msra.mxu0 0
      %3256 = vmatprep.subr.bf16.mxu0 0
      %3257 = vmatpush2.bf16.msra.mxu0 0
      %3258 = vmatprep.subr.bf16.mxu0 0
      %3259 = vmatpush2.bf16.msra.mxu0 0
      %3260 = vmatprep.subr.bf16.mxu0 0
      %3261 = vmatpush2.bf16.msra.mxu0 0
      %3262 = vmatprep.mubr.bf16.mxu0 0
      %3263 = vmatmul.mubr.bf16.gmra.mxu0 %v3228
      %v3264 = vpop.f32.mrf.mxu0
      %v3265 = vadd.f32 0.0, %v3264
      %v3266 = vpop.f32.mrf.mxu0
      %v3267 = vpop.f32.mrf.mxu0
      %v3268 = vadd.f32 0.0, %v3267
      %v3269 = vpop.f32.mrf.mxu0
      %3270 = vdwg.mxu0
      %v3279 = vunpack.c.l.b16 %v537
      %v3280 = vunpack.c.l.b16 %v538
      %v3281 = vunpack.c.l.b16 %v539
      %v3282 = vunpack.c.l.b16 %v540
      %v3283 = vunpack.c.l.b16 %v541
      %v3284 = vunpack.c.l.b16 %v542
      %v3285 = vunpack.c.l.b16 %v543
      %v3286 = vunpack.c.l.b16 %v544
      %v3287 = vpack.c.b16 %v3280, %v3279
      %v3288 = vpack.c.b16 %v3282, %v3281
      %v3289 = vpack.c.b16 %v3284, %v3283
      %v3290 = vpack.c.b16 %v3286, %v3285
      %v3296 = vsel %vm1882, %v2250, 0
      %3298 = vmatprep.subr.bf16.mxu0 0
      %3299 = vmatpush1.bf16.msra.mxu0 0
      %3300 = vmatprep.subr.bf16.mxu0 0
      %3301 = vmatpush1.bf16.msra.mxu0 0
      %3302 = vmatprep.subr.bf16.mxu0 0
      %3303 = vmatpush1.bf16.msra.mxu0 0
      %3304 = vmatprep.subr.bf16.mxu0 0
      %3305 = vmatpush1.bf16.msra.mxu0 0
      %3306 = vmatprep.subr.bf16.mxu0 0
      %3307 = vmatpush1.bf16.msra.mxu0 %v3290
      %3308 = vmatprep.subr.bf16.mxu0 0
      %3309 = vmatpush1.bf16.msra.mxu0 %v3289
      %3310 = vmatprep.subr.bf16.mxu0 0
      %3311 = vmatpush1.bf16.msra.mxu0 %v3288
      %3312 = vmatprep.subr.bf16.mxu0 0
      %3313 = vmatpush1.bf16.msra.mxu0 %v3287
      %3314 = vmatprep.subr.bf16.mxu0 0
      %3315 = vmatpush2.bf16.msra.mxu0 0
      %3316 = vmatprep.subr.bf16.mxu0 0
      %3317 = vmatpush2.bf16.msra.mxu0 0
      %3318 = vmatprep.subr.bf16.mxu0 0
      %3319 = vmatpush2.bf16.msra.mxu0 0
      %3320 = vmatprep.subr.bf16.mxu0 0
      %3321 = vmatpush2.bf16.msra.mxu0 0
      %3322 = vmatprep.subr.bf16.mxu0 0
      %3323 = vmatpush2.bf16.msra.mxu0 0
      %3324 = vmatprep.subr.bf16.mxu0 0
      %3325 = vmatpush2.bf16.msra.mxu0 0
      %3326 = vmatprep.subr.bf16.mxu0 0
      %3327 = vmatpush2.bf16.msra.mxu0 0
      %3328 = vmatprep.subr.bf16.mxu0 0
      %3329 = vmatpush2.bf16.msra.mxu0 0
      %3330 = vmatprep.mubr.bf16.mxu0 0
      %3331 = vmatmul.mubr.bf16.gmra.mxu0 %v3296
      %v3332 = vpop.f32.mrf.mxu0
      %v3333 = vadd.f32 0.0, %v3332
      %v3334 = vpop.f32.mrf.mxu0
      %v3335 = vpop.f32.mrf.mxu0
      %v3336 = vadd.f32 0.0, %v3335
      %v3337 = vpop.f32.mrf.mxu0
      %3338 = vdwg.mxu0
      %v3339 = vpack.c.bf16 %v2316, %v2313
      %v3340 = vpack.c.bf16 %v2384, %v2381
      %v3341 = vpack.c.bf16 %v2452, %v2449
      %v3342 = vpack.c.bf16 %v2520, %v2517
      %v3343 = vpack.c.bf16 %v2588, %v2585
      %v3344 = vpack.c.bf16 %v2656, %v2653
      %v3345 = vpack.c.bf16 %v2724, %v2721
      %v3346 = vpack.c.bf16 %v2792, %v2789
      %v3347 = vpack.c.bf16 %v2860, %v2857
      %v3348 = vpack.c.bf16 %v2928, %v2925
      %v3349 = vpack.c.bf16 %v2996, %v2993
      %v3350 = vpack.c.bf16 %v3064, %v3061
      %v3351 = vpack.c.bf16 %v3132, %v3129
      %v3352 = vpack.c.bf16 %v3200, %v3197
      %v3353 = vpack.c.bf16 %v3268, %v3265
      %v3354 = vpack.c.bf16 %v3336, %v3333
      %v3371 = vunpack.c.l.b16 %v3339
      %v3372 = vunpack.c.h.b16 %v3339
      %v3373 = vunpack.c.l.b16 %v3340
      %v3374 = vunpack.c.h.b16 %v3340
      %v3375 = vunpack.c.l.b16 %v3341
      %v3376 = vunpack.c.h.b16 %v3341
      %v3377 = vunpack.c.l.b16 %v3342
      %v3378 = vunpack.c.h.b16 %v3342
      %v3379 = vunpack.c.l.b16 %v3343
      %v3380 = vunpack.c.h.b16 %v3343
      %v3381 = vunpack.c.l.b16 %v3344
      %v3382 = vunpack.c.h.b16 %v3344
      %v3383 = vunpack.c.l.b16 %v3345
      %v3384 = vunpack.c.h.b16 %v3345
      %v3385 = vunpack.c.l.b16 %v3346
      %v3386 = vunpack.c.h.b16 %v3346
      %v3387 = vunpack.c.l.b16 %v3347
      %v3388 = vunpack.c.h.b16 %v3347
      %v3389 = vunpack.c.l.b16 %v3348
      %v3390 = vunpack.c.h.b16 %v3348
      %v3391 = vunpack.c.l.b16 %v3349
      %v3392 = vunpack.c.h.b16 %v3349
      %v3393 = vunpack.c.l.b16 %v3350
      %v3394 = vunpack.c.h.b16 %v3350
      %v3395 = vunpack.c.l.b16 %v3351
      %v3396 = vunpack.c.h.b16 %v3351
      %v3397 = vunpack.c.l.b16 %v3352
      %v3398 = vunpack.c.h.b16 %v3352
      %v3399 = vunpack.c.l.b16 %v3353
      %v3400 = vunpack.c.h.b16 %v3353
      %v3401 = vunpack.c.l.b16 %v3354
      %v3402 = vunpack.c.h.b16 %v3354
      %v3403 = vpack.c.b16 %v3371, %v3371
      %v3404 = vpack.c.b16 %v3372, %v3372
      %v3405 = vpack.c.b16 %v3373, %v3373
      %v3406 = vpack.c.b16 %v3374, %v3374
      %v3407 = vpack.c.b16 %v3375, %v3375
      %v3408 = vpack.c.b16 %v3376, %v3376
      %v3409 = vpack.c.b16 %v3377, %v3377
      %v3410 = vpack.c.b16 %v3378, %v3378
      %v3411 = vpack.c.b16 %v3379, %v3379
      %v3412 = vpack.c.b16 %v3380, %v3380
      %v3413 = vpack.c.b16 %v3381, %v3381
      %v3414 = vpack.c.b16 %v3382, %v3382
      %v3415 = vpack.c.b16 %v3383, %v3383
      %v3416 = vpack.c.b16 %v3384, %v3384
      %v3417 = vpack.c.b16 %v3385, %v3385
      %v3418 = vpack.c.b16 %v3386, %v3386
      %v3419 = vpack.c.b16 %v3387, %v3387
      %v3420 = vpack.c.b16 %v3388, %v3388
      %v3421 = vpack.c.b16 %v3389, %v3389
      %v3422 = vpack.c.b16 %v3390, %v3390
      %v3423 = vpack.c.b16 %v3391, %v3391
      %v3424 = vpack.c.b16 %v3392, %v3392
      %v3425 = vpack.c.b16 %v3393, %v3393
      %v3426 = vpack.c.b16 %v3394, %v3394
      %v3427 = vpack.c.b16 %v3395, %v3395
      %v3428 = vpack.c.b16 %v3396, %v3396
      %v3429 = vpack.c.b16 %v3397, %v3397
      %v3430 = vpack.c.b16 %v3398, %v3398
      %v3431 = vpack.c.b16 %v3399, %v3399
      %v3432 = vpack.c.b16 %v3400, %v3400
      %v3433 = vpack.c.b16 %v3401, %v3401
      %v3434 = vpack.c.b16 %v3402, %v3402
      %vm3467 = vcmask 60416
      %3468 = vst.msk [vmem:[%s254] sm:$0xf] %vm3467, %v3403
      %3469 = vst.msk [vmem:[%s254 + $0x4] sm:$0xf] %vm3467, %v3404
      %3470 = vst.msk [vmem:[%s254 + $0x8] sm:$0xf] %vm3467, %v3405
      %3471 = vst.msk [vmem:[%s254 + $0xc] sm:$0xf] %vm3467, %v3406
      %3472 = vst.msk [vmem:[%s254 + $0x10] sm:$0xf] %vm3467, %v3407
      %3473 = vst.msk [vmem:[%s254 + $0x14] sm:$0xf] %vm3467, %v3408
      %3474 = vst.msk [vmem:[%s254 + $0x18] sm:$0xf] %vm3467, %v3409
      %3475 = vst.msk [vmem:[%s254 + $0x1c] sm:$0xf] %vm3467, %v3410
      %3476 = vst.msk [vmem:[%s254 + $0x20] sm:$0xf] %vm3467, %v3411
      %3477 = vst.msk [vmem:[%s254 + $0x24] sm:$0xf] %vm3467, %v3412
      %3478 = vst.msk [vmem:[%s254 + $0x28] sm:$0xf] %vm3467, %v3413
      %3479 = vst.msk [vmem:[%s254 + $0x2c] sm:$0xf] %vm3467, %v3414
      %3480 = vst.msk [vmem:[%s254 + $0x30] sm:$0xf] %vm3467, %v3415
      %3481 = vst.msk [vmem:[%s254 + $0x34] sm:$0xf] %vm3467, %v3416
      %3482 = vst.msk [vmem:[%s254 + $0x38] sm:$0xf] %vm3467, %v3417
      %3483 = vst.msk [vmem:[%s254 + $0x3c] sm:$0xf] %vm3467, %v3418
      %3484 = vst.msk [vmem:[%s254 + $0x40] sm:$0xf] %vm3467, %v3419
      %3485 = vst.msk [vmem:[%s254 + $0x44] sm:$0xf] %vm3467, %v3420
      %3486 = vst.msk [vmem:[%s254 + $0x48] sm:$0xf] %vm3467, %v3421
      %3487 = vst.msk [vmem:[%s254 + $0x4c] sm:$0xf] %vm3467, %v3422
      %3488 = vst.msk [vmem:[%s254 + $0x50] sm:$0xf] %vm3467, %v3423
      %3489 = vst.msk [vmem:[%s254 + $0x54] sm:$0xf] %vm3467, %v3424
      %3490 = vst.msk [vmem:[%s254 + $0x58] sm:$0xf] %vm3467, %v3425
      %3491 = vst.msk [vmem:[%s254 + $0x5c] sm:$0xf] %vm3467, %v3426
      %3492 = vst.msk [vmem:[%s254 + $0x60] sm:$0xf] %vm3467, %v3427
      %3493 = vst.msk [vmem:[%s254 + $0x64] sm:$0xf] %vm3467, %v3428
      %3494 = vst.msk [vmem:[%s254 + $0x68] sm:$0xf] %vm3467, %v3429
      %3495 = vst.msk [vmem:[%s254 + $0x6c] sm:$0xf] %vm3467, %v3430
      %3496 = vst.msk [vmem:[%s254 + $0x70] sm:$0xf] %vm3467, %v3431
      %3497 = vst.msk [vmem:[%s254 + $0x74] sm:$0xf] %vm3467, %v3432
      %3498 = vst.msk [vmem:[%s254 + $0x78] sm:$0xf] %vm3467, %v3433
      %3499 = vst.msk [vmem:[%s254 + $0x7c] sm:$0xf] %vm3467, %v3434
      %s3500 = smul.u32 16, %s15
      %p3501 = scmp.lt.s32.totalorder %s3500, 31
      %s3502 = scalar_select %p3501, %s3500, 31
      %s3503 = smul.addr %s3502, 2
      %s3504 = smul.addr %s3503, 4
      %s3505 = scalar_lea.vmem %s4, %s3504
      // Predicated region
      $region37: #{window_attention_forward.4} parent=35 // pred_check
        %p3506 = pneg %p132
      $region38: #{window_attention_forward.4} parent=35 // pred_check_branch
        %3508 = sbr.rel (%p3506) target = $region40
      $region39: #{window_attention_forward.4} parent=35 // pred_region
        %s3509 = smul.u32 16, %s15
      $region40: #{window_attention_forward.4} parent=35 // pred_fallthru
        _
    $region36: #{window_attention_forward.4} parent=5 // pred_fallthru
      _
    %p3510 = scmp.le.s32.totalorder 2, %s10
    // Predicated region
    $region41: #{window_attention_forward.4} parent=5 // pred_check
      %p3511 = pneg %p3510
    $region42: #{window_attention_forward.4} parent=5 // pred_check_branch
      %3513 = sbr.rel (%p3511) target = $region44
    $region43: #{window_attention_forward.4} parent=5 // pred_region
      %s3514 = ssub.s32 %s10, 2
      // Predicated region
      $region45: #{window_attention_forward.4} parent=43 // pred_check
        %p3515 = pneg %p138
      $region46: #{window_attention_forward.4} parent=43 // pred_check_branch
        %3517 = sbr.rel (%p3515) target = $region48
      $region47: #{window_attention_forward.4} parent=43 // pred_region
        %s3518 = smul.u32 16, %s16
        %p3519 = scmp.lt.s32.totalorder %s3518, 31
        %s3520 = scalar_select %p3519, %s3518, 31
        %s3521 = smul.addr %s3520, 2
        %s3522 = smul.addr %s3521, 4
        %s3523 = scalar_lea.vmem %s4, %s3522
      $region48: #{window_attention_forward.4} parent=43 // pred_fallthru
        _
    $region44: #{window_attention_forward.4} parent=5 // pred_fallthru
      _
  $region6: #{window_attention_forward.4} parent=0 // loop_footer
    %s14 = sadd.s32 1, %s10
  $region7: #{window_attention_forward.4} parent=0 // loop_footer_branch
    %9 = sbr.rel target = $region3
  $region8: #{window_attention_forward.4} parent=0 // loop_exit
    _

</llo_original>
